<compile_context>
chip_gen: v6e
topology: v6e:2x2x1
jax: 0.10.0
libtpu: 0.0.40
codegen_flags: <defaults>
</compile_context>

<pallas_src>
import functools
import warnings

import numpy as np
import jax
import jax.numpy as jnp
from jax.experimental import pallas as pl
from jax.experimental.pallas import tpu as pltpu


# --------------------------------------------------------------------------
# pltpu.roll direction probe (one tiny kernel, run once per process).
# --------------------------------------------------------------------------
_ROLL_CFG = None


def _probe_pltpu_roll():
    h, l = 16, 128
    x_np = (np.arange(h, dtype=np.int32)[:, None] * 1000
            + np.arange(l, dtype=np.int32)[None, :])

    def probe_kernel(x_ref, lane_ref, sub_ref):
        v = x_ref[...]
        lane_ref[...] = pltpu.roll(v, 1, 1)   # roll by 1 along lanes
        sub_ref[...] = pltpu.roll(v, 1, 0)    # roll by 1 along sublanes

    lane_o, sub_o = pl.pallas_call(
        probe_kernel,
        out_shape=(jax.ShapeDtypeStruct((h, l), jnp.int32),
                   jax.ShapeDtypeStruct((h, l), jnp.int32)),
    )(jnp.asarray(x_np))
    lane_o = np.asarray(jax.block_until_ready(lane_o))
    sub_o = np.asarray(jax.block_until_ready(sub_o))

    if lane_o[0, 0] == x_np[0, l - 1]:
        lane_right = True            # jnp.roll convention (toward higher index)
    elif lane_o[0, 0] == x_np[0, 1]:
        lane_right = False
    else:
        raise RuntimeError("unexpected pltpu.roll lane semantics")
    if sub_o[0, 0] == x_np[h - 1, 0]:
        sub_right = True
    elif sub_o[0, 0] == x_np[1, 0]:
        sub_right = False
    else:
        raise RuntimeError("unexpected pltpu.roll sublane semantics")
    return lane_right, sub_right


def _roll_config():
    """Returns (backend, lane_matches_jnp, sublane_matches_jnp)."""
    global _ROLL_CFG
    if _ROLL_CFG is None:
        try:
            lane_right, sub_right = _probe_pltpu_roll()
            _ROLL_CFG = ("pltpu", lane_right, sub_right)
        except Exception as e:  # loud (perf-only) fallback: slice+concat rolls
            warnings.warn(
                "Cryptosys kernel: pltpu.roll probe failed (%r); falling back "
                "to jnp.roll (correct but much slower copy path)." % (e,))
            _ROLL_CFG = ("jnp", True, True)
    return _ROLL_CFG


# --------------------------------------------------------------------------
# Pallas kernel.  One grid step owns SPB lane-dense strips of shape (H, Ls);
# an inner pl.loop processes one strip at a time through all cipher rounds.
# --------------------------------------------------------------------------
def _cryptosys_kernel(x_ref, skr_ref, skc_ref, xor_ref, pmat_ref, o_ref, *,
                      iterations, W, roll_backend, lane_right, sub_right):
    SPB, H, Ls = x_ref.shape
    n_wbits = (W - 1).bit_length()
    n_hbits = (H - 1).bit_length()

    # ---- static-shift cyclic rolls (XLU rotate; jnp.roll fallback) ----
    def roll_right(v, r, axis):
        size = v.shape[axis]
        r = r % size
        if r == 0:
            return v
        if roll_backend == "jnp":
            return jnp.roll(v, r, axis)
        matches = lane_right if axis == v.ndim - 1 else sub_right
        return pltpu.roll(v, r if matches else size - r, axis)

    def roll_left(v, s, axis):
        size = v.shape[axis]
        return roll_right(v, (size - s) % size, axis)

    # ---- round-invariant control values (hoisted out of strip/round loops) ----
    skr = skr_ref[...]                              # (H, 1) row left-roll, parity 0
    skrn = jnp.where(skr == 0, 0, W - skr)          # (H, 1) row left-roll, parity 1
    skc = skc_ref[...]                              # (1, Ls) col up-roll,  parity 1
    skcn = jnp.where(skc == 0, 0, H - skc)          # (1, Ls) col up-roll,  parity 0
    xor_mask = xor_ref[...]                         # (H, Ls) fused xorc ^ xorr

    if Ls != W:
        lane_in_seg = jax.lax.broadcasted_iota(jnp.int32, (1, Ls), 1) & (W - 1)
        wrap_ok = [lane_in_seg < (W - (1 << b)) for b in range(n_wbits)]
    else:
        wrap_ok = None

    def seg_roll_left(v, b):
        """Cyclic left roll by 1<<b within every W-lane segment of v (H, Ls)."""
        s = 1 << b
        if Ls == W:
            return roll_left(v, s, 1)
        a = roll_left(v, s, 1)          # correct where the segment does not wrap
        c = roll_right(v, W - s, 1)     # correct where the segment wraps
        return jnp.where(wrap_ok[b], a, c)

    def one_round(_, x):
        # ---- row rotation (shift dim=2): direction from row-sum parity ----
        # parity via MXU: (x & 1) in bf16 @ block-diag all-ones (f32 acc, exact)
        ones = jnp.bitwise_and(x, 1).astype(jnp.float32).astype(jnp.bfloat16)
        cnt = jnp.dot(ones, pmat_ref[...], preferred_element_type=jnp.float32)
        par = jnp.bitwise_and(cnt.astype(jnp.int32), 1)              # (H, Ls)
        eff_r = jnp.where(par == 0, skr, skrn)                       # (H, Ls)
        for b in range(n_wbits):                                     # barrel shift
            x = jnp.where(jnp.bitwise_and(eff_r, 1 << b) != 0,
                          seg_roll_left(x, b), x)

        # ---- column rotation (shift dim=3): direction from column-sum parity ----
        col_par = jnp.bitwise_and(jnp.sum(x, axis=0, keepdims=True), 1)   # (1, Ls)
        eff_c = jnp.where(col_par == 1, skc, skcn)                        # (1, Ls)
        for b in range(n_hbits):                                          # barrel shift
            x = jnp.where(jnp.bitwise_and(eff_c, 1 << b) != 0,
                          roll_left(x, 1 << b, 0), x)

        # ---- fused XOR scrambles (kc over dim=2, kr over dim=3) ----
        return jnp.bitwise_xor(x, xor_mask)

    @pl.loop(0, SPB)
    def _strip(si):
        x0 = (x_ref[si] * 255.0).astype(jnp.int32)           # fused quantize
        xf = jax.lax.fori_loop(0, iterations, one_round, x0, unroll=True)
        o_ref[si] = xf.astype(jnp.float32) * (1.0 / 255.0)   # fused dequantize


# --------------------------------------------------------------------------
# Host wrapper: lane-pack into strips, build compact key constants, call kernel.
# --------------------------------------------------------------------------
_TARGET_STRIP_LANES = 256    # lanes per in-kernel strip (working set stays in vregs)
_TARGET_BLOCK_STRIPS = 8     # strips per grid step (amortize per-step overhead)


def cryptosys_forward(x, kr, kc, iterations=10):
    """Equivalent of Cryptosys.forward: encrypt((x*255).long()).float()/255."""
    B, C, H, W = x.shape
    if H != W:
        raise ValueError("Rubik's-cube cipher (as written) requires square images.")
    if W & (W - 1):
        raise ValueError("packed kernel requires a power-of-two spatial size.")

    BC = B * C
    total_lanes = BC * W
    unit = max(W, 128)                                      # strip width granularity
    Ls = unit * max(1, min(_TARGET_STRIP_LANES // unit,
                           -(-total_lanes // unit)))        # lanes per strip
    spi = Ls // W                                           # images per strip
    S = -(-BC // spi)                                       # strips of real data
    if S <= 1:
        SPB = 1
    else:
        SPB = min(_TARGET_BLOCK_STRIPS, -(-S // 2))         # keep G >= 2 (v7x megacore)
    G = -(-S // SPB)                                        # grid size
    Sp = G * SPB                                            # padded strip count
    BCp = Sp * spi                                          # padded image count

    x_img = x.reshape(BC, H, W).astype(jnp.float32)
    if BCp != BC:                                           # pad with dummy zero images
        x_img = jnp.concatenate(
            [x_img, jnp.zeros((BCp - BC, H, W), jnp.float32)], axis=0)
    # lane-dense packing: strip s, row h, lane l holds pixel (h, l % W) of
    # image s*spi + l // W
    x_packed = x_img.reshape(Sp, spi, H, W).transpose(0, 2, 1, 3).reshape(Sp, H, Ls)

    kr_np = np.asarray(kr, dtype=np.int64)
    kc_np = np.asarray(kc, dtype=np.int64)
    skr = ((-kr_np) % H).astype(np.int32)[:, None]                    # (H, 1)
    skc = np.tile(((-kc_np) % W).astype(np.int32), spi)[None, :]      # (1, Ls)
    # Xor_scramble masks (constant across rounds) fused into one mask:
    #   even rows xor kc[w], odd rows xor kc_rev[w];
    #   even cols xor kr[h], odd cols xor kr_rev[h].
    xorc = np.where(np.arange(H)[:, None] % 2 == 0,
                    kc_np[None, :], kc_np[::-1][None, :])
    xorr = np.where(np.arange(W)[None, :] % 2 == 0,
                    kr_np[:, None], kr_np[::-1][:, None])
    xor_strip = np.tile((xorc ^ xorr).astype(np.int32), (1, spi))     # (H, Ls)
    # Block-diagonal all-ones matrix for MXU row-parity counts.
    pmat = np.kron(np.eye(spi, dtype=np.float32),
                   np.ones((W, W), dtype=np.float32))                 # (Ls, Ls)

    backend, lane_right, sub_right = _roll_config()
    kernel = functools.partial(
        _cryptosys_kernel, iterations=iterations, W=W,
        roll_backend=backend, lane_right=lane_right, sub_right=sub_right)

    out_packed = pl.pallas_call(
        kernel,
        out_shape=jax.ShapeDtypeStruct((Sp, H, Ls), jnp.float32),
        grid=(G,),
        in_specs=[pl.BlockSpec((SPB, H, Ls), lambda g: (g, 0, 0)),  # packed images (f32)
                  pl.BlockSpec((H, 1), lambda g: (0, 0)),           # skr
                  pl.BlockSpec((1, Ls), lambda g: (0, 0)),          # skc
                  pl.BlockSpec((H, Ls), lambda g: (0, 0)),          # fused XOR mask
                  pl.BlockSpec((Ls, Ls), lambda g: (0, 0))],        # parity matmul const
        out_specs=pl.BlockSpec((SPB, H, Ls), lambda g: (g, 0, 0)),
        compiler_params=pltpu.CompilerParams(
            dimension_semantics=("parallel",)),
    )(x_packed, jnp.asarray(skr), jnp.asarray(skc), jnp.asarray(xor_strip),
      jnp.asarray(pmat, dtype=jnp.bfloat16))

    out_img = (out_packed.reshape(Sp, H, spi, W)
               .transpose(0, 2, 1, 3).reshape(BCp, H, W)[:BC])
    return out_img.reshape(B, C, H, W)


# --------------------------------------------------------------------------
# Pure-NumPy reference mirroring the PyTorch module exactly (loops, in-place)
# --------------------------------------------------------------------------
def ref_encrypt_int(x_int, kr, kc, iterations):
    x = np.array(x_int, dtype=np.int64, copy=True)
    kr = np.asarray(kr, dtype=np.int64)
    kc = np.asarray(kc, dtype=np.int64)
    B, C, H, W = x.shape
    for _ in range(iterations):
        Malpha = x.sum(axis=3) % 2
        key = (-kr) % H
        for k in range(H):
            kk = int(key[k])
            left = np.concatenate([x[:, :, k, kk:], x[:, :, k, :kk]], axis=2)
            right = np.concatenate([x[:, :, k, -kk:], x[:, :, k, :-kk]], axis=2) \
                if kk > 0 else x[:, :, k].copy()
            cond = (Malpha[:, :, k] == 0)[:, :, None]
            x[:, :, k] = np.where(cond, left, right)

        Mbeta = x.sum(axis=2) % 2
        keyc = (-kc) % W
        for k in range(W):
            kk = int(keyc[k])
            up = np.concatenate([x[:, :, kk:, k], x[:, :, :kk, k]], axis=2)
            down = np.concatenate([x[:, :, -kk:, k], x[:, :, :-kk, k]], axis=2) \
                if kk > 0 else x[:, :, :, k].copy()
            cond = (Mbeta[:, :, k] == 1)[:, :, None]
            x[:, :, :, k] = np.where(cond, up, down)

        kcr = kc[::-1]
        for i in range(kc.shape[0]):            # Xor_scramble(kc, dim=2)
            x[:, :, ::2, i] ^= kc[i]
            x[:, :, 1::2, i] ^= kcr[i]
        krr = kr[::-1]
        for i in range(kr.shape[0]):            # Xor_scramble(kr, dim=3)
            x[:, :, i, ::2] ^= kr[i]
            x[:, :, i, 1::2] ^= krr[i]
    return x


if __name__ == "__main__":
    iterations, alpha = 10, 8
    # (2,4,16,16): single strip / single grid step.
    # (8,8,16,16): multi-strip blocks (SPB=2) and a 2-step parallel grid.
    tests = [(2, 4, 16, 16), (8, 8, 16, 16)]

    key = jax.random.PRNGKey(0)
    for (B, C, H, W) in tests:
        key, k1, k2, k3 = jax.random.split(key, 4)
        kr = jax.random.randint(k1, (H,), 0, 2 ** alpha, dtype=jnp.int32)
        kc = jax.random.randint(k2, (W,), 0, 2 ** alpha, dtype=jnp.int32)
        x = jax.random.uniform(k3, (B, C, H, W), dtype=jnp.float32)

        out = jax.block_until_ready(
            cryptosys_forward(x, kr, kc, iterations=iterations))

        x_int = np.asarray((x * 255.0).astype(jnp.int32))
        ref_int = ref_encrypt_int(x_int, np.asarray(kr), np.asarray(kc), iterations)
        ref = ref_int.astype(np.float32) / 255.0

        assert out.shape == (B, C, H, W)
        if not np.allclose(np.asarray(out), ref, rtol=0.0, atol=1e-6):
            raise AssertionError(
                "Pallas kernel does not match the reference cipher for shape "
                f"{(B, C, H, W)}")
    print("KERNEL_OK")
</pallas_src>

<mosaic_0001>
module attributes {stable_mosaic.version = 11 : i64} {
  func.func @probe_kernel(%arg0: memref<16x128xi32, #tpu.memory_space<vmem>>, %arg1: memref<16x128xi32, #tpu.memory_space<vmem>>, %arg2: memref<16x128xi32, #tpu.memory_space<vmem>>) attributes {dimension_semantics = [], scalar_prefetch = 0 : i64, scratch_operands = 0 : i64, tpu.core_type = #tpu.core_type<tc>} {
    %c0 = arith.constant 0 : index
    %c0_0 = arith.constant 0 : index
    %0 = vector.load %arg0[%c0, %c0_0] : memref<16x128xi32, #tpu.memory_space<vmem>>, vector<16x128xi32>
    %c1_i32 = arith.constant 1 : i32
    %1 = tpu.dynamic_rotate %0 by %c1_i32 dim 1 : vector<16x128xi32>, i32 -> vector<16x128xi32>
    %c0_1 = arith.constant 0 : index
    %c0_2 = arith.constant 0 : index
    %2 = vector.load %arg1[%c0_1, %c0_2] : memref<16x128xi32, #tpu.memory_space<vmem>>, vector<16x128xi32>
    tpu.vector_store %arg1[%c0_1, %c0_2], %1 {strides = array<i32>} : memref<16x128xi32, #tpu.memory_space<vmem>>, vector<16x128xi32>,
    %c1_i32_3 = arith.constant 1 : i32
    %3 = tpu.dynamic_rotate %0 by %c1_i32_3 dim 0 : vector<16x128xi32>, i32 -> vector<16x128xi32>
    %c0_4 = arith.constant 0 : index
    %c0_5 = arith.constant 0 : index
    %4 = vector.load %arg2[%c0_4, %c0_5] : memref<16x128xi32, #tpu.memory_space<vmem>>, vector<16x128xi32>
    tpu.vector_store %arg2[%c0_4, %c0_5], %3 {strides = array<i32>} : memref<16x128xi32, #tpu.memory_space<vmem>>, vector<16x128xi32>,
    return
  }
}

module attributes {stable_mosaic.version = 11 : i64} {
  func.func @_cryptosys_kernel(%arg0: i32, %arg1: memref<1x16x128xf32, #tpu.memory_space<vmem>>, %arg2: memref<16x1xi32, #tpu.memory_space<vmem>>, %arg3: memref<1x128xi32, #tpu.memory_space<vmem>>, %arg4: memref<16x128xi32, #tpu.memory_space<vmem>>, %arg5: memref<128x128xbf16, #tpu.memory_space<vmem>>, %arg6: memref<1x16x128xf32, #tpu.memory_space<vmem>>) attributes {dimension_semantics = [#tpu.dimension_semantics<parallel>], iteration_bounds = array<i64: 1>, scalar_prefetch = 0 : i64, scratch_operands = 0 : i64, tpu.core_type = #tpu.core_type<tc>, window_params = [{transform_indices = @transform_0, window_bounds = array<i64: 1, 16, 128>}, {pipeline_mode = #tpu.pipeline_mode<synchronous>, transform_indices = @transform_1, window_bounds = array<i64: 16, 1>}, {pipeline_mode = #tpu.pipeline_mode<synchronous>, transform_indices = @transform_2, window_bounds = array<i64: 1, 128>}, {pipeline_mode = #tpu.pipeline_mode<synchronous>, transform_indices = @transform_3, window_bounds = array<i64: 16, 128>}, {pipeline_mode = #tpu.pipeline_mode<synchronous>, transform_indices = @transform_4, window_bounds = array<i64: 128, 128>}, {transform_indices = @transform_5, window_bounds = array<i64: 1, 16, 128>}]} {
    %c0 = arith.constant 0 : index
    %c0_0 = arith.constant 0 : index
    %0 = vector.load %arg2[%c0, %c0_0] : memref<16x1xi32, #tpu.memory_space<vmem>>, vector<16x1xi32>
    %c0_i32 = arith.constant 0 : i32
    %1 = vector.broadcast %c0_i32 : i32 to vector<16x1xi32>
    %2 = arith.cmpi eq, %0, %1 : vector<16x1xi32>
    %c16_i32 = arith.constant 16 : i32
    %3 = vector.broadcast %c16_i32 : i32 to vector<16x1xi32>
    %4 = arith.subi %3, %0 : vector<16x1xi32>
    %c0_i32_1 = arith.constant 0 : i32
    %5 = vector.broadcast %c0_i32_1 : i32 to vector<16x1xi32>
    %6 = arith.select %2, %5, %4 : vector<16x1xi1>, vector<16x1xi32>
    %c0_2 = arith.constant 0 : index
    %c0_3 = arith.constant 0 : index
    %7 = vector.load %arg3[%c0_2, %c0_3] : memref<1x128xi32, #tpu.memory_space<vmem>>, vector<1x128xi32>
    %c0_i32_4 = arith.constant 0 : i32
    %8 = vector.broadcast %c0_i32_4 : i32 to vector<1x128xi32>
    %9 = arith.cmpi eq, %7, %8 : vector<1x128xi32>
    %c16_i32_5 = arith.constant 16 : i32
    %10 = vector.broadcast %c16_i32_5 : i32 to vector<1x128xi32>
    %11 = arith.subi %10, %7 : vector<1x128xi32>
    %c0_i32_6 = arith.constant 0 : i32
    %12 = vector.broadcast %c0_i32_6 : i32 to vector<1x128xi32>
    %13 = arith.select %9, %12, %11 : vector<1x128xi1>, vector<1x128xi32>
    %c0_7 = arith.constant 0 : index
    %c0_8 = arith.constant 0 : index
    %14 = vector.load %arg4[%c0_7, %c0_8] : memref<16x128xi32, #tpu.memory_space<vmem>>, vector<16x128xi32>
    %15 = tpu.iota {dimensions = array<i32: 1>} : vector<1x128xi32>
    %c15_i32 = arith.constant 15 : i32
    %16 = vector.broadcast %c15_i32 : i32 to vector<1x128xi32>
    %17 = arith.andi %15, %16 : vector<1x128xi32>
    %c15_i32_9 = arith.constant 15 : i32
    %18 = vector.broadcast %c15_i32_9 : i32 to vector<1x128xi32>
    %19 = arith.cmpi slt, %17, %18 : vector<1x128xi32>
    %c14_i32 = arith.constant 14 : i32
    %20 = vector.broadcast %c14_i32 : i32 to vector<1x128xi32>
    %21 = arith.cmpi slt, %17, %20 : vector<1x128xi32>
    %c12_i32 = arith.constant 12 : i32
    %22 = vector.broadcast %c12_i32 : i32 to vector<1x128xi32>
    %23 = arith.cmpi slt, %17, %22 : vector<1x128xi32>
    %c8_i32 = arith.constant 8 : i32
    %24 = vector.broadcast %c8_i32 : i32 to vector<1x128xi32>
    %25 = arith.cmpi slt, %17, %24 : vector<1x128xi32>
    %c0_i32_10 = arith.constant 0 : i32
    %c1_i32 = arith.constant 1 : i32
    %26 = arith.muli %c0_i32_10, %c1_i32 : i32
    %c0_i32_11 = arith.constant 0 : i32
    %27 = arith.addi %c0_i32_11, %26 : i32
    %28 = arith.index_cast %27 : i32 to index
    %c0_12 = arith.constant 0 : index
    %c0_13 = arith.constant 0 : index
    %29 = vector.load %arg1[%28, %c0_12, %c0_13] : memref<1x16x128xf32, #tpu.memory_space<vmem>>, vector<1x16x128xf32>
    %30 = vector.shape_cast %29 : vector<1x16x128xf32> to vector<16x128xf32>
    %cst = arith.constant 2.550000e+02 : f32
    %31 = vector.broadcast %cst : f32 to vector<16x128xf32>
    %32 = arith.mulf %30, %31 : vector<16x128xf32>
    %33 = arith.fptosi %32 : vector<16x128xf32> to vector<16x128xi32>
    %c0_i32_14 = arith.constant 0 : i32
    %c1_i32_15 = arith.constant 1 : i32
    %34 = vector.broadcast %c1_i32_15 : i32 to vector<16x128xi32>
    %35 = arith.andi %33, %34 : vector<16x128xi32>
    %36 = arith.sitofp %35 : vector<16x128xi32> to vector<16x128xf32>
    %37 = arith.truncf %36 : vector<16x128xf32> to vector<16x128xbf16>
    %c0_16 = arith.constant 0 : index
    %c0_17 = arith.constant 0 : index
    %38 = vector.load %arg5[%c0_16, %c0_17] : memref<128x128xbf16, #tpu.memory_space<vmem>>, vector<128x128xbf16>
    %cst_18 = arith.constant dense<0.000000e+00> : vector<16x128xf32>
    %39 = tpu.matmul %37, %38, %cst_18 {dimension_numbers = #tpu.dot_dimension_numbers<[1], [0], [0], [1], [0, 0, 1, 1], [], []>} : vector<16x128xbf16>, vector<128x128xbf16>, vector<16x128xf32> -> vector<16x128xf32>
    %40 = arith.fptosi %39 : vector<16x128xf32> to vector<16x128xi32>
    %c1_i32_19 = arith.constant 1 : i32
    %41 = vector.broadcast %c1_i32_19 : i32 to vector<16x128xi32>
    %42 = arith.andi %40, %41 : vector<16x128xi32>
    %c0_i32_20 = arith.constant 0 : i32
    %43 = vector.broadcast %c0_i32_20 : i32 to vector<16x128xi32>
    %44 = arith.cmpi eq, %42, %43 : vector<16x128xi32>
    %45 = vector.shape_cast %0 : vector<16x1xi32> to vector<16x1xi32>
    %46 = vector.broadcast %45 : vector<16x1xi32> to vector<16x128xi32>
    %47 = vector.shape_cast %6 : vector<16x1xi32> to vector<16x1xi32>
    %48 = vector.broadcast %47 : vector<16x1xi32> to vector<16x128xi32>
    %49 = arith.select %44, %46, %48 : vector<16x128xi1>, vector<16x128xi32>
    %c1_i32_21 = arith.constant 1 : i32
    %50 = vector.broadcast %c1_i32_21 : i32 to vector<16x128xi32>
    %51 = arith.andi %49, %50 : vector<16x128xi32>
    %c0_i32_22 = arith.constant 0 : i32
    %52 = vector.broadcast %c0_i32_22 : i32 to vector<16x128xi32>
    %53 = arith.cmpi ne, %51, %52 : vector<16x128xi32>
    %54 = vector.extract_strided_slice %33 {offsets = [0, 1], sizes = [16, 127], strides = [1, 1]} : vector<16x128xi32> to vector<16x127xi32>
    %55 = vector.extract_strided_slice %33 {offsets = [0, 0], sizes = [16, 1], strides = [1, 1]} : vector<16x128xi32> to vector<16x1xi32>
    %56 = tpu.concatenate %54, %55 in 1 : vector<16x127xi32>, vector<16x1xi32> -> vector<16x128xi32>
    %57 = vector.extract_strided_slice %33 {offsets = [0, 113], sizes = [16, 15], strides = [1, 1]} : vector<16x128xi32> to vector<16x15xi32>
    %58 = vector.extract_strided_slice %33 {offsets = [0, 0], sizes = [16, 113], strides = [1, 1]} : vector<16x128xi32> to vector<16x113xi32>
    %59 = tpu.concatenate %57, %58 in 1 : vector<16x15xi32>, vector<16x113xi32> -> vector<16x128xi32>
    %60 = vector.shape_cast %19 : vector<1x128xi1> to vector<1x128xi1>
    %61 = vector.broadcast %60 : vector<1x128xi1> to vector<16x128xi1>
    %62 = arith.select %61, %56, %59 : vector<16x128xi1>, vector<16x128xi32>
    %63 = arith.select %53, %62, %33 : vector<16x128xi1>, vector<16x128xi32>
    %c2_i32 = arith.constant 2 : i32
    %64 = vector.broadcast %c2_i32 : i32 to vector<16x128xi32>
    %65 = arith.andi %49, %64 : vector<16x128xi32>
    %c0_i32_23 = arith.constant 0 : i32
    %66 = vector.broadcast %c0_i32_23 : i32 to vector<16x128xi32>
    %67 = arith.cmpi ne, %65, %66 : vector<16x128xi32>
    %68 = vector.extract_strided_slice %63 {offsets = [0, 2], sizes = [16, 126], strides = [1, 1]} : vector<16x128xi32> to vector<16x126xi32>
    %69 = vector.extract_strided_slice %63 {offsets = [0, 0], sizes = [16, 2], strides = [1, 1]} : vector<16x128xi32> to vector<16x2xi32>
    %70 = tpu.concatenate %68, %69 in 1 : vector<16x126xi32>, vector<16x2xi32> -> vector<16x128xi32>
    %71 = vector.extract_strided_slice %63 {offsets = [0, 114], sizes = [16, 14], strides = [1, 1]} : vector<16x128xi32> to vector<16x14xi32>
    %72 = vector.extract_strided_slice %63 {offsets = [0, 0], sizes = [16, 114], strides = [1, 1]} : vector<16x128xi32> to vector<16x114xi32>
    %73 = tpu.concatenate %71, %72 in 1 : vector<16x14xi32>, vector<16x114xi32> -> vector<16x128xi32>
    %74 = vector.shape_cast %21 : vector<1x128xi1> to vector<1x128xi1>
    %75 = vector.broadcast %74 : vector<1x128xi1> to vector<16x128xi1>
    %76 = arith.select %75, %70, %73 : vector<16x128xi1>, vector<16x128xi32>
    %77 = arith.select %67, %76, %63 : vector<16x128xi1>, vector<16x128xi32>
    %c4_i32 = arith.constant 4 : i32
    %78 = vector.broadcast %c4_i32 : i32 to vector<16x128xi32>
    %79 = arith.andi %49, %78 : vector<16x128xi32>
    %c0_i32_24 = arith.constant 0 : i32
    %80 = vector.broadcast %c0_i32_24 : i32 to vector<16x128xi32>
    %81 = arith.cmpi ne, %79, %80 : vector<16x128xi32>
    %82 = vector.extract_strided_slice %77 {offsets = [0, 4], sizes = [16, 124], strides = [1, 1]} : vector<16x128xi32> to vector<16x124xi32>
    %83 = vector.extract_strided_slice %77 {offsets = [0, 0], sizes = [16, 4], strides = [1, 1]} : vector<16x128xi32> to vector<16x4xi32>
    %84 = tpu.concatenate %82, %83 in 1 : vector<16x124xi32>, vector<16x4xi32> -> vector<16x128xi32>
    %85 = vector.extract_strided_slice %77 {offsets = [0, 116], sizes = [16, 12], strides = [1, 1]} : vector<16x128xi32> to vector<16x12xi32>
    %86 = vector.extract_strided_slice %77 {offsets = [0, 0], sizes = [16, 116], strides = [1, 1]} : vector<16x128xi32> to vector<16x116xi32>
    %87 = tpu.concatenate %85, %86 in 1 : vector<16x12xi32>, vector<16x116xi32> -> vector<16x128xi32>
    %88 = vector.shape_cast %23 : vector<1x128xi1> to vector<1x128xi1>
    %89 = vector.broadcast %88 : vector<1x128xi1> to vector<16x128xi1>
    %90 = arith.select %89, %84, %87 : vector<16x128xi1>, vector<16x128xi32>
    %91 = arith.select %81, %90, %77 : vector<16x128xi1>, vector<16x128xi32>
    %c8_i32_25 = arith.constant 8 : i32
    %92 = vector.broadcast %c8_i32_25 : i32 to vector<16x128xi32>
    %93 = arith.andi %49, %92 : vector<16x128xi32>
    %c0_i32_26 = arith.constant 0 : i32
    %94 = vector.broadcast %c0_i32_26 : i32 to vector<16x128xi32>
    %95 = arith.cmpi ne, %93, %94 : vector<16x128xi32>
    %96 = vector.extract_strided_slice %91 {offsets = [0, 8], sizes = [16, 120], strides = [1, 1]} : vector<16x128xi32> to vector<16x120xi32>
    %97 = vector.extract_strided_slice %91 {offsets = [0, 0], sizes = [16, 8], strides = [1, 1]} : vector<16x128xi32> to vector<16x8xi32>
    %98 = tpu.concatenate %96, %97 in 1 : vector<16x120xi32>, vector<16x8xi32> -> vector<16x128xi32>
    %99 = vector.extract_strided_slice %91 {offsets = [0, 120], sizes = [16, 8], strides = [1, 1]} : vector<16x128xi32> to vector<16x8xi32>
    %100 = vector.extract_strided_slice %91 {offsets = [0, 0], sizes = [16, 120], strides = [1, 1]} : vector<16x128xi32> to vector<16x120xi32>
    %101 = tpu.concatenate %99, %100 in 1 : vector<16x8xi32>, vector<16x120xi32> -> vector<16x128xi32>
    %102 = vector.shape_cast %25 : vector<1x128xi1> to vector<1x128xi1>
    %103 = vector.broadcast %102 : vector<1x128xi1> to vector<16x128xi1>
    %104 = arith.select %103, %98, %101 : vector<16x128xi1>, vector<16x128xi32>
    %105 = arith.select %95, %104, %91 : vector<16x128xi1>, vector<16x128xi32>
    %cst_27 = arith.constant dense<0> : vector<128xi32>
    %106 = vector.multi_reduction <add>, %105, %cst_27 [0] : vector<16x128xi32> to vector<128xi32>
    %107 = vector.shape_cast %106 : vector<128xi32> to vector<1x128xi32>
    %c1_i32_28 = arith.constant 1 : i32
    %108 = vector.broadcast %c1_i32_28 : i32 to vector<1x128xi32>
    %109 = arith.andi %107, %108 : vector<1x128xi32>
    %c1_i32_29 = arith.constant 1 : i32
    %110 = vector.broadcast %c1_i32_29 : i32 to vector<1x128xi32>
    %111 = arith.cmpi eq, %109, %110 : vector<1x128xi32>
    %112 = arith.select %111, %7, %13 : vector<1x128xi1>, vector<1x128xi32>
    %c1_i32_30 = arith.constant 1 : i32
    %113 = vector.broadcast %c1_i32_30 : i32 to vector<1x128xi32>
    %114 = arith.andi %112, %113 : vector<1x128xi32>
    %c0_i32_31 = arith.constant 0 : i32
    %115 = vector.broadcast %c0_i32_31 : i32 to vector<1x128xi32>
    %116 = arith.cmpi ne, %114, %115 : vector<1x128xi32>
    %117 = vector.extract_strided_slice %105 {offsets = [1, 0], sizes = [15, 128], strides = [1, 1]} : vector<16x128xi32> to vector<15x128xi32>
    %118 = vector.extract_strided_slice %105 {offsets = [0, 0], sizes = [1, 128], strides = [1, 1]} : vector<16x128xi32> to vector<1x128xi32>
    %119 = tpu.concatenate %117, %118 in 0 : vector<15x128xi32>, vector<1x128xi32> -> vector<16x128xi32>
    %120 = vector.shape_cast %116 : vector<1x128xi1> to vector<1x128xi1>
    %121 = vector.broadcast %120 : vector<1x128xi1> to vector<16x128xi1>
    %122 = arith.select %121, %119, %105 : vector<16x128xi1>, vector<16x128xi32>
    %c2_i32_32 = arith.constant 2 : i32
    %123 = vector.broadcast %c2_i32_32 : i32 to vector<1x128xi32>
    %124 = arith.andi %112, %123 : vector<1x128xi32>
    %c0_i32_33 = arith.constant 0 : i32
    %125 = vector.broadcast %c0_i32_33 : i32 to vector<1x128xi32>
    %126 = arith.cmpi ne, %124, %125 : vector<1x128xi32>
    %127 = vector.extract_strided_slice %122 {offsets = [2, 0], sizes = [14, 128], strides = [1, 1]} : vector<16x128xi32> to vector<14x128xi32>
    %128 = vector.extract_strided_slice %122 {offsets = [0, 0], sizes = [2, 128], strides = [1, 1]} : vector<16x128xi32> to vector<2x128xi32>
    %129 = tpu.concatenate %127, %128 in 0 : vector<14x128xi32>, vector<2x128xi32> -> vector<16x128xi32>
    %130 = vector.shape_cast %126 : vector<1x128xi1> to vector<1x128xi1>
    %131 = vector.broadcast %130 : vector<1x128xi1> to vector<16x128xi1>
    %132 = arith.select %131, %129, %122 : vector<16x128xi1>, vector<16x128xi32>
    %c4_i32_34 = arith.constant 4 : i32
    %133 = vector.broadcast %c4_i32_34 : i32 to vector<1x128xi32>
    %134 = arith.andi %112, %133 : vector<1x128xi32>
    %c0_i32_35 = arith.constant 0 : i32
    %135 = vector.broadcast %c0_i32_35 : i32 to vector<1x128xi32>
    %136 = arith.cmpi ne, %134, %135 : vector<1x128xi32>
    %137 = vector.extract_strided_slice %132 {offsets = [4, 0], sizes = [12, 128], strides = [1, 1]} : vector<16x128xi32> to vector<12x128xi32>
    %138 = vector.extract_strided_slice %132 {offsets = [0, 0], sizes = [4, 128], strides = [1, 1]} : vector<16x128xi32> to vector<4x128xi32>
    %139 = tpu.concatenate %137, %138 in 0 : vector<12x128xi32>, vector<4x128xi32> -> vector<16x128xi32>
    %140 = vector.shape_cast %136 : vector<1x128xi1> to vector<1x128xi1>
    %141 = vector.broadcast %140 : vector<1x128xi1> to vector<16x128xi1>
    %142 = arith.select %141, %139, %132 : vector<16x128xi1>, vector<16x128xi32>
    %c8_i32_36 = arith.constant 8 : i32
    %143 = vector.broadcast %c8_i32_36 : i32 to vector<1x128xi32>
    %144 = arith.andi %112, %143 : vector<1x128xi32>
    %c0_i32_37 = arith.constant 0 : i32
    %145 = vector.broadcast %c0_i32_37 : i32 to vector<1x128xi32>
    %146 = arith.cmpi ne, %144, %145 : vector<1x128xi32>
    %147 = vector.extract_strided_slice %142 {offsets = [8, 0], sizes = [8, 128], strides = [1, 1]} : vector<16x128xi32> to vector<8x128xi32>
    %148 = vector.extract_strided_slice %142 {offsets = [0, 0], sizes = [8, 128], strides = [1, 1]} : vector<16x128xi32> to vector<8x128xi32>
    %149 = tpu.concatenate %147, %148 in 0 : vector<8x128xi32>, vector<8x128xi32> -> vector<16x128xi32>
    %150 = vector.shape_cast %146 : vector<1x128xi1> to vector<1x128xi1>
    %151 = vector.broadcast %150 : vector<1x128xi1> to vector<16x128xi1>
    %152 = arith.select %151, %149, %142 : vector<16x128xi1>, vector<16x128xi32>
    %153 = arith.xori %152, %14 : vector<16x128xi32>
    %c1_i32_38 = arith.constant 1 : i32
    %c1_i32_39 = arith.constant 1 : i32
    %154 = vector.broadcast %c1_i32_39 : i32 to vector<16x128xi32>
    %155 = arith.andi %153, %154 : vector<16x128xi32>
    %156 = arith.sitofp %155 : vector<16x128xi32> to vector<16x128xf32>
    %157 = arith.truncf %156 : vector<16x128xf32> to vector<16x128xbf16>
    %c0_40 = arith.constant 0 : index
    %c0_41 = arith.constant 0 : index
    %158 = vector.load %arg5[%c0_40, %c0_41] : memref<128x128xbf16, #tpu.memory_space<vmem>>, vector<128x128xbf16>
    %cst_42 = arith.constant dense<0.000000e+00> : vector<16x128xf32>
    %159 = tpu.matmul %157, %158, %cst_42 {dimension_numbers = #tpu.dot_dimension_numbers<[1], [0], [0], [1], [0, 0, 1, 1], [], []>} : vector<16x128xbf16>, vector<128x128xbf16>, vector<16x128xf32> -> vector<16x128xf32>
    %160 = arith.fptosi %159 : vector<16x128xf32> to vector<16x128xi32>
    %c1_i32_43 = arith.constant 1 : i32
    %161 = vector.broadcast %c1_i32_43 : i32 to vector<16x128xi32>
    %162 = arith.andi %160, %161 : vector<16x128xi32>
    %c0_i32_44 = arith.constant 0 : i32
    %163 = vector.broadcast %c0_i32_44 : i32 to vector<16x128xi32>
    %164 = arith.cmpi eq, %162, %163 : vector<16x128xi32>
    %165 = vector.shape_cast %0 : vector<16x1xi32> to vector<16x1xi32>
    %166 = vector.broadcast %165 : vector<16x1xi32> to vector<16x128xi32>
    %167 = vector.shape_cast %6 : vector<16x1xi32> to vector<16x1xi32>
    %168 = vector.broadcast %167 : vector<16x1xi32> to vector<16x128xi32>
    %169 = arith.select %164, %166, %168 : vector<16x128xi1>, vector<16x128xi32>
    %c1_i32_45 = arith.constant 1 : i32
    %170 = vector.broadcast %c1_i32_45 : i32 to vector<16x128xi32>
    %171 = arith.andi %169, %170 : vector<16x128xi32>
    %c0_i32_46 = arith.constant 0 : i32
    %172 = vector.broadcast %c0_i32_46 : i32 to vector<16x128xi32>
    %173 = arith.cmpi ne, %171, %172 : vector<16x128xi32>
    %174 = vector.extract_strided_slice %153 {offsets = [0, 1], sizes = [16, 127], strides = [1, 1]} : vector<16x128xi32> to vector<16x127xi32>
    %175 = vector.extract_strided_slice %153 {offsets = [0, 0], sizes = [16, 1], strides = [1, 1]} : vector<16x128xi32> to vector<16x1xi32>
    %176 = tpu.concatenate %174, %175 in 1 : vector<16x127xi32>, vector<16x1xi32> -> vector<16x128xi32>
    %177 = vector.extract_strided_slice %153 {offsets = [0, 113], sizes = [16, 15], strides = [1, 1]} : vector<16x128xi32> to vector<16x15xi32>
    %178 = vector.extract_strided_slice %153 {offsets = [0, 0], sizes = [16, 113], strides = [1, 1]} : vector<16x128xi32> to vector<16x113xi32>
    %179 = tpu.concatenate %177, %178 in 1 : vector<16x15xi32>, vector<16x113xi32> -> vector<16x128xi32>
    %180 = vector.shape_cast %19 : vector<1x128xi1> to vector<1x128xi1>
    %181 = vector.broadcast %180 : vector<1x128xi1> to vector<16x128xi1>
    %182 = arith.select %181, %176, %179 : vector<16x128xi1>, vector<16x128xi32>
    %183 = arith.select %173, %182, %153 : vector<16x128xi1>, vector<16x128xi32>
    %c2_i32_47 = arith.constant 2 : i32
    %184 = vector.broadcast %c2_i32_47 : i32 to vector<16x128xi32>
    %185 = arith.andi %169, %184 : vector<16x128xi32>
    %c0_i32_48 = arith.constant 0 : i32
    %186 = vector.broadcast %c0_i32_48 : i32 to vector<16x128xi32>
    %187 = arith.cmpi ne, %185, %186 : vector<16x128xi32>
    %188 = vector.extract_strided_slice %183 {offsets = [0, 2], sizes = [16, 126], strides = [1, 1]} : vector<16x128xi32> to vector<16x126xi32>
    %189 = vector.extract_strided_slice %183 {offsets = [0, 0], sizes = [16, 2], strides = [1, 1]} : vector<16x128xi32> to vector<16x2xi32>
    %190 = tpu.concatenate %188, %189 in 1 : vector<16x126xi32>, vector<16x2xi32> -> vector<16x128xi32>
    %191 = vector.extract_strided_slice %183 {offsets = [0, 114], sizes = [16, 14], strides = [1, 1]} : vector<16x128xi32> to vector<16x14xi32>
    %192 = vector.extract_strided_slice %183 {offsets = [0, 0], sizes = [16, 114], strides = [1, 1]} : vector<16x128xi32> to vector<16x114xi32>
    %193 = tpu.concatenate %191, %192 in 1 : vector<16x14xi32>, vector<16x114xi32> -> vector<16x128xi32>
    %194 = vector.shape_cast %21 : vector<1x128xi1> to vector<1x128xi1>
    %195 = vector.broadcast %194 : vector<1x128xi1> to vector<16x128xi1>
    %196 = arith.select %195, %190, %193 : vector<16x128xi1>, vector<16x128xi32>
    %197 = arith.select %187, %196, %183 : vector<16x128xi1>, vector<16x128xi32>
    %c4_i32_49 = arith.constant 4 : i32
    %198 = vector.broadcast %c4_i32_49 : i32 to vector<16x128xi32>
    %199 = arith.andi %169, %198 : vector<16x128xi32>
    %c0_i32_50 = arith.constant 0 : i32
    %200 = vector.broadcast %c0_i32_50 : i32 to vector<16x128xi32>
    %201 = arith.cmpi ne, %199, %200 : vector<16x128xi32>
    %202 = vector.extract_strided_slice %197 {offsets = [0, 4], sizes = [16, 124], strides = [1, 1]} : vector<16x128xi32> to vector<16x124xi32>
    %203 = vector.extract_strided_slice %197 {offsets = [0, 0], sizes = [16, 4], strides = [1, 1]} : vector<16x128xi32> to vector<16x4xi32>
    %204 = tpu.concatenate %202, %203 in 1 : vector<16x124xi32>, vector<16x4xi32> -> vector<16x128xi32>
    %205 = vector.extract_strided_slice %197 {offsets = [0, 116], sizes = [16, 12], strides = [1, 1]} : vector<16x128xi32> to vector<16x12xi32>
    %206 = vector.extract_strided_slice %197 {offsets = [0, 0], sizes = [16, 116], strides = [1, 1]} : vector<16x128xi32> to vector<16x116xi32>
    %207 = tpu.concatenate %205, %206 in 1 : vector<16x12xi32>, vector<16x116xi32> -> vector<16x128xi32>
    %208 = vector.shape_cast %23 : vector<1x128xi1> to vector<1x128xi1>
    %209 = vector.broadcast %208 : vector<1x128xi1> to vector<16x128xi1>
    %210 = arith.select %209, %204, %207 : vector<16x128xi1>, vector<16x128xi32>
    %211 = arith.select %201, %210, %197 : vector<16x128xi1>, vector<16x128xi32>
    %c8_i32_51 = arith.constant 8 : i32
    %212 = vector.broadcast %c8_i32_51 : i32 to vector<16x128xi32>
    %213 = arith.andi %169, %212 : vector<16x128xi32>
    %c0_i32_52 = arith.constant 0 : i32
    %214 = vector.broadcast %c0_i32_52 : i32 to vector<16x128xi32>
    %215 = arith.cmpi ne, %213, %214 : vector<16x128xi32>
    %216 = vector.extract_strided_slice %211 {offsets = [0, 8], sizes = [16, 120], strides = [1, 1]} : vector<16x128xi32> to vector<16x120xi32>
    %217 = vector.extract_strided_slice %211 {offsets = [0, 0], sizes = [16, 8], strides = [1, 1]} : vector<16x128xi32> to vector<16x8xi32>
    %218 = tpu.concatenate %216, %217 in 1 : vector<16x120xi32>, vector<16x8xi32> -> vector<16x128xi32>
    %219 = vector.extract_strided_slice %211 {offsets = [0, 120], sizes = [16, 8], strides = [1, 1]} : vector<16x128xi32> to vector<16x8xi32>
    %220 = vector.extract_strided_slice %211 {offsets = [0, 0], sizes = [16, 120], strides = [1, 1]} : vector<16x128xi32> to vector<16x120xi32>
    %221 = tpu.concatenate %219, %220 in 1 : vector<16x8xi32>, vector<16x120xi32> -> vector<16x128xi32>
    %222 = vector.shape_cast %25 : vector<1x128xi1> to vector<1x128xi1>
    %223 = vector.broadcast %222 : vector<1x128xi1> to vector<16x128xi1>
    %224 = arith.select %223, %218, %221 : vector<16x128xi1>, vector<16x128xi32>
    %225 = arith.select %215, %224, %211 : vector<16x128xi1>, vector<16x128xi32>
    %cst_53 = arith.constant dense<0> : vector<128xi32>
    %226 = vector.multi_reduction <add>, %225, %cst_53 [0] : vector<16x128xi32> to vector<128xi32>
    %227 = vector.shape_cast %226 : vector<128xi32> to vector<1x128xi32>
    %c1_i32_54 = arith.constant 1 : i32
    %228 = vector.broadcast %c1_i32_54 : i32 to vector<1x128xi32>
    %229 = arith.andi %227, %228 : vector<1x128xi32>
    %c1_i32_55 = arith.constant 1 : i32
    %230 = vector.broadcast %c1_i32_55 : i32 to vector<1x128xi32>
    %231 = arith.cmpi eq, %229, %230 : vector<1x128xi32>
    %232 = arith.select %231, %7, %13 : vector<1x128xi1>, vector<1x128xi32>
    %c1_i32_56 = arith.constant 1 : i32
    %233 = vector.broadcast %c1_i32_56 : i32 to vector<1x128xi32>
    %234 = arith.andi %232, %233 : vector<1x128xi32>
    %c0_i32_57 = arith.constant 0 : i32
    %235 = vector.broadcast %c0_i32_57 : i32 to vector<1x128xi32>
    %236 = arith.cmpi ne, %234, %235 : vector<1x128xi32>
    %237 = vector.extract_strided_slice %225 {offsets = [1, 0], sizes = [15, 128], strides = [1, 1]} : vector<16x128xi32> to vector<15x128xi32>
    %238 = vector.extract_strided_slice %225 {offsets = [0, 0], sizes = [1, 128], strides = [1, 1]} : vector<16x128xi32> to vector<1x128xi32>
    %239 = tpu.concatenate %237, %238 in 0 : vector<15x128xi32>, vector<1x128xi32> -> vector<16x128xi32>
    %240 = vector.shape_cast %236 : vector<1x128xi1> to vector<1x128xi1>
    %241 = vector.broadcast %240 : vector<1x128xi1> to vector<16x128xi1>
    %242 = arith.select %241, %239, %225 : vector<16x128xi1>, vector<16x128xi32>
    %c2_i32_58 = arith.constant 2 : i32
    %243 = vector.broadcast %c2_i32_58 : i32 to vector<1x128xi32>
    %244 = arith.andi %232, %243 : vector<1x128xi32>
    %c0_i32_59 = arith.constant 0 : i32
    %245 = vector.broadcast %c0_i32_59 : i32 to vector<1x128xi32>
    %246 = arith.cmpi ne, %244, %245 : vector<1x128xi32>
    %247 = vector.extract_strided_slice %242 {offsets = [2, 0], sizes = [14, 128], strides = [1, 1]} : vector<16x128xi32> to vector<14x128xi32>
    %248 = vector.extract_strided_slice %242 {offsets = [0, 0], sizes = [2, 128], strides = [1, 1]} : vector<16x128xi32> to vector<2x128xi32>
    %249 = tpu.concatenate %247, %248 in 0 : vector<14x128xi32>, vector<2x128xi32> -> vector<16x128xi32>
    %250 = vector.shape_cast %246 : vector<1x128xi1> to vector<1x128xi1>
    %251 = vector.broadcast %250 : vector<1x128xi1> to vector<16x128xi1>
    %252 = arith.select %251, %249, %242 : vector<16x128xi1>, vector<16x128xi32>
    %c4_i32_60 = arith.constant 4 : i32
    %253 = vector.broadcast %c4_i32_60 : i32 to vector<1x128xi32>
    %254 = arith.andi %232, %253 : vector<1x128xi32>
    %c0_i32_61 = arith.constant 0 : i32
    %255 = vector.broadcast %c0_i32_61 : i32 to vector<1x128xi32>
    %256 = arith.cmpi ne, %254, %255 : vector<1x128xi32>
    %257 = vector.extract_strided_slice %252 {offsets = [4, 0], sizes = [12, 128], strides = [1, 1]} : vector<16x128xi32> to vector<12x128xi32>
    %258 = vector.extract_strided_slice %252 {offsets = [0, 0], sizes = [4, 128], strides = [1, 1]} : vector<16x128xi32> to vector<4x128xi32>
    %259 = tpu.concatenate %257, %258 in 0 : vector<12x128xi32>, vector<4x128xi32> -> vector<16x128xi32>
    %260 = vector.shape_cast %256 : vector<1x128xi1> to vector<1x128xi1>
    %261 = vector.broadcast %260 : vector<1x128xi1> to vector<16x128xi1>
    %262 = arith.select %261, %259, %252 : vector<16x128xi1>, vector<16x128xi32>
    %c8_i32_62 = arith.constant 8 : i32
    %263 = vector.broadcast %c8_i32_62 : i32 to vector<1x128xi32>
    %264 = arith.andi %232, %263 : vector<1x128xi32>
    %c0_i32_63 = arith.constant 0 : i32
    %265 = vector.broadcast %c0_i32_63 : i32 to vector<1x128xi32>
    %266 = arith.cmpi ne, %264, %265 : vector<1x128xi32>
    %267 = vector.extract_strided_slice %262 {offsets = [8, 0], sizes = [8, 128], strides = [1, 1]} : vector<16x128xi32> to vector<8x128xi32>
    %268 = vector.extract_strided_slice %262 {offsets = [0, 0], sizes = [8, 128], strides = [1, 1]} : vector<16x128xi32> to vector<8x128xi32>
    %269 = tpu.concatenate %267, %268 in 0 : vector<8x128xi32>, vector<8x128xi32> -> vector<16x128xi32>
    %270 = vector.shape_cast %266 : vector<1x128xi1> to vector<1x128xi1>
    %271 = vector.broadcast %270 : vector<1x128xi1> to vector<16x128xi1>
    %272 = arith.select %271, %269, %262 : vector<16x128xi1>, vector<16x128xi32>
    %273 = arith.xori %272, %14 : vector<16x128xi32>
    %c2_i32_64 = arith.constant 2 : i32
    %c1_i32_65 = arith.constant 1 : i32
    %274 = vector.broadcast %c1_i32_65 : i32 to vector<16x128xi32>
    %275 = arith.andi %273, %274 : vector<16x128xi32>
    %276 = arith.sitofp %275 : vector<16x128xi32> to vector<16x128xf32>
    %277 = arith.truncf %276 : vector<16x128xf32> to vector<16x128xbf16>
    %c0_66 = arith.constant 0 : index
    %c0_67 = arith.constant 0 : index
    %278 = vector.load %arg5[%c0_66, %c0_67] : memref<128x128xbf16, #tpu.memory_space<vmem>>, vector<128x128xbf16>
    %cst_68 = arith.constant dense<0.000000e+00> : vector<16x128xf32>
    %279 = tpu.matmul %277, %278, %cst_68 {dimension_numbers = #tpu.dot_dimension_numbers<[1], [0], [0], [1], [0, 0, 1, 1], [], []>} : vector<16x128xbf16>, vector<128x128xbf16>, vector<16x128xf32> -> vector<16x128xf32>
    %280 = arith.fptosi %279 : vector<16x128xf32> to vector<16x128xi32>
    %c1_i32_69 = arith.constant 1 : i32
    %281 = vector.broadcast %c1_i32_69 : i32 to vector<16x128xi32>
    %282 = arith.andi %280, %281 : vector<16x128xi32>
    %c0_i32_70 = arith.constant 0 : i32
    %283 = vector.broadcast %c0_i32_70 : i32 to vector<16x128xi32>
    %284 = arith.cmpi eq, %282, %283 : vector<16x128xi32>
    %285 = vector.shape_cast %0 : vector<16x1xi32> to vector<16x1xi32>
    %286 = vector.broadcast %285 : vector<16x1xi32> to vector<16x128xi32>
    %287 = vector.shape_cast %6 : vector<16x1xi32> to vector<16x1xi32>
    %288 = vector.broadcast %287 : vector<16x1xi32> to vector<16x128xi32>
    %289 = arith.select %284, %286, %288 : vector<16x128xi1>, vector<16x128xi32>
    %c1_i32_71 = arith.constant 1 : i32
    %290 = vector.broadcast %c1_i32_71 : i32 to vector<16x128xi32>
    %291 = arith.andi %289, %290 : vector<16x128xi32>
    %c0_i32_72 = arith.constant 0 : i32
    %292 = vector.broadcast %c0_i32_72 : i32 to vector<16x128xi32>
    %293 = arith.cmpi ne, %291, %292 : vector<16x128xi32>
    %294 = vector.extract_strided_slice %273 {offsets = [0, 1], sizes = [16, 127], strides = [1, 1]} : vector<16x128xi32> to vector<16x127xi32>
    %295 = vector.extract_strided_slice %273 {offsets = [0, 0], sizes = [16, 1], strides = [1, 1]} : vector<16x128xi32> to vector<16x1xi32>
    %296 = tpu.concatenate %294, %295 in 1 : vector<16x127xi32>, vector<16x1xi32> -> vector<16x128xi32>
    %297 = vector.extract_strided_slice %273 {offsets = [0, 113], sizes = [16, 15], strides = [1, 1]} : vector<16x128xi32> to vector<16x15xi32>
    %298 = vector.extract_strided_slice %273 {offsets = [0, 0], sizes = [16, 113], strides = [1, 1]} : vector<16x128xi32> to vector<16x113xi32>
    %299 = tpu.concatenate %297, %298 in 1 : vector<16x15xi32>, vector<16x113xi32> -> vector<16x128xi32>
    %300 = vector.shape_cast %19 : vector<1x128xi1> to vector<1x128xi1>
    %301 = vector.broadcast %300 : vector<1x128xi1> to vector<16x128xi1>
    %302 = arith.select %301, %296, %299 : vector<16x128xi1>, vector<16x128xi32>
    %303 = arith.select %293, %302, %273 : vector<16x128xi1>, vector<16x128xi32>
    %c2_i32_73 = arith.constant 2 : i32
    %304 = vector.broadcast %c2_i32_73 : i32 to vector<16x128xi32>
    %305 = arith.andi %289, %304 : vector<16x128xi32>
    %c0_i32_74 = arith.constant 0 : i32
    %306 = vector.broadcast %c0_i32_74 : i32 to vector<16x128xi32>
    %307 = arith.cmpi ne, %305, %306 : vector<16x128xi32>
    %308 = vector.extract_strided_slice %303 {offsets = [0, 2], sizes = [16, 126], strides = [1, 1]} : vector<16x128xi32> to vector<16x126xi32>
    %309 = vector.extract_strided_slice %303 {offsets = [0, 0], sizes = [16, 2], strides = [1, 1]} : vector<16x128xi32> to vector<16x2xi32>
    %310 = tpu.concatenate %308, %309 in 1 : vector<16x126xi32>, vector<16x2xi32> -> vector<16x128xi32>
    %311 = vector.extract_strided_slice %303 {offsets = [0, 114], sizes = [16, 14], strides = [1, 1]} : vector<16x128xi32> to vector<16x14xi32>
    %312 = vector.extract_strided_slice %303 {offsets = [0, 0], sizes = [16, 114], strides = [1, 1]} : vector<16x128xi32> to vector<16x114xi32>
    %313 = tpu.concatenate %311, %312 in 1 : vector<16x14xi32>, vector<16x114xi32> -> vector<16x128xi32>
    %314 = vector.shape_cast %21 : vector<1x128xi1> to vector<1x128xi1>
    %315 = vector.broadcast %314 : vector<1x128xi1> to vector<16x128xi1>
    %316 = arith.select %315, %310, %313 : vector<16x128xi1>, vector<16x128xi32>
    %317 = arith.select %307, %316, %303 : vector<16x128xi1>, vector<16x128xi32>
    %c4_i32_75 = arith.constant 4 : i32
    %318 = vector.broadcast %c4_i32_75 : i32 to vector<16x128xi32>
    %319 = arith.andi %289, %318 : vector<16x128xi32>
    %c0_i32_76 = arith.constant 0 : i32
    %320 = vector.broadcast %c0_i32_76 : i32 to vector<16x128xi32>
    %321 = arith.cmpi ne, %319, %320 : vector<16x128xi32>
    %322 = vector.extract_strided_slice %317 {offsets = [0, 4], sizes = [16, 124], strides = [1, 1]} : vector<16x128xi32> to vector<16x124xi32>
    %323 = vector.extract_strided_slice %317 {offsets = [0, 0], sizes = [16, 4], strides = [1, 1]} : vector<16x128xi32> to vector<16x4xi32>
    %324 = tpu.concatenate %322, %323 in 1 : vector<16x124xi32>, vector<16x4xi32> -> vector<16x128xi32>
    %325 = vector.extract_strided_slice %317 {offsets = [0, 116], sizes = [16, 12], strides = [1, 1]} : vector<16x128xi32> to vector<16x12xi32>
    %326 = vector.extract_strided_slice %317 {offsets = [0, 0], sizes = [16, 116], strides = [1, 1]} : vector<16x128xi32> to vector<16x116xi32>
    %327 = tpu.concatenate %325, %326 in 1 : vector<16x12xi32>, vector<16x116xi32> -> vector<16x128xi32>
    %328 = vector.shape_cast %23 : vector<1x128xi1> to vector<1x128xi1>
    %329 = vector.broadcast %328 : vector<1x128xi1> to vector<16x128xi1>
    %330 = arith.select %329, %324, %327 : vector<16x128xi1>, vector<16x128xi32>
    %331 = arith.select %321, %330, %317 : vector<16x128xi1>, vector<16x128xi32>
    %c8_i32_77 = arith.constant 8 : i32
    %332 = vector.broadcast %c8_i32_77 : i32 to vector<16x128xi32>
    %333 = arith.andi %289, %332 : vector<16x128xi32>
    %c0_i32_78 = arith.constant 0 : i32
    %334 = vector.broadcast %c0_i32_78 : i32 to vector<16x128xi32>
    %335 = arith.cmpi ne, %333, %334 : vector<16x128xi32>
    %336 = vector.extract_strided_slice %331 {offsets = [0, 8], sizes = [16, 120], strides = [1, 1]} : vector<16x128xi32> to vector<16x120xi32>
    %337 = vector.extract_strided_slice %331 {offsets = [0, 0], sizes = [16, 8], strides = [1, 1]} : vector<16x128xi32> to vector<16x8xi32>
    %338 = tpu.concatenate %336, %337 in 1 : vector<16x120xi32>, vector<16x8xi32> -> vector<16x128xi32>
    %339 = vector.extract_strided_slice %331 {offsets = [0, 120], sizes = [16, 8], strides = [1, 1]} : vector<16x128xi32> to vector<16x8xi32>
    %340 = vector.extract_strided_slice %331 {offsets = [0, 0], sizes = [16, 120], strides = [1, 1]} : vector<16x128xi32> to vector<16x120xi32>
    %341 = tpu.concatenate %339, %340 in 1 : vector<16x8xi32>, vector<16x120xi32> -> vector<16x128xi32>
    %342 = vector.shape_cast %25 : vector<1x128xi1> to vector<1x128xi1>
    %343 = vector.broadcast %342 : vector<1x128xi1> to vector<16x128xi1>
    %344 = arith.select %343, %338, %341 : vector<16x128xi1>, vector<16x128xi32>
    %345 = arith.select %335, %344, %331 : vector<16x128xi1>, vector<16x128xi32>
    %cst_79 = arith.constant dense<0> : vector<128xi32>
    %346 = vector.multi_reduction <add>, %345, %cst_79 [0] : vector<16x128xi32> to vector<128xi32>
    %347 = vector.shape_cast %346 : vector<128xi32> to vector<1x128xi32>
    %c1_i32_80 = arith.constant 1 : i32
    %348 = vector.broadcast %c1_i32_80 : i32 to vector<1x128xi32>
    %349 = arith.andi %347, %348 : vector<1x128xi32>
    %c1_i32_81 = arith.constant 1 : i32
    %350 = vector.broadcast %c1_i32_81 : i32 to vector<1x128xi32>
    %351 = arith.cmpi eq, %349, %350 : vector<1x128xi32>
    %352 = arith.select %351, %7, %13 : vector<1x128xi1>, vector<1x128xi32>
    %c1_i32_82 = arith.constant 1 : i32
    %353 = vector.broadcast %c1_i32_82 : i32 to vector<1x128xi32>
    %354 = arith.andi %352, %353 : vector<1x128xi32>
    %c0_i32_83 = arith.constant 0 : i32
    %355 = vector.broadcast %c0_i32_83 : i32 to vector<1x128xi32>
    %356 = arith.cmpi ne, %354, %355 : vector<1x128xi32>
    %357 = vector.extract_strided_slice %345 {offsets = [1, 0], sizes = [15, 128], strides = [1, 1]} : vector<16x128xi32> to vector<15x128xi32>
    %358 = vector.extract_strided_slice %345 {offsets = [0, 0], sizes = [1, 128], strides = [1, 1]} : vector<16x128xi32> to vector<1x128xi32>
    %359 = tpu.concatenate %357, %358 in 0 : vector<15x128xi32>, vector<1x128xi32> -> vector<16x128xi32>
    %360 = vector.shape_cast %356 : vector<1x128xi1> to vector<1x128xi1>
    %361 = vector.broadcast %360 : vector<1x128xi1> to vector<16x128xi1>
    %362 = arith.select %361, %359, %345 : vector<16x128xi1>, vector<16x128xi32>
    %c2_i32_84 = arith.constant 2 : i32
    %363 = vector.broadcast %c2_i32_84 : i32 to vector<1x128xi32>
    %364 = arith.andi %352, %363 : vector<1x128xi32>
    %c0_i32_85 = arith.constant 0 : i32
    %365 = vector.broadcast %c0_i32_85 : i32 to vector<1x128xi32>
    %366 = arith.cmpi ne, %364, %365 : vector<1x128xi32>
    %367 = vector.extract_strided_slice %362 {offsets = [2, 0], sizes = [14, 128], strides = [1, 1]} : vector<16x128xi32> to vector<14x128xi32>
    %368 = vector.extract_strided_slice %362 {offsets = [0, 0], sizes = [2, 128], strides = [1, 1]} : vector<16x128xi32> to vector<2x128xi32>
    %369 = tpu.concatenate %367, %368 in 0 : vector<14x128xi32>, vector<2x128xi32> -> vector<16x128xi32>
    %370 = vector.shape_cast %366 : vector<1x128xi1> to vector<1x128xi1>
    %371 = vector.broadcast %370 : vector<1x128xi1> to vector<16x128xi1>
    %372 = arith.select %371, %369, %362 : vector<16x128xi1>, vector<16x128xi32>
    %c4_i32_86 = arith.constant 4 : i32
    %373 = vector.broadcast %c4_i32_86 : i32 to vector<1x128xi32>
    %374 = arith.andi %352, %373 : vector<1x128xi32>
    %c0_i32_87 = arith.constant 0 : i32
    %375 = vector.broadcast %c0_i32_87 : i32 to vector<1x128xi32>
    %376 = arith.cmpi ne, %374, %375 : vector<1x128xi32>
    %377 = vector.extract_strided_slice %372 {offsets = [4, 0], sizes = [12, 128], strides = [1, 1]} : vector<16x128xi32> to vector<12x128xi32>
    %378 = vector.extract_strided_slice %372 {offsets = [0, 0], sizes = [4, 128], strides = [1, 1]} : vector<16x128xi32> to vector<4x128xi32>
    %379 = tpu.concatenate %377, %378 in 0 : vector<12x128xi32>, vector<4x128xi32> -> vector<16x128xi32>
    %380 = vector.shape_cast %376 : vector<1x128xi1> to vector<1x128xi1>
    %381 = vector.broadcast %380 : vector<1x128xi1> to vector<16x128xi1>
    %382 = arith.select %381, %379, %372 : vector<16x128xi1>, vector<16x128xi32>
    %c8_i32_88 = arith.constant 8 : i32
    %383 = vector.broadcast %c8_i32_88 : i32 to vector<1x128xi32>
    %384 = arith.andi %352, %383 : vector<1x128xi32>
    %c0_i32_89 = arith.constant 0 : i32
    %385 = vector.broadcast %c0_i32_89 : i32 to vector<1x128xi32>
    %386 = arith.cmpi ne, %384, %385 : vector<1x128xi32>
    %387 = vector.extract_strided_slice %382 {offsets = [8, 0], sizes = [8, 128], strides = [1, 1]} : vector<16x128xi32> to vector<8x128xi32>
    %388 = vector.extract_strided_slice %382 {offsets = [0, 0], sizes = [8, 128], strides = [1, 1]} : vector<16x128xi32> to vector<8x128xi32>
    %389 = tpu.concatenate %387, %388 in 0 : vector<8x128xi32>, vector<8x128xi32> -> vector<16x128xi32>
    %390 = vector.shape_cast %386 : vector<1x128xi1> to vector<1x128xi1>
    %391 = vector.broadcast %390 : vector<1x128xi1> to vector<16x128xi1>
    %392 = arith.select %391, %389, %382 : vector<16x128xi1>, vector<16x128xi32>
    %393 = arith.xori %392, %14 : vector<16x128xi32>
    %c3_i32 = arith.constant 3 : i32
    %c1_i32_90 = arith.constant 1 : i32
    %394 = vector.broadcast %c1_i32_90 : i32 to vector<16x128xi32>
    %395 = arith.andi %393, %394 : vector<16x128xi32>
    %396 = arith.sitofp %395 : vector<16x128xi32> to vector<16x128xf32>
    %397 = arith.truncf %396 : vector<16x128xf32> to vector<16x128xbf16>
    %c0_91 = arith.constant 0 : index
    %c0_92 = arith.constant 0 : index
    %398 = vector.load %arg5[%c0_91, %c0_92] : memref<128x128xbf16, #tpu.memory_space<vmem>>, vector<128x128xbf16>
    %cst_93 = arith.constant dense<0.000000e+00> : vector<16x128xf32>
    %399 = tpu.matmul %397, %398, %cst_93 {dimension_numbers = #tpu.dot_dimension_numbers<[1], [0], [0], [1], [0, 0, 1, 1], [], []>} : vector<16x128xbf16>, vector<128x128xbf16>, vector<16x128xf32> -> vector<16x128xf32>
    %400 = arith.fptosi %399 : vector<16x128xf32> to vector<16x128xi32>
    %c1_i32_94 = arith.constant 1 : i32
    %401 = vector.broadcast %c1_i32_94 : i32 to vector<16x128xi32>
    %402 = arith.andi %400, %401 : vector<16x128xi32>
    %c0_i32_95 = arith.constant 0 : i32
    %403 = vector.broadcast %c0_i32_95 : i32 to vector<16x128xi32>
    %404 = arith.cmpi eq, %402, %403 : vector<16x128xi32>
    %405 = vector.shape_cast %0 : vector<16x1xi32> to vector<16x1xi32>
    %406 = vector.broadcast %405 : vector<16x1xi32> to vector<16x128xi32>
    %407 = vector.shape_cast %6 : vector<16x1xi32> to vector<16x1xi32>
    %408 = vector.broadcast %407 : vector<16x1xi32> to vector<16x128xi32>
    %409 = arith.select %404, %406, %408 : vector<16x128xi1>, vector<16x128xi32>
    %c1_i32_96 = arith.constant 1 : i32
    %410 = vector.broadcast %c1_i32_96 : i32 to vector<16x128xi32>
    %411 = arith.andi %409, %410 : vector<16x128xi32>
    %c0_i32_97 = arith.constant 0 : i32
    %412 = vector.broadcast %c0_i32_97 : i32 to vector<16x128xi32>
    %413 = arith.cmpi ne, %411, %412 : vector<16x128xi32>
    %414 = vector.extract_strided_slice %393 {offsets = [0, 1], sizes = [16, 127], strides = [1, 1]} : vector<16x128xi32> to vector<16x127xi32>
    %415 = vector.extract_strided_slice %393 {offsets = [0, 0], sizes = [16, 1], strides = [1, 1]} : vector<16x128xi32> to vector<16x1xi32>
    %416 = tpu.concatenate %414, %415 in 1 : vector<16x127xi32>, vector<16x1xi32> -> vector<16x128xi32>
    %417 = vector.extract_strided_slice %393 {offsets = [0, 113], sizes = [16, 15], strides = [1, 1]} : vector<16x128xi32> to vector<16x15xi32>
    %418 = vector.extract_strided_slice %393 {offsets = [0, 0], sizes = [16, 113], strides = [1, 1]} : vector<16x128xi32> to vector<16x113xi32>
    %419 = tpu.concatenate %417, %418 in 1 : vector<16x15xi32>, vector<16x113xi32> -> vector<16x128xi32>
    %420 = vector.shape_cast %19 : vector<1x128xi1> to vector<1x128xi1>
    %421 = vector.broadcast %420 : vector<1x128xi1> to vector<16x128xi1>
    %422 = arith.select %421, %416, %419 : vector<16x128xi1>, vector<16x128xi32>
    %423 = arith.select %413, %422, %393 : vector<16x128xi1>, vector<16x128xi32>
    %c2_i32_98 = arith.constant 2 : i32
    %424 = vector.broadcast %c2_i32_98 : i32 to vector<16x128xi32>
    %425 = arith.andi %409, %424 : vector<16x128xi32>
    %c0_i32_99 = arith.constant 0 : i32
    %426 = vector.broadcast %c0_i32_99 : i32 to vector<16x128xi32>
    %427 = arith.cmpi ne, %425, %426 : vector<16x128xi32>
    %428 = vector.extract_strided_slice %423 {offsets = [0, 2], sizes = [16, 126], strides = [1, 1]} : vector<16x128xi32> to vector<16x126xi32>
    %429 = vector.extract_strided_slice %423 {offsets = [0, 0], sizes = [16, 2], strides = [1, 1]} : vector<16x128xi32> to vector<16x2xi32>
    %430 = tpu.concatenate %428, %429 in 1 : vector<16x126xi32>, vector<16x2xi32> -> vector<16x128xi32>
    %431 = vector.extract_strided_slice %423 {offsets = [0, 114], sizes = [16, 14], strides = [1, 1]} : vector<16x128xi32> to vector<16x14xi32>
    %432 = vector.extract_strided_slice %423 {offsets = [0, 0], sizes = [16, 114], strides = [1, 1]} : vector<16x128xi32> to vector<16x114xi32>
    %433 = tpu.concatenate %431, %432 in 1 : vector<16x14xi32>, vector<16x114xi32> -> vector<16x128xi32>
    %434 = vector.shape_cast %21 : vector<1x128xi1> to vector<1x128xi1>
    %435 = vector.broadcast %434 : vector<1x128xi1> to vector<16x128xi1>
    %436 = arith.select %435, %430, %433 : vector<16x128xi1>, vector<16x128xi32>
    %437 = arith.select %427, %436, %423 : vector<16x128xi1>, vector<16x128xi32>
    %c4_i32_100 = arith.constant 4 : i32
    %438 = vector.broadcast %c4_i32_100 : i32 to vector<16x128xi32>
    %439 = arith.andi %409, %438 : vector<16x128xi32>
    %c0_i32_101 = arith.constant 0 : i32
    %440 = vector.broadcast %c0_i32_101 : i32 to vector<16x128xi32>
    %441 = arith.cmpi ne, %439, %440 : vector<16x128xi32>
    %442 = vector.extract_strided_slice %437 {offsets = [0, 4], sizes = [16, 124], strides = [1, 1]} : vector<16x128xi32> to vector<16x124xi32>
    %443 = vector.extract_strided_slice %437 {offsets = [0, 0], sizes = [16, 4], strides = [1, 1]} : vector<16x128xi32> to vector<16x4xi32>
    %444 = tpu.concatenate %442, %443 in 1 : vector<16x124xi32>, vector<16x4xi32> -> vector<16x128xi32>
    %445 = vector.extract_strided_slice %437 {offsets = [0, 116], sizes = [16, 12], strides = [1, 1]} : vector<16x128xi32> to vector<16x12xi32>
    %446 = vector.extract_strided_slice %437 {offsets = [0, 0], sizes = [16, 116], strides = [1, 1]} : vector<16x128xi32> to vector<16x116xi32>
    %447 = tpu.concatenate %445, %446 in 1 : vector<16x12xi32>, vector<16x116xi32> -> vector<16x128xi32>
    %448 = vector.shape_cast %23 : vector<1x128xi1> to vector<1x128xi1>
    %449 = vector.broadcast %448 : vector<1x128xi1> to vector<16x128xi1>
    %450 = arith.select %449, %444, %447 : vector<16x128xi1>, vector<16x128xi32>
    %451 = arith.select %441, %450, %437 : vector<16x128xi1>, vector<16x128xi32>
    %c8_i32_102 = arith.constant 8 : i32
    %452 = vector.broadcast %c8_i32_102 : i32 to vector<16x128xi32>
    %453 = arith.andi %409, %452 : vector<16x128xi32>
    %c0_i32_103 = arith.constant 0 : i32
    %454 = vector.broadcast %c0_i32_103 : i32 to vector<16x128xi32>
    %455 = arith.cmpi ne, %453, %454 : vector<16x128xi32>
    %456 = vector.extract_strided_slice %451 {offsets = [0, 8], sizes = [16, 120], strides = [1, 1]} : vector<16x128xi32> to vector<16x120xi32>
    %457 = vector.extract_strided_slice %451 {offsets = [0, 0], sizes = [16, 8], strides = [1, 1]} : vector<16x128xi32> to vector<16x8xi32>
    %458 = tpu.concatenate %456, %457 in 1 : vector<16x120xi32>, vector<16x8xi32> -> vector<16x128xi32>
    %459 = vector.extract_strided_slice %451 {offsets = [0, 120], sizes = [16, 8], strides = [1, 1]} : vector<16x128xi32> to vector<16x8xi32>
    %460 = vector.extract_strided_slice %451 {offsets = [0, 0], sizes = [16, 120], strides = [1, 1]} : vector<16x128xi32> to vector<16x120xi32>
    %461 = tpu.concatenate %459, %460 in 1 : vector<16x8xi32>, vector<16x120xi32> -> vector<16x128xi32>
    %462 = vector.shape_cast %25 : vector<1x128xi1> to vector<1x128xi1>
    %463 = vector.broadcast %462 : vector<1x128xi1> to vector<16x128xi1>
    %464 = arith.select %463, %458, %461 : vector<16x128xi1>, vector<16x128xi32>
    %465 = arith.select %455, %464, %451 : vector<16x128xi1>, vector<16x128xi32>
    %cst_104 = arith.constant dense<0> : vector<128xi32>
    %466 = vector.multi_reduction <add>, %465, %cst_104 [0] : vector<16x128xi32> to vector<128xi32>
    %467 = vector.shape_cast %466 : vector<128xi32> to vector<1x128xi32>
    %c1_i32_105 = arith.constant 1 : i32
    %468 = vector.broadcast %c1_i32_105 : i32 to vector<1x128xi32>
    %469 = arith.andi %467, %468 : vector<1x128xi32>
    %c1_i32_106 = arith.constant 1 : i32
    %470 = vector.broadcast %c1_i32_106 : i32 to vector<1x128xi32>
    %471 = arith.cmpi eq, %469, %470 : vector<1x128xi32>
    %472 = arith.select %471, %7, %13 : vector<1x128xi1>, vector<1x128xi32>
    %c1_i32_107 = arith.constant 1 : i32
    %473 = vector.broadcast %c1_i32_107 : i32 to vector<1x128xi32>
    %474 = arith.andi %472, %473 : vector<1x128xi32>
    %c0_i32_108 = arith.constant 0 : i32
    %475 = vector.broadcast %c0_i32_108 : i32 to vector<1x128xi32>
    %476 = arith.cmpi ne, %474, %475 : vector<1x128xi32>
    %477 = vector.extract_strided_slice %465 {offsets = [1, 0], sizes = [15, 128], strides = [1, 1]} : vector<16x128xi32> to vector<15x128xi32>
    %478 = vector.extract_strided_slice %465 {offsets = [0, 0], sizes = [1, 128], strides = [1, 1]} : vector<16x128xi32> to vector<1x128xi32>
    %479 = tpu.concatenate %477, %478 in 0 : vector<15x128xi32>, vector<1x128xi32> -> vector<16x128xi32>
    %480 = vector.shape_cast %476 : vector<1x128xi1> to vector<1x128xi1>
    %481 = vector.broadcast %480 : vector<1x128xi1> to vector<16x128xi1>
    %482 = arith.select %481, %479, %465 : vector<16x128xi1>, vector<16x128xi32>
    %c2_i32_109 = arith.constant 2 : i32
    %483 = vector.broadcast %c2_i32_109 : i32 to vector<1x128xi32>
    %484 = arith.andi %472, %483 : vector<1x128xi32>
    %c0_i32_110 = arith.constant 0 : i32
    %485 = vector.broadcast %c0_i32_110 : i32 to vector<1x128xi32>
    %486 = arith.cmpi ne, %484, %485 : vector<1x128xi32>
    %487 = vector.extract_strided_slice %482 {offsets = [2, 0], sizes = [14, 128], strides = [1, 1]} : vector<16x128xi32> to vector<14x128xi32>
    %488 = vector.extract_strided_slice %482 {offsets = [0, 0], sizes = [2, 128], strides = [1, 1]} : vector<16x128xi32> to vector<2x128xi32>
    %489 = tpu.concatenate %487, %488 in 0 : vector<14x128xi32>, vector<2x128xi32> -> vector<16x128xi32>
    %490 = vector.shape_cast %486 : vector<1x128xi1> to vector<1x128xi1>
    %491 = vector.broadcast %490 : vector<1x128xi1> to vector<16x128xi1>
    %492 = arith.select %491, %489, %482 : vector<16x128xi1>, vector<16x128xi32>
    %c4_i32_111 = arith.constant 4 : i32
    %493 = vector.broadcast %c4_i32_111 : i32 to vector<1x128xi32>
    %494 = arith.andi %472, %493 : vector<1x128xi32>
    %c0_i32_112 = arith.constant 0 : i32
    %495 = vector.broadcast %c0_i32_112 : i32 to vector<1x128xi32>
    %496 = arith.cmpi ne, %494, %495 : vector<1x128xi32>
    %497 = vector.extract_strided_slice %492 {offsets = [4, 0], sizes = [12, 128], strides = [1, 1]} : vector<16x128xi32> to vector<12x128xi32>
    %498 = vector.extract_strided_slice %492 {offsets = [0, 0], sizes = [4, 128], strides = [1, 1]} : vector<16x128xi32> to vector<4x128xi32>
    %499 = tpu.concatenate %497, %498 in 0 : vector<12x128xi32>, vector<4x128xi32> -> vector<16x128xi32>
    %500 = vector.shape_cast %496 : vector<1x128xi1> to vector<1x128xi1>
    %501 = vector.broadcast %500 : vector<1x128xi1> to vector<16x128xi1>
    %502 = arith.select %501, %499, %492 : vector<16x128xi1>, vector<16x128xi32>
    %c8_i32_113 = arith.constant 8 : i32
    %503 = vector.broadcast %c8_i32_113 : i32 to vector<1x128xi32>
    %504 = arith.andi %472, %503 : vector<1x128xi32>
    %c0_i32_114 = arith.constant 0 : i32
    %505 = vector.broadcast %c0_i32_114 : i32 to vector<1x128xi32>
    %506 = arith.cmpi ne, %504, %505 : vector<1x128xi32>
    %507 = vector.extract_strided_slice %502 {offsets = [8, 0], sizes = [8, 128], strides = [1, 1]} : vector<16x128xi32> to vector<8x128xi32>
    %508 = vector.extract_strided_slice %502 {offsets = [0, 0], sizes = [8, 128], strides = [1, 1]} : vector<16x128xi32> to vector<8x128xi32>
    %509 = tpu.concatenate %507, %508 in 0 : vector<8x128xi32>, vector<8x128xi32> -> vector<16x128xi32>
    %510 = vector.shape_cast %506 : vector<1x128xi1> to vector<1x128xi1>
    %511 = vector.broadcast %510 : vector<1x128xi1> to vector<16x128xi1>
    %512 = arith.select %511, %509, %502 : vector<16x128xi1>, vector<16x128xi32>
    %513 = arith.xori %512, %14 : vector<16x128xi32>
    %c4_i32_115 = arith.constant 4 : i32
    %c1_i32_116 = arith.constant 1 : i32
    %514 = vector.broadcast %c1_i32_116 : i32 to vector<16x128xi32>
    %515 = arith.andi %513, %514 : vector<16x128xi32>
    %516 = arith.sitofp %515 : vector<16x128xi32> to vector<16x128xf32>
    %517 = arith.truncf %516 : vector<16x128xf32> to vector<16x128xbf16>
    %c0_117 = arith.constant 0 : index
    %c0_118 = arith.constant 0 : index
    %518 = vector.load %arg5[%c0_117, %c0_118] : memref<128x128xbf16, #tpu.memory_space<vmem>>, vector<128x128xbf16>
    %cst_119 = arith.constant dense<0.000000e+00> : vector<16x128xf32>
    %519 = tpu.matmul %517, %518, %cst_119 {dimension_numbers = #tpu.dot_dimension_numbers<[1], [0], [0], [1], [0, 0, 1, 1], [], []>} : vector<16x128xbf16>, vector<128x128xbf16>, vector<16x128xf32> -> vector<16x128xf32>
    %520 = arith.fptosi %519 : vector<16x128xf32> to vector<16x128xi32>
    %c1_i32_120 = arith.constant 1 : i32
    %521 = vector.broadcast %c1_i32_120 : i32 to vector<16x128xi32>
    %522 = arith.andi %520, %521 : vector<16x128xi32>
    %c0_i32_121 = arith.constant 0 : i32
    %523 = vector.broadcast %c0_i32_121 : i32 to vector<16x128xi32>
    %524 = arith.cmpi eq, %522, %523 : vector<16x128xi32>
    %525 = vector.shape_cast %0 : vector<16x1xi32> to vector<16x1xi32>
    %526 = vector.broadcast %525 : vector<16x1xi32> to vector<16x128xi32>
    %527 = vector.shape_cast %6 : vector<16x1xi32> to vector<16x1xi32>
    %528 = vector.broadcast %527 : vector<16x1xi32> to vector<16x128xi32>
    %529 = arith.select %524, %526, %528 : vector<16x128xi1>, vector<16x128xi32>
    %c1_i32_122 = arith.constant 1 : i32
    %530 = vector.broadcast %c1_i32_122 : i32 to vector<16x128xi32>
    %531 = arith.andi %529, %530 : vector<16x128xi32>
    %c0_i32_123 = arith.constant 0 : i32
    %532 = vector.broadcast %c0_i32_123 : i32 to vector<16x128xi32>
    %533 = arith.cmpi ne, %531, %532 : vector<16x128xi32>
    %534 = vector.extract_strided_slice %513 {offsets = [0, 1], sizes = [16, 127], strides = [1, 1]} : vector<16x128xi32> to vector<16x127xi32>
    %535 = vector.extract_strided_slice %513 {offsets = [0, 0], sizes = [16, 1], strides = [1, 1]} : vector<16x128xi32> to vector<16x1xi32>
    %536 = tpu.concatenate %534, %535 in 1 : vector<16x127xi32>, vector<16x1xi32> -> vector<16x128xi32>
    %537 = vector.extract_strided_slice %513 {offsets = [0, 113], sizes = [16, 15], strides = [1, 1]} : vector<16x128xi32> to vector<16x15xi32>
    %538 = vector.extract_strided_slice %513 {offsets = [0, 0], sizes = [16, 113], strides = [1, 1]} : vector<16x128xi32> to vector<16x113xi32>
    %539 = tpu.concatenate %537, %538 in 1 : vector<16x15xi32>, vector<16x113xi32> -> vector<16x128xi32>
    %540 = vector.shape_cast %19 : vector<1x128xi1> to vector<1x128xi1>
    %541 = vector.broadcast %540 : vector<1x128xi1> to vector<16x128xi1>
    %542 = arith.select %541, %536, %539 : vector<16x128xi1>, vector<16x128xi32>
    %543 = arith.select %533, %542, %513 : vector<16x128xi1>, vector<16x128xi32>
    %c2_i32_124 = arith.constant 2 : i32
    %544 = vector.broadcast %c2_i32_124 : i32 to vector<16x128xi32>
    %545 = arith.andi %529, %544 : vector<16x128xi32>
    %c0_i32_125 = arith.constant 0 : i32
    %546 = vector.broadcast %c0_i32_125 : i32 to vector<16x128xi32>
    %547 = arith.cmpi ne, %545, %546 : vector<16x128xi32>
    %548 = vector.extract_strided_slice %543 {offsets = [0, 2], sizes = [16, 126], strides = [1, 1]} : vector<16x128xi32> to vector<16x126xi32>
    %549 = vector.extract_strided_slice %543 {offsets = [0, 0], sizes = [16, 2], strides = [1, 1]} : vector<16x128xi32> to vector<16x2xi32>
    %550 = tpu.concatenate %548, %549 in 1 : vector<16x126xi32>, vector<16x2xi32> -> vector<16x128xi32>
    %551 = vector.extract_strided_slice %543 {offsets = [0, 114], sizes = [16, 14], strides = [1, 1]} : vector<16x128xi32> to vector<16x14xi32>
    %552 = vector.extract_strided_slice %543 {offsets = [0, 0], sizes = [16, 114], strides = [1, 1]} : vector<16x128xi32> to vector<16x114xi32>
    %553 = tpu.concatenate %551, %552 in 1 : vector<16x14xi32>, vector<16x114xi32> -> vector<16x128xi32>
    %554 = vector.shape_cast %21 : vector<1x128xi1> to vector<1x128xi1>
    %555 = vector.broadcast %554 : vector<1x128xi1> to vector<16x128xi1>
    %556 = arith.select %555, %550, %553 : vector<16x128xi1>, vector<16x128xi32>
    %557 = arith.select %547, %556, %543 : vector<16x128xi1>, vector<16x128xi32>
    %c4_i32_126 = arith.constant 4 : i32
    %558 = vector.broadcast %c4_i32_126 : i32 to vector<16x128xi32>
    %559 = arith.andi %529, %558 : vector<16x128xi32>
    %c0_i32_127 = arith.constant 0 : i32
    %560 = vector.broadcast %c0_i32_127 : i32 to vector<16x128xi32>
    %561 = arith.cmpi ne, %559, %560 : vector<16x128xi32>
    %562 = vector.extract_strided_slice %557 {offsets = [0, 4], sizes = [16, 124], strides = [1, 1]} : vector<16x128xi32> to vector<16x124xi32>
    %563 = vector.extract_strided_slice %557 {offsets = [0, 0], sizes = [16, 4], strides = [1, 1]} : vector<16x128xi32> to vector<16x4xi32>
    %564 = tpu.concatenate %562, %563 in 1 : vector<16x124xi32>, vector<16x4xi32> -> vector<16x128xi32>
    %565 = vector.extract_strided_slice %557 {offsets = [0, 116], sizes = [16, 12], strides = [1, 1]} : vector<16x128xi32> to vector<16x12xi32>
    %566 = vector.extract_strided_slice %557 {offsets = [0, 0], sizes = [16, 116], strides = [1, 1]} : vector<16x128xi32> to vector<16x116xi32>
    %567 = tpu.concatenate %565, %566 in 1 : vector<16x12xi32>, vector<16x116xi32> -> vector<16x128xi32>
    %568 = vector.shape_cast %23 : vector<1x128xi1> to vector<1x128xi1>
    %569 = vector.broadcast %568 : vector<1x128xi1> to vector<16x128xi1>
    %570 = arith.select %569, %564, %567 : vector<16x128xi1>, vector<16x128xi32>
    %571 = arith.select %561, %570, %557 : vector<16x128xi1>, vector<16x128xi32>
    %c8_i32_128 = arith.constant 8 : i32
    %572 = vector.broadcast %c8_i32_128 : i32 to vector<16x128xi32>
    %573 = arith.andi %529, %572 : vector<16x128xi32>
    %c0_i32_129 = arith.constant 0 : i32
    %574 = vector.broadcast %c0_i32_129 : i32 to vector<16x128xi32>
    %575 = arith.cmpi ne, %573, %574 : vector<16x128xi32>
    %576 = vector.extract_strided_slice %571 {offsets = [0, 8], sizes = [16, 120], strides = [1, 1]} : vector<16x128xi32> to vector<16x120xi32>
    %577 = vector.extract_strided_slice %571 {offsets = [0, 0], sizes = [16, 8], strides = [1, 1]} : vector<16x128xi32> to vector<16x8xi32>
    %578 = tpu.concatenate %576, %577 in 1 : vector<16x120xi32>, vector<16x8xi32> -> vector<16x128xi32>
    %579 = vector.extract_strided_slice %571 {offsets = [0, 120], sizes = [16, 8], strides = [1, 1]} : vector<16x128xi32> to vector<16x8xi32>
    %580 = vector.extract_strided_slice %571 {offsets = [0, 0], sizes = [16, 120], strides = [1, 1]} : vector<16x128xi32> to vector<16x120xi32>
    %581 = tpu.concatenate %579, %580 in 1 : vector<16x8xi32>, vector<16x120xi32> -> vector<16x128xi32>
    %582 = vector.shape_cast %25 : vector<1x128xi1> to vector<1x128xi1>
    %583 = vector.broadcast %582 : vector<1x128xi1> to vector<16x128xi1>
    %584 = arith.select %583, %578, %581 : vector<16x128xi1>, vector<16x128xi32>
    %585 = arith.select %575, %584, %571 : vector<16x128xi1>, vector<16x128xi32>
    %cst_130 = arith.constant dense<0> : vector<128xi32>
    %586 = vector.multi_reduction <add>, %585, %cst_130 [0] : vector<16x128xi32> to vector<128xi32>
    %587 = vector.shape_cast %586 : vector<128xi32> to vector<1x128xi32>
    %c1_i32_131 = arith.constant 1 : i32
    %588 = vector.broadcast %c1_i32_131 : i32 to vector<1x128xi32>
    %589 = arith.andi %587, %588 : vector<1x128xi32>
    %c1_i32_132 = arith.constant 1 : i32
    %590 = vector.broadcast %c1_i32_132 : i32 to vector<1x128xi32>
    %591 = arith.cmpi eq, %589, %590 : vector<1x128xi32>
    %592 = arith.select %591, %7, %13 : vector<1x128xi1>, vector<1x128xi32>
    %c1_i32_133 = arith.constant 1 : i32
    %593 = vector.broadcast %c1_i32_133 : i32 to vector<1x128xi32>
    %594 = arith.andi %592, %593 : vector<1x128xi32>
    %c0_i32_134 = arith.constant 0 : i32
    %595 = vector.broadcast %c0_i32_134 : i32 to vector<1x128xi32>
    %596 = arith.cmpi ne, %594, %595 : vector<1x128xi32>
    %597 = vector.extract_strided_slice %585 {offsets = [1, 0], sizes = [15, 128], strides = [1, 1]} : vector<16x128xi32> to vector<15x128xi32>
    %598 = vector.extract_strided_slice %585 {offsets = [0, 0], sizes = [1, 128], strides = [1, 1]} : vector<16x128xi32> to vector<1x128xi32>
    %599 = tpu.concatenate %597, %598 in 0 : vector<15x128xi32>, vector<1x128xi32> -> vector<16x128xi32>
    %600 = vector.shape_cast %596 : vector<1x128xi1> to vector<1x128xi1>
    %601 = vector.broadcast %600 : vector<1x128xi1> to vector<16x128xi1>
    %602 = arith.select %601, %599, %585 : vector<16x128xi1>, vector<16x128xi32>
    %c2_i32_135 = arith.constant 2 : i32
    %603 = vector.broadcast %c2_i32_135 : i32 to vector<1x128xi32>
    %604 = arith.andi %592, %603 : vector<1x128xi32>
    %c0_i32_136 = arith.constant 0 : i32
    %605 = vector.broadcast %c0_i32_136 : i32 to vector<1x128xi32>
    %606 = arith.cmpi ne, %604, %605 : vector<1x128xi32>
    %607 = vector.extract_strided_slice %602 {offsets = [2, 0], sizes = [14, 128], strides = [1, 1]} : vector<16x128xi32> to vector<14x128xi32>
    %608 = vector.extract_strided_slice %602 {offsets = [0, 0], sizes = [2, 128], strides = [1, 1]} : vector<16x128xi32> to vector<2x128xi32>
    %609 = tpu.concatenate %607, %608 in 0 : vector<14x128xi32>, vector<2x128xi32> -> vector<16x128xi32>
    %610 = vector.shape_cast %606 : vector<1x128xi1> to vector<1x128xi1>
    %611 = vector.broadcast %610 : vector<1x128xi1> to vector<16x128xi1>
    %612 = arith.select %611, %609, %602 : vector<16x128xi1>, vector<16x128xi32>
    %c4_i32_137 = arith.constant 4 : i32
    %613 = vector.broadcast %c4_i32_137 : i32 to vector<1x128xi32>
    %614 = arith.andi %592, %613 : vector<1x128xi32>
    %c0_i32_138 = arith.constant 0 : i32
    %615 = vector.broadcast %c0_i32_138 : i32 to vector<1x128xi32>
    %616 = arith.cmpi ne, %614, %615 : vector<1x128xi32>
    %617 = vector.extract_strided_slice %612 {offsets = [4, 0], sizes = [12, 128], strides = [1, 1]} : vector<16x128xi32> to vector<12x128xi32>
    %618 = vector.extract_strided_slice %612 {offsets = [0, 0], sizes = [4, 128], strides = [1, 1]} : vector<16x128xi32> to vector<4x128xi32>
    %619 = tpu.concatenate %617, %618 in 0 : vector<12x128xi32>, vector<4x128xi32> -> vector<16x128xi32>
    %620 = vector.shape_cast %616 : vector<1x128xi1> to vector<1x128xi1>
    %621 = vector.broadcast %620 : vector<1x128xi1> to vector<16x128xi1>
    %622 = arith.select %621, %619, %612 : vector<16x128xi1>, vector<16x128xi32>
    %c8_i32_139 = arith.constant 8 : i32
    %623 = vector.broadcast %c8_i32_139 : i32 to vector<1x128xi32>
    %624 = arith.andi %592, %623 : vector<1x128xi32>
    %c0_i32_140 = arith.constant 0 : i32
    %625 = vector.broadcast %c0_i32_140 : i32 to vector<1x128xi32>
    %626 = arith.cmpi ne, %624, %625 : vector<1x128xi32>
    %627 = vector.extract_strided_slice %622 {offsets = [8, 0], sizes = [8, 128], strides = [1, 1]} : vector<16x128xi32> to vector<8x128xi32>
    %628 = vector.extract_strided_slice %622 {offsets = [0, 0], sizes = [8, 128], strides = [1, 1]} : vector<16x128xi32> to vector<8x128xi32>
    %629 = tpu.concatenate %627, %628 in 0 : vector<8x128xi32>, vector<8x128xi32> -> vector<16x128xi32>
    %630 = vector.shape_cast %626 : vector<1x128xi1> to vector<1x128xi1>
    %631 = vector.broadcast %630 : vector<1x128xi1> to vector<16x128xi1>
    %632 = arith.select %631, %629, %622 : vector<16x128xi1>, vector<16x128xi32>
    %633 = arith.xori %632, %14 : vector<16x128xi32>
    %c5_i32 = arith.constant 5 : i32
    %c1_i32_141 = arith.constant 1 : i32
    %634 = vector.broadcast %c1_i32_141 : i32 to vector<16x128xi32>
    %635 = arith.andi %633, %634 : vector<16x128xi32>
    %636 = arith.sitofp %635 : vector<16x128xi32> to vector<16x128xf32>
    %637 = arith.truncf %636 : vector<16x128xf32> to vector<16x128xbf16>
    %c0_142 = arith.constant 0 : index
    %c0_143 = arith.constant 0 : index
    %638 = vector.load %arg5[%c0_142, %c0_143] : memref<128x128xbf16, #tpu.memory_space<vmem>>, vector<128x128xbf16>
    %cst_144 = arith.constant dense<0.000000e+00> : vector<16x128xf32>
    %639 = tpu.matmul %637, %638, %cst_144 {dimension_numbers = #tpu.dot_dimension_numbers<[1], [0], [0], [1], [0, 0, 1, 1], [], []>} : vector<16x128xbf16>, vector<128x128xbf16>, vector<16x128xf32> -> vector<16x128xf32>
    %640 = arith.fptosi %639 : vector<16x128xf32> to vector<16x128xi32>
    %c1_i32_145 = arith.constant 1 : i32
    %641 = vector.broadcast %c1_i32_145 : i32 to vector<16x128xi32>
    %642 = arith.andi %640, %641 : vector<16x128xi32>
    %c0_i32_146 = arith.constant 0 : i32
    %643 = vector.broadcast %c0_i32_146 : i32 to vector<16x128xi32>
    %644 = arith.cmpi eq, %642, %643 : vector<16x128xi32>
    %645 = vector.shape_cast %0 : vector<16x1xi32> to vector<16x1xi32>
    %646 = vector.broadcast %645 : vector<16x1xi32> to vector<16x128xi32>
    %647 = vector.shape_cast %6 : vector<16x1xi32> to vector<16x1xi32>
    %648 = vector.broadcast %647 : vector<16x1xi32> to vector<16x128xi32>
    %649 = arith.select %644, %646, %648 : vector<16x128xi1>, vector<16x128xi32>
    %c1_i32_147 = arith.constant 1 : i32
    %650 = vector.broadcast %c1_i32_147 : i32 to vector<16x128xi32>
    %651 = arith.andi %649, %650 : vector<16x128xi32>
    %c0_i32_148 = arith.constant 0 : i32
    %652 = vector.broadcast %c0_i32_148 : i32 to vector<16x128xi32>
    %653 = arith.cmpi ne, %651, %652 : vector<16x128xi32>
    %654 = vector.extract_strided_slice %633 {offsets = [0, 1], sizes = [16, 127], strides = [1, 1]} : vector<16x128xi32> to vector<16x127xi32>
    %655 = vector.extract_strided_slice %633 {offsets = [0, 0], sizes = [16, 1], strides = [1, 1]} : vector<16x128xi32> to vector<16x1xi32>
    %656 = tpu.concatenate %654, %655 in 1 : vector<16x127xi32>, vector<16x1xi32> -> vector<16x128xi32>
    %657 = vector.extract_strided_slice %633 {offsets = [0, 113], sizes = [16, 15], strides = [1, 1]} : vector<16x128xi32> to vector<16x15xi32>
    %658 = vector.extract_strided_slice %633 {offsets = [0, 0], sizes = [16, 113], strides = [1, 1]} : vector<16x128xi32> to vector<16x113xi32>
    %659 = tpu.concatenate %657, %658 in 1 : vector<16x15xi32>, vector<16x113xi32> -> vector<16x128xi32>
    %660 = vector.shape_cast %19 : vector<1x128xi1> to vector<1x128xi1>
    %661 = vector.broadcast %660 : vector<1x128xi1> to vector<16x128xi1>
    %662 = arith.select %661, %656, %659 : vector<16x128xi1>, vector<16x128xi32>
    %663 = arith.select %653, %662, %633 : vector<16x128xi1>, vector<16x128xi32>
    %c2_i32_149 = arith.constant 2 : i32
    %664 = vector.broadcast %c2_i32_149 : i32 to vector<16x128xi32>
    %665 = arith.andi %649, %664 : vector<16x128xi32>
    %c0_i32_150 = arith.constant 0 : i32
    %666 = vector.broadcast %c0_i32_150 : i32 to vector<16x128xi32>
    %667 = arith.cmpi ne, %665, %666 : vector<16x128xi32>
    %668 = vector.extract_strided_slice %663 {offsets = [0, 2], sizes = [16, 126], strides = [1, 1]} : vector<16x128xi32> to vector<16x126xi32>
    %669 = vector.extract_strided_slice %663 {offsets = [0, 0], sizes = [16, 2], strides = [1, 1]} : vector<16x128xi32> to vector<16x2xi32>
    %670 = tpu.concatenate %668, %669 in 1 : vector<16x126xi32>, vector<16x2xi32> -> vector<16x128xi32>
    %671 = vector.extract_strided_slice %663 {offsets = [0, 114], sizes = [16, 14], strides = [1, 1]} : vector<16x128xi32> to vector<16x14xi32>
    %672 = vector.extract_strided_slice %663 {offsets = [0, 0], sizes = [16, 114], strides = [1, 1]} : vector<16x128xi32> to vector<16x114xi32>
    %673 = tpu.concatenate %671, %672 in 1 : vector<16x14xi32>, vector<16x114xi32> -> vector<16x128xi32>
    %674 = vector.shape_cast %21 : vector<1x128xi1> to vector<1x128xi1>
    %675 = vector.broadcast %674 : vector<1x128xi1> to vector<16x128xi1>
    %676 = arith.select %675, %670, %673 : vector<16x128xi1>, vector<16x128xi32>
    %677 = arith.select %667, %676, %663 : vector<16x128xi1>, vector<16x128xi32>
    %c4_i32_151 = arith.constant 4 : i32
    %678 = vector.broadcast %c4_i32_151 : i32 to vector<16x128xi32>
    %679 = arith.andi %649, %678 : vector<16x128xi32>
    %c0_i32_152 = arith.constant 0 : i32
    %680 = vector.broadcast %c0_i32_152 : i32 to vector<16x128xi32>
    %681 = arith.cmpi ne, %679, %680 : vector<16x128xi32>
    %682 = vector.extract_strided_slice %677 {offsets = [0, 4], sizes = [16, 124], strides = [1, 1]} : vector<16x128xi32> to vector<16x124xi32>
    %683 = vector.extract_strided_slice %677 {offsets = [0, 0], sizes = [16, 4], strides = [1, 1]} : vector<16x128xi32> to vector<16x4xi32>
    %684 = tpu.concatenate %682, %683 in 1 : vector<16x124xi32>, vector<16x4xi32> -> vector<16x128xi32>
    %685 = vector.extract_strided_slice %677 {offsets = [0, 116], sizes = [16, 12], strides = [1, 1]} : vector<16x128xi32> to vector<16x12xi32>
    %686 = vector.extract_strided_slice %677 {offsets = [0, 0], sizes = [16, 116], strides = [1, 1]} : vector<16x128xi32> to vector<16x116xi32>
    %687 = tpu.concatenate %685, %686 in 1 : vector<16x12xi32>, vector<16x116xi32> -> vector<16x128xi32>
    %688 = vector.shape_cast %23 : vector<1x128xi1> to vector<1x128xi1>
    %689 = vector.broadcast %688 : vector<1x128xi1> to vector<16x128xi1>
    %690 = arith.select %689, %684, %687 : vector<16x128xi1>, vector<16x128xi32>
    %691 = arith.select %681, %690, %677 : vector<16x128xi1>, vector<16x128xi32>
    %c8_i32_153 = arith.constant 8 : i32
    %692 = vector.broadcast %c8_i32_153 : i32 to vector<16x128xi32>
    %693 = arith.andi %649, %692 : vector<16x128xi32>
    %c0_i32_154 = arith.constant 0 : i32
    %694 = vector.broadcast %c0_i32_154 : i32 to vector<16x128xi32>
    %695 = arith.cmpi ne, %693, %694 : vector<16x128xi32>
    %696 = vector.extract_strided_slice %691 {offsets = [0, 8], sizes = [16, 120], strides = [1, 1]} : vector<16x128xi32> to vector<16x120xi32>
    %697 = vector.extract_strided_slice %691 {offsets = [0, 0], sizes = [16, 8], strides = [1, 1]} : vector<16x128xi32> to vector<16x8xi32>
    %698 = tpu.concatenate %696, %697 in 1 : vector<16x120xi32>, vector<16x8xi32> -> vector<16x128xi32>
    %699 = vector.extract_strided_slice %691 {offsets = [0, 120], sizes = [16, 8], strides = [1, 1]} : vector<16x128xi32> to vector<16x8xi32>
    %700 = vector.extract_strided_slice %691 {offsets = [0, 0], sizes = [16, 120], strides = [1, 1]} : vector<16x128xi32> to vector<16x120xi32>
    %701 = tpu.concatenate %699, %700 in 1 : vector<16x8xi32>, vector<16x120xi32> -> vector<16x128xi32>
    %702 = vector.shape_cast %25 : vector<1x128xi1> to vector<1x128xi1>
    %703 = vector.broadcast %702 : vector<1x128xi1> to vector<16x128xi1>
    %704 = arith.select %703, %698, %701 : vector<16x128xi1>, vector<16x128xi32>
    %705 = arith.select %695, %704, %691 : vector<16x128xi1>, vector<16x128xi32>
    %cst_155 = arith.constant dense<0> : vector<128xi32>
    %706 = vector.multi_reduction <add>, %705, %cst_155 [0] : vector<16x128xi32> to vector<128xi32>
    %707 = vector.shape_cast %706 : vector<128xi32> to vector<1x128xi32>
    %c1_i32_156 = arith.constant 1 : i32
    %708 = vector.broadcast %c1_i32_156 : i32 to vector<1x128xi32>
    %709 = arith.andi %707, %708 : vector<1x128xi32>
    %c1_i32_157 = arith.constant 1 : i32
    %710 = vector.broadcast %c1_i32_157 : i32 to vector<1x128xi32>
    %711 = arith.cmpi eq, %709, %710 : vector<1x128xi32>
    %712 = arith.select %711, %7, %13 : vector<1x128xi1>, vector<1x128xi32>
    %c1_i32_158 = arith.constant 1 : i32
    %713 = vector.broadcast %c1_i32_158 : i32 to vector<1x128xi32>
    %714 = arith.andi %712, %713 : vector<1x128xi32>
    %c0_i32_159 = arith.constant 0 : i32
    %715 = vector.broadcast %c0_i32_159 : i32 to vector<1x128xi32>
    %716 = arith.cmpi ne, %714, %715 : vector<1x128xi32>
    %717 = vector.extract_strided_slice %705 {offsets = [1, 0], sizes = [15, 128], strides = [1, 1]} : vector<16x128xi32> to vector<15x128xi32>
    %718 = vector.extract_strided_slice %705 {offsets = [0, 0], sizes = [1, 128], strides = [1, 1]} : vector<16x128xi32> to vector<1x128xi32>
    %719 = tpu.concatenate %717, %718 in 0 : vector<15x128xi32>, vector<1x128xi32> -> vector<16x128xi32>
    %720 = vector.shape_cast %716 : vector<1x128xi1> to vector<1x128xi1>
    %721 = vector.broadcast %720 : vector<1x128xi1> to vector<16x128xi1>
    %722 = arith.select %721, %719, %705 : vector<16x128xi1>, vector<16x128xi32>
    %c2_i32_160 = arith.constant 2 : i32
    %723 = vector.broadcast %c2_i32_160 : i32 to vector<1x128xi32>
    %724 = arith.andi %712, %723 : vector<1x128xi32>
    %c0_i32_161 = arith.constant 0 : i32
    %725 = vector.broadcast %c0_i32_161 : i32 to vector<1x128xi32>
    %726 = arith.cmpi ne, %724, %725 : vector<1x128xi32>
    %727 = vector.extract_strided_slice %722 {offsets = [2, 0], sizes = [14, 128], strides = [1, 1]} : vector<16x128xi32> to vector<14x128xi32>
    %728 = vector.extract_strided_slice %722 {offsets = [0, 0], sizes = [2, 128], strides = [1, 1]} : vector<16x128xi32> to vector<2x128xi32>
    %729 = tpu.concatenate %727, %728 in 0 : vector<14x128xi32>, vector<2x128xi32> -> vector<16x128xi32>
    %730 = vector.shape_cast %726 : vector<1x128xi1> to vector<1x128xi1>
    %731 = vector.broadcast %730 : vector<1x128xi1> to vector<16x128xi1>
    %732 = arith.select %731, %729, %722 : vector<16x128xi1>, vector<16x128xi32>
    %c4_i32_162 = arith.constant 4 : i32
    %733 = vector.broadcast %c4_i32_162 : i32 to vector<1x128xi32>
    %734 = arith.andi %712, %733 : vector<1x128xi32>
    %c0_i32_163 = arith.constant 0 : i32
    %735 = vector.broadcast %c0_i32_163 : i32 to vector<1x128xi32>
    %736 = arith.cmpi ne, %734, %735 : vector<1x128xi32>
    %737 = vector.extract_strided_slice %732 {offsets = [4, 0], sizes = [12, 128], strides = [1, 1]} : vector<16x128xi32> to vector<12x128xi32>
    %738 = vector.extract_strided_slice %732 {offsets = [0, 0], sizes = [4, 128], strides = [1, 1]} : vector<16x128xi32> to vector<4x128xi32>
    %739 = tpu.concatenate %737, %738 in 0 : vector<12x128xi32>, vector<4x128xi32> -> vector<16x128xi32>
    %740 = vector.shape_cast %736 : vector<1x128xi1> to vector<1x128xi1>
    %741 = vector.broadcast %740 : vector<1x128xi1> to vector<16x128xi1>
    %742 = arith.select %741, %739, %732 : vector<16x128xi1>, vector<16x128xi32>
    %c8_i32_164 = arith.constant 8 : i32
    %743 = vector.broadcast %c8_i32_164 : i32 to vector<1x128xi32>
    %744 = arith.andi %712, %743 : vector<1x128xi32>
    %c0_i32_165 = arith.constant 0 : i32
    %745 = vector.broadcast %c0_i32_165 : i32 to vector<1x128xi32>
    %746 = arith.cmpi ne, %744, %745 : vector<1x128xi32>
    %747 = vector.extract_strided_slice %742 {offsets = [8, 0], sizes = [8, 128], strides = [1, 1]} : vector<16x128xi32> to vector<8x128xi32>
    %748 = vector.extract_strided_slice %742 {offsets = [0, 0], sizes = [8, 128], strides = [1, 1]} : vector<16x128xi32> to vector<8x128xi32>
    %749 = tpu.concatenate %747, %748 in 0 : vector<8x128xi32>, vector<8x128xi32> -> vector<16x128xi32>
    %750 = vector.shape_cast %746 : vector<1x128xi1> to vector<1x128xi1>
    %751 = vector.broadcast %750 : vector<1x128xi1> to vector<16x128xi1>
    %752 = arith.select %751, %749, %742 : vector<16x128xi1>, vector<16x128xi32>
    %753 = arith.xori %752, %14 : vector<16x128xi32>
    %c6_i32 = arith.constant 6 : i32
    %c1_i32_166 = arith.constant 1 : i32
    %754 = vector.broadcast %c1_i32_166 : i32 to vector<16x128xi32>
    %755 = arith.andi %753, %754 : vector<16x128xi32>
    %756 = arith.sitofp %755 : vector<16x128xi32> to vector<16x128xf32>
    %757 = arith.truncf %756 : vector<16x128xf32> to vector<16x128xbf16>
    %c0_167 = arith.constant 0 : index
    %c0_168 = arith.constant 0 : index
    %758 = vector.load %arg5[%c0_167, %c0_168] : memref<128x128xbf16, #tpu.memory_space<vmem>>, vector<128x128xbf16>
    %cst_169 = arith.constant dense<0.000000e+00> : vector<16x128xf32>
    %759 = tpu.matmul %757, %758, %cst_169 {dimension_numbers = #tpu.dot_dimension_numbers<[1], [0], [0], [1], [0, 0, 1, 1], [], []>} : vector<16x128xbf16>, vector<128x128xbf16>, vector<16x128xf32> -> vector<16x128xf32>
    %760 = arith.fptosi %759 : vector<16x128xf32> to vector<16x128xi32>
    %c1_i32_170 = arith.constant 1 : i32
    %761 = vector.broadcast %c1_i32_170 : i32 to vector<16x128xi32>
    %762 = arith.andi %760, %761 : vector<16x128xi32>
    %c0_i32_171 = arith.constant 0 : i32
    %763 = vector.broadcast %c0_i32_171 : i32 to vector<16x128xi32>
    %764 = arith.cmpi eq, %762, %763 : vector<16x128xi32>
    %765 = vector.shape_cast %0 : vector<16x1xi32> to vector<16x1xi32>
    %766 = vector.broadcast %765 : vector<16x1xi32> to vector<16x128xi32>
    %767 = vector.shape_cast %6 : vector<16x1xi32> to vector<16x1xi32>
    %768 = vector.broadcast %767 : vector<16x1xi32> to vector<16x128xi32>
    %769 = arith.select %764, %766, %768 : vector<16x128xi1>, vector<16x128xi32>
    %c1_i32_172 = arith.constant 1 : i32
    %770 = vector.broadcast %c1_i32_172 : i32 to vector<16x128xi32>
    %771 = arith.andi %769, %770 : vector<16x128xi32>
    %c0_i32_173 = arith.constant 0 : i32
    %772 = vector.broadcast %c0_i32_173 : i32 to vector<16x128xi32>
    %773 = arith.cmpi ne, %771, %772 : vector<16x128xi32>
    %774 = vector.extract_strided_slice %753 {offsets = [0, 1], sizes = [16, 127], strides = [1, 1]} : vector<16x128xi32> to vector<16x127xi32>
    %775 = vector.extract_strided_slice %753 {offsets = [0, 0], sizes = [16, 1], strides = [1, 1]} : vector<16x128xi32> to vector<16x1xi32>
    %776 = tpu.concatenate %774, %775 in 1 : vector<16x127xi32>, vector<16x1xi32> -> vector<16x128xi32>
    %777 = vector.extract_strided_slice %753 {offsets = [0, 113], sizes = [16, 15], strides = [1, 1]} : vector<16x128xi32> to vector<16x15xi32>
    %778 = vector.extract_strided_slice %753 {offsets = [0, 0], sizes = [16, 113], strides = [1, 1]} : vector<16x128xi32> to vector<16x113xi32>
    %779 = tpu.concatenate %777, %778 in 1 : vector<16x15xi32>, vector<16x113xi32> -> vector<16x128xi32>
    %780 = vector.shape_cast %19 : vector<1x128xi1> to vector<1x128xi1>
    %781 = vector.broadcast %780 : vector<1x128xi1> to vector<16x128xi1>
    %782 = arith.select %781, %776, %779 : vector<16x128xi1>, vector<16x128xi32>
    %783 = arith.select %773, %782, %753 : vector<16x128xi1>, vector<16x128xi32>
    %c2_i32_174 = arith.constant 2 : i32
    %784 = vector.broadcast %c2_i32_174 : i32 to vector<16x128xi32>
    %785 = arith.andi %769, %784 : vector<16x128xi32>
    %c0_i32_175 = arith.constant 0 : i32
    %786 = vector.broadcast %c0_i32_175 : i32 to vector<16x128xi32>
    %787 = arith.cmpi ne, %785, %786 : vector<16x128xi32>
    %788 = vector.extract_strided_slice %783 {offsets = [0, 2], sizes = [16, 126], strides = [1, 1]} : vector<16x128xi32> to vector<16x126xi32>
    %789 = vector.extract_strided_slice %783 {offsets = [0, 0], sizes = [16, 2], strides = [1, 1]} : vector<16x128xi32> to vector<16x2xi32>
    %790 = tpu.concatenate %788, %789 in 1 : vector<16x126xi32>, vector<16x2xi32> -> vector<16x128xi32>
    %791 = vector.extract_strided_slice %783 {offsets = [0, 114], sizes = [16, 14], strides = [1, 1]} : vector<16x128xi32> to vector<16x14xi32>
    %792 = vector.extract_strided_slice %783 {offsets = [0, 0], sizes = [16, 114], strides = [1, 1]} : vector<16x128xi32> to vector<16x114xi32>
    %793 = tpu.concatenate %791, %792 in 1 : vector<16x14xi32>, vector<16x114xi32> -> vector<16x128xi32>
    %794 = vector.shape_cast %21 : vector<1x128xi1> to vector<1x128xi1>
    %795 = vector.broadcast %794 : vector<1x128xi1> to vector<16x128xi1>
    %796 = arith.select %795, %790, %793 : vector<16x128xi1>, vector<16x128xi32>
    %797 = arith.select %787, %796, %783 : vector<16x128xi1>, vector<16x128xi32>
    %c4_i32_176 = arith.constant 4 : i32
    %798 = vector.broadcast %c4_i32_176 : i32 to vector<16x128xi32>
    %799 = arith.andi %769, %798 : vector<16x128xi32>
    %c0_i32_177 = arith.constant 0 : i32
    %800 = vector.broadcast %c0_i32_177 : i32 to vector<16x128xi32>
    %801 = arith.cmpi ne, %799, %800 : vector<16x128xi32>
    %802 = vector.extract_strided_slice %797 {offsets = [0, 4], sizes = [16, 124], strides = [1, 1]} : vector<16x128xi32> to vector<16x124xi32>
    %803 = vector.extract_strided_slice %797 {offsets = [0, 0], sizes = [16, 4], strides = [1, 1]} : vector<16x128xi32> to vector<16x4xi32>
    %804 = tpu.concatenate %802, %803 in 1 : vector<16x124xi32>, vector<16x4xi32> -> vector<16x128xi32>
    %805 = vector.extract_strided_slice %797 {offsets = [0, 116], sizes = [16, 12], strides = [1, 1]} : vector<16x128xi32> to vector<16x12xi32>
    %806 = vector.extract_strided_slice %797 {offsets = [0, 0], sizes = [16, 116], strides = [1, 1]} : vector<16x128xi32> to vector<16x116xi32>
    %807 = tpu.concatenate %805, %806 in 1 : vector<16x12xi32>, vector<16x116xi32> -> vector<16x128xi32>
    %808 = vector.shape_cast %23 : vector<1x128xi1> to vector<1x128xi1>
    %809 = vector.broadcast %808 : vector<1x128xi1> to vector<16x128xi1>
    %810 = arith.select %809, %804, %807 : vector<16x128xi1>, vector<16x128xi32>
    %811 = arith.select %801, %810, %797 : vector<16x128xi1>, vector<16x128xi32>
    %c8_i32_178 = arith.constant 8 : i32
    %812 = vector.broadcast %c8_i32_178 : i32 to vector<16x128xi32>
    %813 = arith.andi %769, %812 : vector<16x128xi32>
    %c0_i32_179 = arith.constant 0 : i32
    %814 = vector.broadcast %c0_i32_179 : i32 to vector<16x128xi32>
    %815 = arith.cmpi ne, %813, %814 : vector<16x128xi32>
    %816 = vector.extract_strided_slice %811 {offsets = [0, 8], sizes = [16, 120], strides = [1, 1]} : vector<16x128xi32> to vector<16x120xi32>
    %817 = vector.extract_strided_slice %811 {offsets = [0, 0], sizes = [16, 8], strides = [1, 1]} : vector<16x128xi32> to vector<16x8xi32>
    %818 = tpu.concatenate %816, %817 in 1 : vector<16x120xi32>, vector<16x8xi32> -> vector<16x128xi32>
    %819 = vector.extract_strided_slice %811 {offsets = [0, 120], sizes = [16, 8], strides = [1, 1]} : vector<16x128xi32> to vector<16x8xi32>
    %820 = vector.extract_strided_slice %811 {offsets = [0, 0], sizes = [16, 120], strides = [1, 1]} : vector<16x128xi32> to vector<16x120xi32>
    %821 = tpu.concatenate %819, %820 in 1 : vector<16x8xi32>, vector<16x120xi32> -> vector<16x128xi32>
    %822 = vector.shape_cast %25 : vector<1x128xi1> to vector<1x128xi1>
    %823 = vector.broadcast %822 : vector<1x128xi1> to vector<16x128xi1>
    %824 = arith.select %823, %818, %821 : vector<16x128xi1>, vector<16x128xi32>
    %825 = arith.select %815, %824, %811 : vector<16x128xi1>, vector<16x128xi32>
    %cst_180 = arith.constant dense<0> : vector<128xi32>
    %826 = vector.multi_reduction <add>, %825, %cst_180 [0] : vector<16x128xi32> to vector<128xi32>
    %827 = vector.shape_cast %826 : vector<128xi32> to vector<1x128xi32>
    %c1_i32_181 = arith.constant 1 : i32
    %828 = vector.broadcast %c1_i32_181 : i32 to vector<1x128xi32>
    %829 = arith.andi %827, %828 : vector<1x128xi32>
    %c1_i32_182 = arith.constant 1 : i32
    %830 = vector.broadcast %c1_i32_182 : i32 to vector<1x128xi32>
    %831 = arith.cmpi eq, %829, %830 : vector<1x128xi32>
    %832 = arith.select %831, %7, %13 : vector<1x128xi1>, vector<1x128xi32>
    %c1_i32_183 = arith.constant 1 : i32
    %833 = vector.broadcast %c1_i32_183 : i32 to vector<1x128xi32>
    %834 = arith.andi %832, %833 : vector<1x128xi32>
    %c0_i32_184 = arith.constant 0 : i32
    %835 = vector.broadcast %c0_i32_184 : i32 to vector<1x128xi32>
    %836 = arith.cmpi ne, %834, %835 : vector<1x128xi32>
    %837 = vector.extract_strided_slice %825 {offsets = [1, 0], sizes = [15, 128], strides = [1, 1]} : vector<16x128xi32> to vector<15x128xi32>
    %838 = vector.extract_strided_slice %825 {offsets = [0, 0], sizes = [1, 128], strides = [1, 1]} : vector<16x128xi32> to vector<1x128xi32>
    %839 = tpu.concatenate %837, %838 in 0 : vector<15x128xi32>, vector<1x128xi32> -> vector<16x128xi32>
    %840 = vector.shape_cast %836 : vector<1x128xi1> to vector<1x128xi1>
    %841 = vector.broadcast %840 : vector<1x128xi1> to vector<16x128xi1>
    %842 = arith.select %841, %839, %825 : vector<16x128xi1>, vector<16x128xi32>
    %c2_i32_185 = arith.constant 2 : i32
    %843 = vector.broadcast %c2_i32_185 : i32 to vector<1x128xi32>
    %844 = arith.andi %832, %843 : vector<1x128xi32>
    %c0_i32_186 = arith.constant 0 : i32
    %845 = vector.broadcast %c0_i32_186 : i32 to vector<1x128xi32>
    %846 = arith.cmpi ne, %844, %845 : vector<1x128xi32>
    %847 = vector.extract_strided_slice %842 {offsets = [2, 0], sizes = [14, 128], strides = [1, 1]} : vector<16x128xi32> to vector<14x128xi32>
    %848 = vector.extract_strided_slice %842 {offsets = [0, 0], sizes = [2, 128], strides = [1, 1]} : vector<16x128xi32> to vector<2x128xi32>
    %849 = tpu.concatenate %847, %848 in 0 : vector<14x128xi32>, vector<2x128xi32> -> vector<16x128xi32>
    %850 = vector.shape_cast %846 : vector<1x128xi1> to vector<1x128xi1>
    %851 = vector.broadcast %850 : vector<1x128xi1> to vector<16x128xi1>
    %852 = arith.select %851, %849, %842 : vector<16x128xi1>, vector<16x128xi32>
    %c4_i32_187 = arith.constant 4 : i32
    %853 = vector.broadcast %c4_i32_187 : i32 to vector<1x128xi32>
    %854 = arith.andi %832, %853 : vector<1x128xi32>
    %c0_i32_188 = arith.constant 0 : i32
    %855 = vector.broadcast %c0_i32_188 : i32 to vector<1x128xi32>
    %856 = arith.cmpi ne, %854, %855 : vector<1x128xi32>
    %857 = vector.extract_strided_slice %852 {offsets = [4, 0], sizes = [12, 128], strides = [1, 1]} : vector<16x128xi32> to vector<12x128xi32>
    %858 = vector.extract_strided_slice %852 {offsets = [0, 0], sizes = [4, 128], strides = [1, 1]} : vector<16x128xi32> to vector<4x128xi32>
    %859 = tpu.concatenate %857, %858 in 0 : vector<12x128xi32>, vector<4x128xi32> -> vector<16x128xi32>
    %860 = vector.shape_cast %856 : vector<1x128xi1> to vector<1x128xi1>
    %861 = vector.broadcast %860 : vector<1x128xi1> to vector<16x128xi1>
    %862 = arith.select %861, %859, %852 : vector<16x128xi1>, vector<16x128xi32>
    %c8_i32_189 = arith.constant 8 : i32
    %863 = vector.broadcast %c8_i32_189 : i32 to vector<1x128xi32>
    %864 = arith.andi %832, %863 : vector<1x128xi32>
    %c0_i32_190 = arith.constant 0 : i32
    %865 = vector.broadcast %c0_i32_190 : i32 to vector<1x128xi32>
    %866 = arith.cmpi ne, %864, %865 : vector<1x128xi32>
    %867 = vector.extract_strided_slice %862 {offsets = [8, 0], sizes = [8, 128], strides = [1, 1]} : vector<16x128xi32> to vector<8x128xi32>
    %868 = vector.extract_strided_slice %862 {offsets = [0, 0], sizes = [8, 128], strides = [1, 1]} : vector<16x128xi32> to vector<8x128xi32>
    %869 = tpu.concatenate %867, %868 in 0 : vector<8x128xi32>, vector<8x128xi32> -> vector<16x128xi32>
    %870 = vector.shape_cast %866 : vector<1x128xi1> to vector<1x128xi1>
    %871 = vector.broadcast %870 : vector<1x128xi1> to vector<16x128xi1>
    %872 = arith.select %871, %869, %862 : vector<16x128xi1>, vector<16x128xi32>
    %873 = arith.xori %872, %14 : vector<16x128xi32>
    %c7_i32 = arith.constant 7 : i32
    %c1_i32_191 = arith.constant 1 : i32
    %874 = vector.broadcast %c1_i32_191 : i32 to vector<16x128xi32>
    %875 = arith.andi %873, %874 : vector<16x128xi32>
    %876 = arith.sitofp %875 : vector<16x128xi32> to vector<16x128xf32>
    %877 = arith.truncf %876 : vector<16x128xf32> to vector<16x128xbf16>
    %c0_192 = arith.constant 0 : index
    %c0_193 = arith.constant 0 : index
    %878 = vector.load %arg5[%c0_192, %c0_193] : memref<128x128xbf16, #tpu.memory_space<vmem>>, vector<128x128xbf16>
    %cst_194 = arith.constant dense<0.000000e+00> : vector<16x128xf32>
    %879 = tpu.matmul %877, %878, %cst_194 {dimension_numbers = #tpu.dot_dimension_numbers<[1], [0], [0], [1], [0, 0, 1, 1], [], []>} : vector<16x128xbf16>, vector<128x128xbf16>, vector<16x128xf32> -> vector<16x128xf32>
    %880 = arith.fptosi %879 : vector<16x128xf32> to vector<16x128xi32>
    %c1_i32_195 = arith.constant 1 : i32
    %881 = vector.broadcast %c1_i32_195 : i32 to vector<16x128xi32>
    %882 = arith.andi %880, %881 : vector<16x128xi32>
    %c0_i32_196 = arith.constant 0 : i32
    %883 = vector.broadcast %c0_i32_196 : i32 to vector<16x128xi32>
    %884 = arith.cmpi eq, %882, %883 : vector<16x128xi32>
    %885 = vector.shape_cast %0 : vector<16x1xi32> to vector<16x1xi32>
    %886 = vector.broadcast %885 : vector<16x1xi32> to vector<16x128xi32>
    %887 = vector.shape_cast %6 : vector<16x1xi32> to vector<16x1xi32>
    %888 = vector.broadcast %887 : vector<16x1xi32> to vector<16x128xi32>
    %889 = arith.select %884, %886, %888 : vector<16x128xi1>, vector<16x128xi32>
    %c1_i32_197 = arith.constant 1 : i32
    %890 = vector.broadcast %c1_i32_197 : i32 to vector<16x128xi32>
    %891 = arith.andi %889, %890 : vector<16x128xi32>
    %c0_i32_198 = arith.constant 0 : i32
    %892 = vector.broadcast %c0_i32_198 : i32 to vector<16x128xi32>
    %893 = arith.cmpi ne, %891, %892 : vector<16x128xi32>
    %894 = vector.extract_strided_slice %873 {offsets = [0, 1], sizes = [16, 127], strides = [1, 1]} : vector<16x128xi32> to vector<16x127xi32>
    %895 = vector.extract_strided_slice %873 {offsets = [0, 0], sizes = [16, 1], strides = [1, 1]} : vector<16x128xi32> to vector<16x1xi32>
    %896 = tpu.concatenate %894, %895 in 1 : vector<16x127xi32>, vector<16x1xi32> -> vector<16x128xi32>
    %897 = vector.extract_strided_slice %873 {offsets = [0, 113], sizes = [16, 15], strides = [1, 1]} : vector<16x128xi32> to vector<16x15xi32>
    %898 = vector.extract_strided_slice %873 {offsets = [0, 0], sizes = [16, 113], strides = [1, 1]} : vector<16x128xi32> to vector<16x113xi32>
    %899 = tpu.concatenate %897, %898 in 1 : vector<16x15xi32>, vector<16x113xi32> -> vector<16x128xi32>
    %900 = vector.shape_cast %19 : vector<1x128xi1> to vector<1x128xi1>
    %901 = vector.broadcast %900 : vector<1x128xi1> to vector<16x128xi1>
    %902 = arith.select %901, %896, %899 : vector<16x128xi1>, vector<16x128xi32>
    %903 = arith.select %893, %902, %873 : vector<16x128xi1>, vector<16x128xi32>
    %c2_i32_199 = arith.constant 2 : i32
    %904 = vector.broadcast %c2_i32_199 : i32 to vector<16x128xi32>
    %905 = arith.andi %889, %904 : vector<16x128xi32>
    %c0_i32_200 = arith.constant 0 : i32
    %906 = vector.broadcast %c0_i32_200 : i32 to vector<16x128xi32>
    %907 = arith.cmpi ne, %905, %906 : vector<16x128xi32>
    %908 = vector.extract_strided_slice %903 {offsets = [0, 2], sizes = [16, 126], strides = [1, 1]} : vector<16x128xi32> to vector<16x126xi32>
    %909 = vector.extract_strided_slice %903 {offsets = [0, 0], sizes = [16, 2], strides = [1, 1]} : vector<16x128xi32> to vector<16x2xi32>
    %910 = tpu.concatenate %908, %909 in 1 : vector<16x126xi32>, vector<16x2xi32> -> vector<16x128xi32>
    %911 = vector.extract_strided_slice %903 {offsets = [0, 114], sizes = [16, 14], strides = [1, 1]} : vector<16x128xi32> to vector<16x14xi32>
    %912 = vector.extract_strided_slice %903 {offsets = [0, 0], sizes = [16, 114], strides = [1, 1]} : vector<16x128xi32> to vector<16x114xi32>
    %913 = tpu.concatenate %911, %912 in 1 : vector<16x14xi32>, vector<16x114xi32> -> vector<16x128xi32>
    %914 = vector.shape_cast %21 : vector<1x128xi1> to vector<1x128xi1>
    %915 = vector.broadcast %914 : vector<1x128xi1> to vector<16x128xi1>
    %916 = arith.select %915, %910, %913 : vector<16x128xi1>, vector<16x128xi32>
    %917 = arith.select %907, %916, %903 : vector<16x128xi1>, vector<16x128xi32>
    %c4_i32_201 = arith.constant 4 : i32
    %918 = vector.broadcast %c4_i32_201 : i32 to vector<16x128xi32>
    %919 = arith.andi %889, %918 : vector<16x128xi32>
    %c0_i32_202 = arith.constant 0 : i32
    %920 = vector.broadcast %c0_i32_202 : i32 to vector<16x128xi32>
    %921 = arith.cmpi ne, %919, %920 : vector<16x128xi32>
    %922 = vector.extract_strided_slice %917 {offsets = [0, 4], sizes = [16, 124], strides = [1, 1]} : vector<16x128xi32> to vector<16x124xi32>
    %923 = vector.extract_strided_slice %917 {offsets = [0, 0], sizes = [16, 4], strides = [1, 1]} : vector<16x128xi32> to vector<16x4xi32>
    %924 = tpu.concatenate %922, %923 in 1 : vector<16x124xi32>, vector<16x4xi32> -> vector<16x128xi32>
    %925 = vector.extract_strided_slice %917 {offsets = [0, 116], sizes = [16, 12], strides = [1, 1]} : vector<16x128xi32> to vector<16x12xi32>
    %926 = vector.extract_strided_slice %917 {offsets = [0, 0], sizes = [16, 116], strides = [1, 1]} : vector<16x128xi32> to vector<16x116xi32>
    %927 = tpu.concatenate %925, %926 in 1 : vector<16x12xi32>, vector<16x116xi32> -> vector<16x128xi32>
    %928 = vector.shape_cast %23 : vector<1x128xi1> to vector<1x128xi1>
    %929 = vector.broadcast %928 : vector<1x128xi1> to vector<16x128xi1>
    %930 = arith.select %929, %924, %927 : vector<16x128xi1>, vector<16x128xi32>
    %931 = arith.select %921, %930, %917 : vector<16x128xi1>, vector<16x128xi32>
    %c8_i32_203 = arith.constant 8 : i32
    %932 = vector.broadcast %c8_i32_203 : i32 to vector<16x128xi32>
    %933 = arith.andi %889, %932 : vector<16x128xi32>
    %c0_i32_204 = arith.constant 0 : i32
    %934 = vector.broadcast %c0_i32_204 : i32 to vector<16x128xi32>
    %935 = arith.cmpi ne, %933, %934 : vector<16x128xi32>
    %936 = vector.extract_strided_slice %931 {offsets = [0, 8], sizes = [16, 120], strides = [1, 1]} : vector<16x128xi32> to vector<16x120xi32>
    %937 = vector.extract_strided_slice %931 {offsets = [0, 0], sizes = [16, 8], strides = [1, 1]} : vector<16x128xi32> to vector<16x8xi32>
    %938 = tpu.concatenate %936, %937 in 1 : vector<16x120xi32>, vector<16x8xi32> -> vector<16x128xi32>
    %939 = vector.extract_strided_slice %931 {offsets = [0, 120], sizes = [16, 8], strides = [1, 1]} : vector<16x128xi32> to vector<16x8xi32>
    %940 = vector.extract_strided_slice %931 {offsets = [0, 0], sizes = [16, 120], strides = [1, 1]} : vector<16x128xi32> to vector<16x120xi32>
    %941 = tpu.concatenate %939, %940 in 1 : vector<16x8xi32>, vector<16x120xi32> -> vector<16x128xi32>
    %942 = vector.shape_cast %25 : vector<1x128xi1> to vector<1x128xi1>
    %943 = vector.broadcast %942 : vector<1x128xi1> to vector<16x128xi1>
    %944 = arith.select %943, %938, %941 : vector<16x128xi1>, vector<16x128xi32>
    %945 = arith.select %935, %944, %931 : vector<16x128xi1>, vector<16x128xi32>
    %cst_205 = arith.constant dense<0> : vector<128xi32>
    %946 = vector.multi_reduction <add>, %945, %cst_205 [0] : vector<16x128xi32> to vector<128xi32>
    %947 = vector.shape_cast %946 : vector<128xi32> to vector<1x128xi32>
    %c1_i32_206 = arith.constant 1 : i32
    %948 = vector.broadcast %c1_i32_206 : i32 to vector<1x128xi32>
    %949 = arith.andi %947, %948 : vector<1x128xi32>
    %c1_i32_207 = arith.constant 1 : i32
    %950 = vector.broadcast %c1_i32_207 : i32 to vector<1x128xi32>
    %951 = arith.cmpi eq, %949, %950 : vector<1x128xi32>
    %952 = arith.select %951, %7, %13 : vector<1x128xi1>, vector<1x128xi32>
    %c1_i32_208 = arith.constant 1 : i32
    %953 = vector.broadcast %c1_i32_208 : i32 to vector<1x128xi32>
    %954 = arith.andi %952, %953 : vector<1x128xi32>
    %c0_i32_209 = arith.constant 0 : i32
    %955 = vector.broadcast %c0_i32_209 : i32 to vector<1x128xi32>
    %956 = arith.cmpi ne, %954, %955 : vector<1x128xi32>
    %957 = vector.extract_strided_slice %945 {offsets = [1, 0], sizes = [15, 128], strides = [1, 1]} : vector<16x128xi32> to vector<15x128xi32>
    %958 = vector.extract_strided_slice %945 {offsets = [0, 0], sizes = [1, 128], strides = [1, 1]} : vector<16x128xi32> to vector<1x128xi32>
    %959 = tpu.concatenate %957, %958 in 0 : vector<15x128xi32>, vector<1x128xi32> -> vector<16x128xi32>
    %960 = vector.shape_cast %956 : vector<1x128xi1> to vector<1x128xi1>
    %961 = vector.broadcast %960 : vector<1x128xi1> to vector<16x128xi1>
    %962 = arith.select %961, %959, %945 : vector<16x128xi1>, vector<16x128xi32>
    %c2_i32_210 = arith.constant 2 : i32
    %963 = vector.broadcast %c2_i32_210 : i32 to vector<1x128xi32>
    %964 = arith.andi %952, %963 : vector<1x128xi32>
    %c0_i32_211 = arith.constant 0 : i32
    %965 = vector.broadcast %c0_i32_211 : i32 to vector<1x128xi32>
    %966 = arith.cmpi ne, %964, %965 : vector<1x128xi32>
    %967 = vector.extract_strided_slice %962 {offsets = [2, 0], sizes = [14, 128], strides = [1, 1]} : vector<16x128xi32> to vector<14x128xi32>
    %968 = vector.extract_strided_slice %962 {offsets = [0, 0], sizes = [2, 128], strides = [1, 1]} : vector<16x128xi32> to vector<2x128xi32>
    %969 = tpu.concatenate %967, %968 in 0 : vector<14x128xi32>, vector<2x128xi32> -> vector<16x128xi32>
    %970 = vector.shape_cast %966 : vector<1x128xi1> to vector<1x128xi1>
    %971 = vector.broadcast %970 : vector<1x128xi1> to vector<16x128xi1>
    %972 = arith.select %971, %969, %962 : vector<16x128xi1>, vector<16x128xi32>
    %c4_i32_212 = arith.constant 4 : i32
    %973 = vector.broadcast %c4_i32_212 : i32 to vector<1x128xi32>
    %974 = arith.andi %952, %973 : vector<1x128xi32>
    %c0_i32_213 = arith.constant 0 : i32
    %975 = vector.broadcast %c0_i32_213 : i32 to vector<1x128xi32>
    %976 = arith.cmpi ne, %974, %975 : vector<1x128xi32>
    %977 = vector.extract_strided_slice %972 {offsets = [4, 0], sizes = [12, 128], strides = [1, 1]} : vector<16x128xi32> to vector<12x128xi32>
    %978 = vector.extract_strided_slice %972 {offsets = [0, 0], sizes = [4, 128], strides = [1, 1]} : vector<16x128xi32> to vector<4x128xi32>
    %979 = tpu.concatenate %977, %978 in 0 : vector<12x128xi32>, vector<4x128xi32> -> vector<16x128xi32>
    %980 = vector.shape_cast %976 : vector<1x128xi1> to vector<1x128xi1>
    %981 = vector.broadcast %980 : vector<1x128xi1> to vector<16x128xi1>
    %982 = arith.select %981, %979, %972 : vector<16x128xi1>, vector<16x128xi32>
    %c8_i32_214 = arith.constant 8 : i32
    %983 = vector.broadcast %c8_i32_214 : i32 to vector<1x128xi32>
    %984 = arith.andi %952, %983 : vector<1x128xi32>
    %c0_i32_215 = arith.constant 0 : i32
    %985 = vector.broadcast %c0_i32_215 : i32 to vector<1x128xi32>
    %986 = arith.cmpi ne, %984, %985 : vector<1x128xi32>
    %987 = vector.extract_strided_slice %982 {offsets = [8, 0], sizes = [8, 128], strides = [1, 1]} : vector<16x128xi32> to vector<8x128xi32>
    %988 = vector.extract_strided_slice %982 {offsets = [0, 0], sizes = [8, 128], strides = [1, 1]} : vector<16x128xi32> to vector<8x128xi32>
    %989 = tpu.concatenate %987, %988 in 0 : vector<8x128xi32>, vector<8x128xi32> -> vector<16x128xi32>
    %990 = vector.shape_cast %986 : vector<1x128xi1> to vector<1x128xi1>
    %991 = vector.broadcast %990 : vector<1x128xi1> to vector<16x128xi1>
    %992 = arith.select %991, %989, %982 : vector<16x128xi1>, vector<16x128xi32>
    %993 = arith.xori %992, %14 : vector<16x128xi32>
    %c8_i32_216 = arith.constant 8 : i32
    %c1_i32_217 = arith.constant 1 : i32
    %994 = vector.broadcast %c1_i32_217 : i32 to vector<16x128xi32>
    %995 = arith.andi %993, %994 : vector<16x128xi32>
    %996 = arith.sitofp %995 : vector<16x128xi32> to vector<16x128xf32>
    %997 = arith.truncf %996 : vector<16x128xf32> to vector<16x128xbf16>
    %c0_218 = arith.constant 0 : index
    %c0_219 = arith.constant 0 : index
    %998 = vector.load %arg5[%c0_218, %c0_219] : memref<128x128xbf16, #tpu.memory_space<vmem>>, vector<128x128xbf16>
    %cst_220 = arith.constant dense<0.000000e+00> : vector<16x128xf32>
    %999 = tpu.matmul %997, %998, %cst_220 {dimension_numbers = #tpu.dot_dimension_numbers<[1], [0], [0], [1], [0, 0, 1, 1], [], []>} : vector<16x128xbf16>, vector<128x128xbf16>, vector<16x128xf32> -> vector<16x128xf32>
    %1000 = arith.fptosi %999 : vector<16x128xf32> to vector<16x128xi32>
    %c1_i32_221 = arith.constant 1 : i32
    %1001 = vector.broadcast %c1_i32_221 : i32 to vector<16x128xi32>
    %1002 = arith.andi %1000, %1001 : vector<16x128xi32>
    %c0_i32_222 = arith.constant 0 : i32
    %1003 = vector.broadcast %c0_i32_222 : i32 to vector<16x128xi32>
    %1004 = arith.cmpi eq, %1002, %1003 : vector<16x128xi32>
    %1005 = vector.shape_cast %0 : vector<16x1xi32> to vector<16x1xi32>
    %1006 = vector.broadcast %1005 : vector<16x1xi32> to vector<16x128xi32>
    %1007 = vector.shape_cast %6 : vector<16x1xi32> to vector<16x1xi32>
    %1008 = vector.broadcast %1007 : vector<16x1xi32> to vector<16x128xi32>
    %1009 = arith.select %1004, %1006, %1008 : vector<16x128xi1>, vector<16x128xi32>
    %c1_i32_223 = arith.constant 1 : i32
    %1010 = vector.broadcast %c1_i32_223 : i32 to vector<16x128xi32>
    %1011 = arith.andi %1009, %1010 : vector<16x128xi32>
    %c0_i32_224 = arith.constant 0 : i32
    %1012 = vector.broadcast %c0_i32_224 : i32 to vector<16x128xi32>
    %1013 = arith.cmpi ne, %1011, %1012 : vector<16x128xi32>
    %1014 = vector.extract_strided_slice %993 {offsets = [0, 1], sizes = [16, 127], strides = [1, 1]} : vector<16x128xi32> to vector<16x127xi32>
    %1015 = vector.extract_strided_slice %993 {offsets = [0, 0], sizes = [16, 1], strides = [1, 1]} : vector<16x128xi32> to vector<16x1xi32>
    %1016 = tpu.concatenate %1014, %1015 in 1 : vector<16x127xi32>, vector<16x1xi32> -> vector<16x128xi32>
    %1017 = vector.extract_strided_slice %993 {offsets = [0, 113], sizes = [16, 15], strides = [1, 1]} : vector<16x128xi32> to vector<16x15xi32>
    %1018 = vector.extract_strided_slice %993 {offsets = [0, 0], sizes = [16, 113], strides = [1, 1]} : vector<16x128xi32> to vector<16x113xi32>
    %1019 = tpu.concatenate %1017, %1018 in 1 : vector<16x15xi32>, vector<16x113xi32> -> vector<16x128xi32>
    %1020 = vector.shape_cast %19 : vector<1x128xi1> to vector<1x128xi1>
    %1021 = vector.broadcast %1020 : vector<1x128xi1> to vector<16x128xi1>
    %1022 = arith.select %1021, %1016, %1019 : vector<16x128xi1>, vector<16x128xi32>
    %1023 = arith.select %1013, %1022, %993 : vector<16x128xi1>, vector<16x128xi32>
    %c2_i32_225 = arith.constant 2 : i32
    %1024 = vector.broadcast %c2_i32_225 : i32 to vector<16x128xi32>
    %1025 = arith.andi %1009, %1024 : vector<16x128xi32>
    %c0_i32_226 = arith.constant 0 : i32
    %1026 = vector.broadcast %c0_i32_226 : i32 to vector<16x128xi32>
    %1027 = arith.cmpi ne, %1025, %1026 : vector<16x128xi32>
    %1028 = vector.extract_strided_slice %1023 {offsets = [0, 2], sizes = [16, 126], strides = [1, 1]} : vector<16x128xi32> to vector<16x126xi32>
    %1029 = vector.extract_strided_slice %1023 {offsets = [0, 0], sizes = [16, 2], strides = [1, 1]} : vector<16x128xi32> to vector<16x2xi32>
    %1030 = tpu.concatenate %1028, %1029 in 1 : vector<16x126xi32>, vector<16x2xi32> -> vector<16x128xi32>
    %1031 = vector.extract_strided_slice %1023 {offsets = [0, 114], sizes = [16, 14], strides = [1, 1]} : vector<16x128xi32> to vector<16x14xi32>
    %1032 = vector.extract_strided_slice %1023 {offsets = [0, 0], sizes = [16, 114], strides = [1, 1]} : vector<16x128xi32> to vector<16x114xi32>
    %1033 = tpu.concatenate %1031, %1032 in 1 : vector<16x14xi32>, vector<16x114xi32> -> vector<16x128xi32>
    %1034 = vector.shape_cast %21 : vector<1x128xi1> to vector<1x128xi1>
    %1035 = vector.broadcast %1034 : vector<1x128xi1> to vector<16x128xi1>
    %1036 = arith.select %1035, %1030, %1033 : vector<16x128xi1>, vector<16x128xi32>
    %1037 = arith.select %1027, %1036, %1023 : vector<16x128xi1>, vector<16x128xi32>
    %c4_i32_227 = arith.constant 4 : i32
    %1038 = vector.broadcast %c4_i32_227 : i32 to vector<16x128xi32>
    %1039 = arith.andi %1009, %1038 : vector<16x128xi32>
    %c0_i32_228 = arith.constant 0 : i32
    %1040 = vector.broadcast %c0_i32_228 : i32 to vector<16x128xi32>
    %1041 = arith.cmpi ne, %1039, %1040 : vector<16x128xi32>
    %1042 = vector.extract_strided_slice %1037 {offsets = [0, 4], sizes = [16, 124], strides = [1, 1]} : vector<16x128xi32> to vector<16x124xi32>
    %1043 = vector.extract_strided_slice %1037 {offsets = [0, 0], sizes = [16, 4], strides = [1, 1]} : vector<16x128xi32> to vector<16x4xi32>
    %1044 = tpu.concatenate %1042, %1043 in 1 : vector<16x124xi32>, vector<16x4xi32> -> vector<16x128xi32>
    %1045 = vector.extract_strided_slice %1037 {offsets = [0, 116], sizes = [16, 12], strides = [1, 1]} : vector<16x128xi32> to vector<16x12xi32>
    %1046 = vector.extract_strided_slice %1037 {offsets = [0, 0], sizes = [16, 116], strides = [1, 1]} : vector<16x128xi32> to vector<16x116xi32>
    %1047 = tpu.concatenate %1045, %1046 in 1 : vector<16x12xi32>, vector<16x116xi32> -> vector<16x128xi32>
    %1048 = vector.shape_cast %23 : vector<1x128xi1> to vector<1x128xi1>
    %1049 = vector.broadcast %1048 : vector<1x128xi1> to vector<16x128xi1>
    %1050 = arith.select %1049, %1044, %1047 : vector<16x128xi1>, vector<16x128xi32>
    %1051 = arith.select %1041, %1050, %1037 : vector<16x128xi1>, vector<16x128xi32>
    %c8_i32_229 = arith.constant 8 : i32
    %1052 = vector.broadcast %c8_i32_229 : i32 to vector<16x128xi32>
    %1053 = arith.andi %1009, %1052 : vector<16x128xi32>
    %c0_i32_230 = arith.constant 0 : i32
    %1054 = vector.broadcast %c0_i32_230 : i32 to vector<16x128xi32>
    %1055 = arith.cmpi ne, %1053, %1054 : vector<16x128xi32>
    %1056 = vector.extract_strided_slice %1051 {offsets = [0, 8], sizes = [16, 120], strides = [1, 1]} : vector<16x128xi32> to vector<16x120xi32>
    %1057 = vector.extract_strided_slice %1051 {offsets = [0, 0], sizes = [16, 8], strides = [1, 1]} : vector<16x128xi32> to vector<16x8xi32>
    %1058 = tpu.concatenate %1056, %1057 in 1 : vector<16x120xi32>, vector<16x8xi32> -> vector<16x128xi32>
    %1059 = vector.extract_strided_slice %1051 {offsets = [0, 120], sizes = [16, 8], strides = [1, 1]} : vector<16x128xi32> to vector<16x8xi32>
    %1060 = vector.extract_strided_slice %1051 {offsets = [0, 0], sizes = [16, 120], strides = [1, 1]} : vector<16x128xi32> to vector<16x120xi32>
    %1061 = tpu.concatenate %1059, %1060 in 1 : vector<16x8xi32>, vector<16x120xi32> -> vector<16x128xi32>
    %1062 = vector.shape_cast %25 : vector<1x128xi1> to vector<1x128xi1>
    %1063 = vector.broadcast %1062 : vector<1x128xi1> to vector<16x128xi1>
    %1064 = arith.select %1063, %1058, %1061 : vector<16x128xi1>, vector<16x128xi32>
    %1065 = arith.select %1055, %1064, %1051 : vector<16x128xi1>, vector<16x128xi32>
    %cst_231 = arith.constant dense<0> : vector<128xi32>
    %1066 = vector.multi_reduction <add>, %1065, %cst_231 [0] : vector<16x128xi32> to vector<128xi32>
    %1067 = vector.shape_cast %1066 : vector<128xi32> to vector<1x128xi32>
    %c1_i32_232 = arith.constant 1 : i32
    %1068 = vector.broadcast %c1_i32_232 : i32 to vector<1x128xi32>
    %1069 = arith.andi %1067, %1068 : vector<1x128xi32>
    %c1_i32_233 = arith.constant 1 : i32
    %1070 = vector.broadcast %c1_i32_233 : i32 to vector<1x128xi32>
    %1071 = arith.cmpi eq, %1069, %1070 : vector<1x128xi32>
    %1072 = arith.select %1071, %7, %13 : vector<1x128xi1>, vector<1x128xi32>
    %c1_i32_234 = arith.constant 1 : i32
    %1073 = vector.broadcast %c1_i32_234 : i32 to vector<1x128xi32>
    %1074 = arith.andi %1072, %1073 : vector<1x128xi32>
    %c0_i32_235 = arith.constant 0 : i32
    %1075 = vector.broadcast %c0_i32_235 : i32 to vector<1x128xi32>
    %1076 = arith.cmpi ne, %1074, %1075 : vector<1x128xi32>
    %1077 = vector.extract_strided_slice %1065 {offsets = [1, 0], sizes = [15, 128], strides = [1, 1]} : vector<16x128xi32> to vector<15x128xi32>
    %1078 = vector.extract_strided_slice %1065 {offsets = [0, 0], sizes = [1, 128], strides = [1, 1]} : vector<16x128xi32> to vector<1x128xi32>
    %1079 = tpu.concatenate %1077, %1078 in 0 : vector<15x128xi32>, vector<1x128xi32> -> vector<16x128xi32>
    %1080 = vector.shape_cast %1076 : vector<1x128xi1> to vector<1x128xi1>
    %1081 = vector.broadcast %1080 : vector<1x128xi1> to vector<16x128xi1>
    %1082 = arith.select %1081, %1079, %1065 : vector<16x128xi1>, vector<16x128xi32>
    %c2_i32_236 = arith.constant 2 : i32
    %1083 = vector.broadcast %c2_i32_236 : i32 to vector<1x128xi32>
    %1084 = arith.andi %1072, %1083 : vector<1x128xi32>
    %c0_i32_237 = arith.constant 0 : i32
    %1085 = vector.broadcast %c0_i32_237 : i32 to vector<1x128xi32>
    %1086 = arith.cmpi ne, %1084, %1085 : vector<1x128xi32>
    %1087 = vector.extract_strided_slice %1082 {offsets = [2, 0], sizes = [14, 128], strides = [1, 1]} : vector<16x128xi32> to vector<14x128xi32>
    %1088 = vector.extract_strided_slice %1082 {offsets = [0, 0], sizes = [2, 128], strides = [1, 1]} : vector<16x128xi32> to vector<2x128xi32>
    %1089 = tpu.concatenate %1087, %1088 in 0 : vector<14x128xi32>, vector<2x128xi32> -> vector<16x128xi32>
    %1090 = vector.shape_cast %1086 : vector<1x128xi1> to vector<1x128xi1>
    %1091 = vector.broadcast %1090 : vector<1x128xi1> to vector<16x128xi1>
    %1092 = arith.select %1091, %1089, %1082 : vector<16x128xi1>, vector<16x128xi32>
    %c4_i32_238 = arith.constant 4 : i32
    %1093 = vector.broadcast %c4_i32_238 : i32 to vector<1x128xi32>
    %1094 = arith.andi %1072, %1093 : vector<1x128xi32>
    %c0_i32_239 = arith.constant 0 : i32
    %1095 = vector.broadcast %c0_i32_239 : i32 to vector<1x128xi32>
    %1096 = arith.cmpi ne, %1094, %1095 : vector<1x128xi32>
    %1097 = vector.extract_strided_slice %1092 {offsets = [4, 0], sizes = [12, 128], strides = [1, 1]} : vector<16x128xi32> to vector<12x128xi32>
    %1098 = vector.extract_strided_slice %1092 {offsets = [0, 0], sizes = [4, 128], strides = [1, 1]} : vector<16x128xi32> to vector<4x128xi32>
    %1099 = tpu.concatenate %1097, %1098 in 0 : vector<12x128xi32>, vector<4x128xi32> -> vector<16x128xi32>
    %1100 = vector.shape_cast %1096 : vector<1x128xi1> to vector<1x128xi1>
    %1101 = vector.broadcast %1100 : vector<1x128xi1> to vector<16x128xi1>
    %1102 = arith.select %1101, %1099, %1092 : vector<16x128xi1>, vector<16x128xi32>
    %c8_i32_240 = arith.constant 8 : i32
    %1103 = vector.broadcast %c8_i32_240 : i32 to vector<1x128xi32>
    %1104 = arith.andi %1072, %1103 : vector<1x128xi32>
    %c0_i32_241 = arith.constant 0 : i32
    %1105 = vector.broadcast %c0_i32_241 : i32 to vector<1x128xi32>
    %1106 = arith.cmpi ne, %1104, %1105 : vector<1x128xi32>
    %1107 = vector.extract_strided_slice %1102 {offsets = [8, 0], sizes = [8, 128], strides = [1, 1]} : vector<16x128xi32> to vector<8x128xi32>
    %1108 = vector.extract_strided_slice %1102 {offsets = [0, 0], sizes = [8, 128], strides = [1, 1]} : vector<16x128xi32> to vector<8x128xi32>
    %1109 = tpu.concatenate %1107, %1108 in 0 : vector<8x128xi32>, vector<8x128xi32> -> vector<16x128xi32>
    %1110 = vector.shape_cast %1106 : vector<1x128xi1> to vector<1x128xi1>
    %1111 = vector.broadcast %1110 : vector<1x128xi1> to vector<16x128xi1>
    %1112 = arith.select %1111, %1109, %1102 : vector<16x128xi1>, vector<16x128xi32>
    %1113 = arith.xori %1112, %14 : vector<16x128xi32>
    %c9_i32 = arith.constant 9 : i32
    %c1_i32_242 = arith.constant 1 : i32
    %1114 = vector.broadcast %c1_i32_242 : i32 to vector<16x128xi32>
    %1115 = arith.andi %1113, %1114 : vector<16x128xi32>
    %1116 = arith.sitofp %1115 : vector<16x128xi32> to vector<16x128xf32>
    %1117 = arith.truncf %1116 : vector<16x128xf32> to vector<16x128xbf16>
    %c0_243 = arith.constant 0 : index
    %c0_244 = arith.constant 0 : index
    %1118 = vector.load %arg5[%c0_243, %c0_244] : memref<128x128xbf16, #tpu.memory_space<vmem>>, vector<128x128xbf16>
    %cst_245 = arith.constant dense<0.000000e+00> : vector<16x128xf32>
    %1119 = tpu.matmul %1117, %1118, %cst_245 {dimension_numbers = #tpu.dot_dimension_numbers<[1], [0], [0], [1], [0, 0, 1, 1], [], []>} : vector<16x128xbf16>, vector<128x128xbf16>, vector<16x128xf32> -> vector<16x128xf32>
    %1120 = arith.fptosi %1119 : vector<16x128xf32> to vector<16x128xi32>
    %c1_i32_246 = arith.constant 1 : i32
    %1121 = vector.broadcast %c1_i32_246 : i32 to vector<16x128xi32>
    %1122 = arith.andi %1120, %1121 : vector<16x128xi32>
    %c0_i32_247 = arith.constant 0 : i32
    %1123 = vector.broadcast %c0_i32_247 : i32 to vector<16x128xi32>
    %1124 = arith.cmpi eq, %1122, %1123 : vector<16x128xi32>
    %1125 = vector.shape_cast %0 : vector<16x1xi32> to vector<16x1xi32>
    %1126 = vector.broadcast %1125 : vector<16x1xi32> to vector<16x128xi32>
    %1127 = vector.shape_cast %6 : vector<16x1xi32> to vector<16x1xi32>
    %1128 = vector.broadcast %1127 : vector<16x1xi32> to vector<16x128xi32>
    %1129 = arith.select %1124, %1126, %1128 : vector<16x128xi1>, vector<16x128xi32>
    %c1_i32_248 = arith.constant 1 : i32
    %1130 = vector.broadcast %c1_i32_248 : i32 to vector<16x128xi32>
    %1131 = arith.andi %1129, %1130 : vector<16x128xi32>
    %c0_i32_249 = arith.constant 0 : i32
    %1132 = vector.broadcast %c0_i32_249 : i32 to vector<16x128xi32>
    %1133 = arith.cmpi ne, %1131, %1132 : vector<16x128xi32>
    %1134 = vector.extract_strided_slice %1113 {offsets = [0, 1], sizes = [16, 127], strides = [1, 1]} : vector<16x128xi32> to vector<16x127xi32>
    %1135 = vector.extract_strided_slice %1113 {offsets = [0, 0], sizes = [16, 1], strides = [1, 1]} : vector<16x128xi32> to vector<16x1xi32>
    %1136 = tpu.concatenate %1134, %1135 in 1 : vector<16x127xi32>, vector<16x1xi32> -> vector<16x128xi32>
    %1137 = vector.extract_strided_slice %1113 {offsets = [0, 113], sizes = [16, 15], strides = [1, 1]} : vector<16x128xi32> to vector<16x15xi32>
    %1138 = vector.extract_strided_slice %1113 {offsets = [0, 0], sizes = [16, 113], strides = [1, 1]} : vector<16x128xi32> to vector<16x113xi32>
    %1139 = tpu.concatenate %1137, %1138 in 1 : vector<16x15xi32>, vector<16x113xi32> -> vector<16x128xi32>
    %1140 = vector.shape_cast %19 : vector<1x128xi1> to vector<1x128xi1>
    %1141 = vector.broadcast %1140 : vector<1x128xi1> to vector<16x128xi1>
    %1142 = arith.select %1141, %1136, %1139 : vector<16x128xi1>, vector<16x128xi32>
    %1143 = arith.select %1133, %1142, %1113 : vector<16x128xi1>, vector<16x128xi32>
    %c2_i32_250 = arith.constant 2 : i32
    %1144 = vector.broadcast %c2_i32_250 : i32 to vector<16x128xi32>
    %1145 = arith.andi %1129, %1144 : vector<16x128xi32>
    %c0_i32_251 = arith.constant 0 : i32
    %1146 = vector.broadcast %c0_i32_251 : i32 to vector<16x128xi32>
    %1147 = arith.cmpi ne, %1145, %1146 : vector<16x128xi32>
    %1148 = vector.extract_strided_slice %1143 {offsets = [0, 2], sizes = [16, 126], strides = [1, 1]} : vector<16x128xi32> to vector<16x126xi32>
    %1149 = vector.extract_strided_slice %1143 {offsets = [0, 0], sizes = [16, 2], strides = [1, 1]} : vector<16x128xi32> to vector<16x2xi32>
    %1150 = tpu.concatenate %1148, %1149 in 1 : vector<16x126xi32>, vector<16x2xi32> -> vector<16x128xi32>
    %1151 = vector.extract_strided_slice %1143 {offsets = [0, 114], sizes = [16, 14], strides = [1, 1]} : vector<16x128xi32> to vector<16x14xi32>
    %1152 = vector.extract_strided_slice %1143 {offsets = [0, 0], sizes = [16, 114], strides = [1, 1]} : vector<16x128xi32> to vector<16x114xi32>
    %1153 = tpu.concatenate %1151, %1152 in 1 : vector<16x14xi32>, vector<16x114xi32> -> vector<16x128xi32>
    %1154 = vector.shape_cast %21 : vector<1x128xi1> to vector<1x128xi1>
    %1155 = vector.broadcast %1154 : vector<1x128xi1> to vector<16x128xi1>
    %1156 = arith.select %1155, %1150, %1153 : vector<16x128xi1>, vector<16x128xi32>
    %1157 = arith.select %1147, %1156, %1143 : vector<16x128xi1>, vector<16x128xi32>
    %c4_i32_252 = arith.constant 4 : i32
    %1158 = vector.broadcast %c4_i32_252 : i32 to vector<16x128xi32>
    %1159 = arith.andi %1129, %1158 : vector<16x128xi32>
    %c0_i32_253 = arith.constant 0 : i32
    %1160 = vector.broadcast %c0_i32_253 : i32 to vector<16x128xi32>
    %1161 = arith.cmpi ne, %1159, %1160 : vector<16x128xi32>
    %1162 = vector.extract_strided_slice %1157 {offsets = [0, 4], sizes = [16, 124], strides = [1, 1]} : vector<16x128xi32> to vector<16x124xi32>
    %1163 = vector.extract_strided_slice %1157 {offsets = [0, 0], sizes = [16, 4], strides = [1, 1]} : vector<16x128xi32> to vector<16x4xi32>
    %1164 = tpu.concatenate %1162, %1163 in 1 : vector<16x124xi32>, vector<16x4xi32> -> vector<16x128xi32>
    %1165 = vector.extract_strided_slice %1157 {offsets = [0, 116], sizes = [16, 12], strides = [1, 1]} : vector<16x128xi32> to vector<16x12xi32>
    %1166 = vector.extract_strided_slice %1157 {offsets = [0, 0], sizes = [16, 116], strides = [1, 1]} : vector<16x128xi32> to vector<16x116xi32>
    %1167 = tpu.concatenate %1165, %1166 in 1 : vector<16x12xi32>, vector<16x116xi32> -> vector<16x128xi32>
    %1168 = vector.shape_cast %23 : vector<1x128xi1> to vector<1x128xi1>
    %1169 = vector.broadcast %1168 : vector<1x128xi1> to vector<16x128xi1>
    %1170 = arith.select %1169, %1164, %1167 : vector<16x128xi1>, vector<16x128xi32>
    %1171 = arith.select %1161, %1170, %1157 : vector<16x128xi1>, vector<16x128xi32>
    %c8_i32_254 = arith.constant 8 : i32
    %1172 = vector.broadcast %c8_i32_254 : i32 to vector<16x128xi32>
    %1173 = arith.andi %1129, %1172 : vector<16x128xi32>
    %c0_i32_255 = arith.constant 0 : i32
    %1174 = vector.broadcast %c0_i32_255 : i32 to vector<16x128xi32>
    %1175 = arith.cmpi ne, %1173, %1174 : vector<16x128xi32>
    %1176 = vector.extract_strided_slice %1171 {offsets = [0, 8], sizes = [16, 120], strides = [1, 1]} : vector<16x128xi32> to vector<16x120xi32>
    %1177 = vector.extract_strided_slice %1171 {offsets = [0, 0], sizes = [16, 8], strides = [1, 1]} : vector<16x128xi32> to vector<16x8xi32>
    %1178 = tpu.concatenate %1176, %1177 in 1 : vector<16x120xi32>, vector<16x8xi32> -> vector<16x128xi32>
    %1179 = vector.extract_strided_slice %1171 {offsets = [0, 120], sizes = [16, 8], strides = [1, 1]} : vector<16x128xi32> to vector<16x8xi32>
    %1180 = vector.extract_strided_slice %1171 {offsets = [0, 0], sizes = [16, 120], strides = [1, 1]} : vector<16x128xi32> to vector<16x120xi32>
    %1181 = tpu.concatenate %1179, %1180 in 1 : vector<16x8xi32>, vector<16x120xi32> -> vector<16x128xi32>
    %1182 = vector.shape_cast %25 : vector<1x128xi1> to vector<1x128xi1>
    %1183 = vector.broadcast %1182 : vector<1x128xi1> to vector<16x128xi1>
    %1184 = arith.select %1183, %1178, %1181 : vector<16x128xi1>, vector<16x128xi32>
    %1185 = arith.select %1175, %1184, %1171 : vector<16x128xi1>, vector<16x128xi32>
    %cst_256 = arith.constant dense<0> : vector<128xi32>
    %1186 = vector.multi_reduction <add>, %1185, %cst_256 [0] : vector<16x128xi32> to vector<128xi32>
    %1187 = vector.shape_cast %1186 : vector<128xi32> to vector<1x128xi32>
    %c1_i32_257 = arith.constant 1 : i32
    %1188 = vector.broadcast %c1_i32_257 : i32 to vector<1x128xi32>
    %1189 = arith.andi %1187, %1188 : vector<1x128xi32>
    %c1_i32_258 = arith.constant 1 : i32
    %1190 = vector.broadcast %c1_i32_258 : i32 to vector<1x128xi32>
    %1191 = arith.cmpi eq, %1189, %1190 : vector<1x128xi32>
    %1192 = arith.select %1191, %7, %13 : vector<1x128xi1>, vector<1x128xi32>
    %c1_i32_259 = arith.constant 1 : i32
    %1193 = vector.broadcast %c1_i32_259 : i32 to vector<1x128xi32>
    %1194 = arith.andi %1192, %1193 : vector<1x128xi32>
    %c0_i32_260 = arith.constant 0 : i32
    %1195 = vector.broadcast %c0_i32_260 : i32 to vector<1x128xi32>
    %1196 = arith.cmpi ne, %1194, %1195 : vector<1x128xi32>
    %1197 = vector.extract_strided_slice %1185 {offsets = [1, 0], sizes = [15, 128], strides = [1, 1]} : vector<16x128xi32> to vector<15x128xi32>
    %1198 = vector.extract_strided_slice %1185 {offsets = [0, 0], sizes = [1, 128], strides = [1, 1]} : vector<16x128xi32> to vector<1x128xi32>
    %1199 = tpu.concatenate %1197, %1198 in 0 : vector<15x128xi32>, vector<1x128xi32> -> vector<16x128xi32>
    %1200 = vector.shape_cast %1196 : vector<1x128xi1> to vector<1x128xi1>
    %1201 = vector.broadcast %1200 : vector<1x128xi1> to vector<16x128xi1>
    %1202 = arith.select %1201, %1199, %1185 : vector<16x128xi1>, vector<16x128xi32>
    %c2_i32_261 = arith.constant 2 : i32
    %1203 = vector.broadcast %c2_i32_261 : i32 to vector<1x128xi32>
    %1204 = arith.andi %1192, %1203 : vector<1x128xi32>
    %c0_i32_262 = arith.constant 0 : i32
    %1205 = vector.broadcast %c0_i32_262 : i32 to vector<1x128xi32>
    %1206 = arith.cmpi ne, %1204, %1205 : vector<1x128xi32>
    %1207 = vector.extract_strided_slice %1202 {offsets = [2, 0], sizes = [14, 128], strides = [1, 1]} : vector<16x128xi32> to vector<14x128xi32>
    %1208 = vector.extract_strided_slice %1202 {offsets = [0, 0], sizes = [2, 128], strides = [1, 1]} : vector<16x128xi32> to vector<2x128xi32>
    %1209 = tpu.concatenate %1207, %1208 in 0 : vector<14x128xi32>, vector<2x128xi32> -> vector<16x128xi32>
    %1210 = vector.shape_cast %1206 : vector<1x128xi1> to vector<1x128xi1>
    %1211 = vector.broadcast %1210 : vector<1x128xi1> to vector<16x128xi1>
    %1212 = arith.select %1211, %1209, %1202 : vector<16x128xi1>, vector<16x128xi32>
    %c4_i32_263 = arith.constant 4 : i32
    %1213 = vector.broadcast %c4_i32_263 : i32 to vector<1x128xi32>
    %1214 = arith.andi %1192, %1213 : vector<1x128xi32>
    %c0_i32_264 = arith.constant 0 : i32
    %1215 = vector.broadcast %c0_i32_264 : i32 to vector<1x128xi32>
    %1216 = arith.cmpi ne, %1214, %1215 : vector<1x128xi32>
    %1217 = vector.extract_strided_slice %1212 {offsets = [4, 0], sizes = [12, 128], strides = [1, 1]} : vector<16x128xi32> to vector<12x128xi32>
    %1218 = vector.extract_strided_slice %1212 {offsets = [0, 0], sizes = [4, 128], strides = [1, 1]} : vector<16x128xi32> to vector<4x128xi32>
    %1219 = tpu.concatenate %1217, %1218 in 0 : vector<12x128xi32>, vector<4x128xi32> -> vector<16x128xi32>
    %1220 = vector.shape_cast %1216 : vector<1x128xi1> to vector<1x128xi1>
    %1221 = vector.broadcast %1220 : vector<1x128xi1> to vector<16x128xi1>
    %1222 = arith.select %1221, %1219, %1212 : vector<16x128xi1>, vector<16x128xi32>
    %c8_i32_265 = arith.constant 8 : i32
    %1223 = vector.broadcast %c8_i32_265 : i32 to vector<1x128xi32>
    %1224 = arith.andi %1192, %1223 : vector<1x128xi32>
    %c0_i32_266 = arith.constant 0 : i32
    %1225 = vector.broadcast %c0_i32_266 : i32 to vector<1x128xi32>
    %1226 = arith.cmpi ne, %1224, %1225 : vector<1x128xi32>
    %1227 = vector.extract_strided_slice %1222 {offsets = [8, 0], sizes = [8, 128], strides = [1, 1]} : vector<16x128xi32> to vector<8x128xi32>
    %1228 = vector.extract_strided_slice %1222 {offsets = [0, 0], sizes = [8, 128], strides = [1, 1]} : vector<16x128xi32> to vector<8x128xi32>
    %1229 = tpu.concatenate %1227, %1228 in 0 : vector<8x128xi32>, vector<8x128xi32> -> vector<16x128xi32>
    %1230 = vector.shape_cast %1226 : vector<1x128xi1> to vector<1x128xi1>
    %1231 = vector.broadcast %1230 : vector<1x128xi1> to vector<16x128xi1>
    %1232 = arith.select %1231, %1229, %1222 : vector<16x128xi1>, vector<16x128xi32>
    %1233 = arith.xori %1232, %14 : vector<16x128xi32>
    %1234 = arith.sitofp %1233 : vector<16x128xi32> to vector<16x128xf32>
    %cst_267 = arith.constant 0.00392156886 : f32
    %1235 = vector.broadcast %cst_267 : f32 to vector<16x128xf32>
    %1236 = arith.mulf %1234, %1235 : vector<16x128xf32>
    %1237 = arith.index_cast %27 : i32 to index
    %c0_268 = arith.constant 0 : index
    %c0_269 = arith.constant 0 : index
    %1238 = vector.load %arg6[%1237, %c0_268, %c0_269] : memref<1x16x128xf32, #tpu.memory_space<vmem>>, vector<1x16x128xf32>
    %1239 = vector.shape_cast %1238 : vector<1x16x128xf32> to vector<16x128xf32>
    %1240 = vector.shape_cast %1236 : vector<16x128xf32> to vector<1x16x128xf32>
    tpu.vector_store %arg6[%1237, %c0_268, %c0_269], %1240 {strides = array<i32>} : memref<1x16x128xf32, #tpu.memory_space<vmem>>, vector<1x16x128xf32>,
    %c1_i32_270 = arith.constant 1 : i32
    return
  }
  func.func @transform_0(%arg0: i32) -> (i32, i32, i32) {
    %c0_i32 = arith.constant 0 : i32
    %c0_i32_0 = arith.constant 0 : i32
    %c0_i32_1 = arith.constant 0 : i32
    return %arg0, %c0_i32, %c0_i32_0 : i32, i32, i32
  }
  func.func @transform_1(%arg0: i32) -> (i32, i32) {
    %c0_i32 = arith.constant 0 : i32
    %c0_i32_0 = arith.constant 0 : i32
    %c0_i32_1 = arith.constant 0 : i32
    return %c0_i32, %c0_i32_0 : i32, i32
  }
  func.func @transform_2(%arg0: i32) -> (i32, i32) {
    %c0_i32 = arith.constant 0 : i32
    %c0_i32_0 = arith.constant 0 : i32
    %c0_i32_1 = arith.constant 0 : i32
    return %c0_i32, %c0_i32_0 : i32, i32
  }
  func.func @transform_3(%arg0: i32) -> (i32, i32) {
    %c0_i32 = arith.constant 0 : i32
    %c0_i32_0 = arith.constant 0 : i32
    %c0_i32_1 = arith.constant 0 : i32
    return %c0_i32, %c0_i32_0 : i32, i32
  }
  func.func @transform_4(%arg0: i32) -> (i32, i32) {
    %c0_i32 = arith.constant 0 : i32
    %c0_i32_0 = arith.constant 0 : i32
    %c0_i32_1 = arith.constant 0 : i32
    return %c0_i32, %c0_i32_0 : i32, i32
  }
  func.func @transform_5(%arg0: i32) -> (i32, i32, i32) {
    %c0_i32 = arith.constant 0 : i32
    %c0_i32_0 = arith.constant 0 : i32
    %c0_i32_1 = arith.constant 0 : i32
    return %arg0, %c0_i32, %c0_i32_0 : i32, i32, i32
  }
}

</mosaic_0001>

<llo_original>
// kernel: tpu_custom_call.1
$region0: #{tpu_custom_call.1}
  #allocation0 [shape = 'u32[]', space=smem, size = 0x4, offset = 0x4, fixed_abs, tag = 'smem constant byte address 0x4 - core index']
  #allocation1 [shape = 'u32[144,128]{1,0:T(1,128)}', space=vmem, size = 0x12000, scoped, tag = 'internal scratch']
  %s0 = inlined_call_operand.hbm [shape: s32[16,128], index: 0, kind: input, shape index: {}]
  %s1 = inlined_call_operand.hbm [shape: s32[16,128], index: 1, kind: output, shape index: {0}]
  %s2 = inlined_call_operand.hbm [shape: s32[16,128], index: 2, kind: output, shape index: {1}]
  %3 = xla_tuple %s1, %s2
  %s4 = sld [smem:[#allocation0]]
  $region26: #{tpu_custom_call.1} parent=0
    _
  %s6 = ssub.s32 1, %s4
  %s7 = scalar_select 0, %s6, %s4
  $region1: #{tpu_custom_call.1} parent=0
    #allocation2 [shape = 'u8[8192]{0}', space=vmem, size = 0x2000, scoped, tag = 'input window, operand 0, single buffered']
    #allocation3 [shape = 's32[1]{0}', space=sflag, size = 0x4, scoped, tag = 'scoped memory for tpu_custom_call.1']
    #allocation4 [shape = 's32[1]{0}', space=sflag, size = 0x4, scoped, tag = 'scoped memory for tpu_custom_call.1']
    #allocation5 [shape = 'u8[8192]{0}', space=vmem, size = 0x2000, scoped, tag = 'output window, operand 0, single buffered']
    #allocation6 [shape = 'u8[8192]{0}', space=vmem, size = 0x2000, scoped, tag = 'output window, operand 1, single buffered']
    #allocation7 [shape = 's32[1]{0}', space=sflag, size = 0x4, scoped, tag = 'scoped memory for tpu_custom_call.1']
    %8 = vsyncpa [#allocation3], 0
    %9 = vsyncpa [#allocation4], 0
    %10 = vsyncpa [#allocation7], 0
    // Predicated region
    $region2: #{tpu_custom_call.1} parent=1 // pred_check
      _
    $region3: #{tpu_custom_call.1} parent=1 // pred_check_branch
      %12 = sbr.rel (0) target = $region5
    $region4: #{tpu_custom_call.1} parent=1 // pred_region
      %s14 = ssub.s32 256, 256
      %15 = vsyncadd [#allocation3], %s14
      %s16 = sshll.u32 [#allocation2], 4
      %s17 = int_to_ptr.vmem [resolvable:$true] %s16
      %22 = dma.hbm_to_vmem [thread:$0]  %s0, 256, %s17, [#allocation3], 128, 128, 8
    $region5: #{tpu_custom_call.1} parent=1 // pred_fallthru
      _
    // Predicated region
    $region6: #{tpu_custom_call.1} parent=1 // pred_check
      _
    $region7: #{tpu_custom_call.1} parent=1 // pred_check_branch
      %24 = sbr.rel (0) target = $region9
    $region8: #{tpu_custom_call.1} parent=1 // pred_region
      %25 = dma.done [#allocation3], 256
    $region9: #{tpu_custom_call.1} parent=1 // pred_fallthru
      _
    %v26 = vld [vmem:[#allocation2] sm:$0xff]
    %v27 = vld [vmem:[#allocation2 + $0x8] sm:$0xff]
    %28 = vrot.lane.b32.xlu0 %v26, 1
    %v29 = vpop.permute.xlu0 %28
    %30 = vrot.lane.b32.xlu0 %v27, 1
    %v31 = vpop.permute.xlu0 %30
    %32 = vst [vmem:[#allocation5] sm:$0xff] %v29
    %33 = vst [vmem:[#allocation5 + $0x8] sm:$0xff] %v31
    %v34 = vrot.slane %v26, 7
    %v35 = vrot.slane %v27, 7
    %v36 = vlaneseq
    %v37 = vshrl.u32 %v36, 7
    %vm38 = vcmp.lt.s32.totalorder %v37, 1
    %v39 = vsel %vm38, %v34, %v35
    %v40 = vsel %vm38, %v35, %v34
    %41 = vst [vmem:[#allocation6] sm:$0xff] %v40
    %42 = vst [vmem:[#allocation6 + $0x8] sm:$0xff] %v39
    // Predicated region
    $region10: #{tpu_custom_call.1} parent=1 // pred_check
      _
    $region11: #{tpu_custom_call.1} parent=1 // pred_check_branch
      %44 = sbr.rel (0) target = $region13
    $region12: #{tpu_custom_call.1} parent=1 // pred_region
      %s46 = ssub.s32 256, 256
      %47 = vsyncadd [#allocation4], %s46
      %s48 = sshll.u32 [#allocation5], 4
      %s49 = int_to_ptr.vmem [resolvable:$true] %s48
      %54 = dma.vmem_to_hbm [thread:$0]  %s49, 256, %s1, [#allocation4], 128, 128, 8
    $region13: #{tpu_custom_call.1} parent=1 // pred_fallthru
      _
    // Predicated region
    $region14: #{tpu_custom_call.1} parent=1 // pred_check
      _
    $region15: #{tpu_custom_call.1} parent=1 // pred_check_branch
      %56 = sbr.rel (0) target = $region17
    $region16: #{tpu_custom_call.1} parent=1 // pred_region
      %s58 = ssub.s32 256, 256
      %59 = vsyncadd [#allocation7], %s58
      %s60 = sshll.u32 [#allocation6], 4
      %s61 = int_to_ptr.vmem [resolvable:$true] %s60
      %66 = dma.vmem_to_hbm [thread:$0]  %s61, 256, %s2, [#allocation7], 128, 128, 8
    $region17: #{tpu_custom_call.1} parent=1 // pred_fallthru
      _
    // Predicated region
    $region18: #{tpu_custom_call.1} parent=1 // pred_check
      _
    $region19: #{tpu_custom_call.1} parent=1 // pred_check_branch
      %68 = sbr.rel (0) target = $region21
    $region20: #{tpu_custom_call.1} parent=1 // pred_region
      %69 = dma.done [#allocation4], 256
    $region21: #{tpu_custom_call.1} parent=1 // pred_fallthru
      _
    // Predicated region
    $region22: #{tpu_custom_call.1} parent=1 // pred_check
      _
    $region23: #{tpu_custom_call.1} parent=1 // pred_check_branch
      %71 = sbr.rel (0) target = $region25
    $region24: #{tpu_custom_call.1} parent=1 // pred_region
      %72 = dma.done [#allocation7], 256
    $region25: #{tpu_custom_call.1} parent=1 // pred_fallthru
      _
    %73 = vsyncpa [#allocation3], 1
    %74 = vsyncpa [#allocation4], 1
    %75 = vsyncpa [#allocation7], 1

// kernel: tpu_custom_call.1
$region0: #{tpu_custom_call.1}
  #allocation0 [shape = 'u32[]', space=smem, size = 0x4, offset = 0x4, fixed_abs, tag = 'smem constant byte address 0x4 - core index']
  #allocation1 [shape = 'u32[144,128]{1,0:T(1,128)}', space=vmem, size = 0x12000, scoped, tag = 'internal scratch']
  %s0 = inlined_call_operand.vmem [shape: f32[1,16,128], index: 0, kind: input, shape index: {}]
  %s1 = inlined_call_operand.vmem [shape: s32[16,1], index: 1, kind: input, shape index: {}]
  %s2 = inlined_call_operand.vmem [shape: s32[1,128], index: 2, kind: input, shape index: {}]
  %s3 = inlined_call_operand.hbm [shape: s32[16,128], index: 3, kind: input, shape index: {}]
  %s4 = inlined_call_operand.hbm [shape: bf16[128,128], index: 4, kind: input, shape index: {}]
  %s5 = inlined_call_operand.hbm [shape: f32[1,16,128], index: 5, kind: output, shape index: {}]
  %s6 = sld [smem:[#allocation0]]
  $region38: #{tpu_custom_call.1} parent=0
    _
  %s8 = ssub.s32 1, %s6
  %s9 = scalar_select 0, %s8, %s6
  $region1: #{tpu_custom_call.1} parent=0
    #allocation2 [shape = 'u8[8192]{0}', space=vmem, size = 0x2000, scoped, tag = 'input window, operand 3, single buffered']
    #allocation3 [shape = 's32[1]{0}', space=sflag, size = 0x4, scoped, tag = 'scoped memory for tpu_custom_call.1']
    #allocation4 [shape = 's32[1]{0}', space=sflag, size = 0x4, scoped, tag = 'scoped memory for tpu_custom_call.1']
    #allocation5 [shape = 'u8[32768]{0}', space=vmem, size = 0x8000, scoped, tag = 'input window, operand 4, single buffered']
    #allocation6 [shape = 's32[1]{0}', space=sflag, size = 0x4, scoped, tag = 'scoped memory for tpu_custom_call.1']
    #allocation7 [shape = 'u8[8192]{0}', space=vmem, size = 0x2000, scoped, tag = 'output window, operand 0, single buffered']
    %10 = vsyncpa [#allocation3], 0
    %11 = vsyncpa [#allocation6], 0
    %12 = vsyncpa [#allocation4], 0
    // Predicated region
    $region2: #{tpu_custom_call.1} parent=1 // pred_check
      _
    $region3: #{tpu_custom_call.1} parent=1 // pred_check_branch
      %14 = sbr.rel (0) target = $region5
    $region4: #{tpu_custom_call.1} parent=1 // pred_region
      _
    $region5: #{tpu_custom_call.1} parent=1 // pred_fallthru
      _
    // Predicated region
    $region6: #{tpu_custom_call.1} parent=1 // pred_check
      _
    $region7: #{tpu_custom_call.1} parent=1 // pred_check_branch
      %16 = sbr.rel (0) target = $region9
    $region8: #{tpu_custom_call.1} parent=1 // pred_region
      _
    $region9: #{tpu_custom_call.1} parent=1 // pred_fallthru
      _
    // Predicated region
    $region10: #{tpu_custom_call.1} parent=1 // pred_check
      _
    $region11: #{tpu_custom_call.1} parent=1 // pred_check_branch
      %18 = sbr.rel (0) target = $region13
    $region12: #{tpu_custom_call.1} parent=1 // pred_region
      _
    $region13: #{tpu_custom_call.1} parent=1 // pred_fallthru
      _
    // Predicated region
    $region14: #{tpu_custom_call.1} parent=1 // pred_check
      _
    $region15: #{tpu_custom_call.1} parent=1 // pred_check_branch
      %20 = sbr.rel (0) target = $region17
    $region16: #{tpu_custom_call.1} parent=1 // pred_region
      %s22 = ssub.s32 256, 256
      %23 = vsyncadd [#allocation3], %s22
      %s24 = sshll.u32 [#allocation2], 4
      %s25 = int_to_ptr.vmem [resolvable:$true] %s24
      %30 = dma.hbm_to_vmem [thread:$0]  %s3, 256, %s25, [#allocation3], 128, 128, 8
    $region17: #{tpu_custom_call.1} parent=1 // pred_fallthru
      _
    // Predicated region
    $region18: #{tpu_custom_call.1} parent=1 // pred_check
      _
    $region19: #{tpu_custom_call.1} parent=1 // pred_check_branch
      %32 = sbr.rel (0) target = $region21
    $region20: #{tpu_custom_call.1} parent=1 // pred_region
      %s34 = ssub.s32 1024, 1024
      %35 = vsyncadd [#allocation6], %s34
      %s36 = sshll.u32 [#allocation5], 4
      %s37 = int_to_ptr.vmem [resolvable:$true] %s36
      %42 = dma.hbm_to_vmem [thread:$0]  %s4, 1024, %s37, [#allocation6], 64, 64, 4
    $region21: #{tpu_custom_call.1} parent=1 // pred_fallthru
      _
    // Predicated region
    $region22: #{tpu_custom_call.1} parent=1 // pred_check
      _
    $region23: #{tpu_custom_call.1} parent=1 // pred_check_branch
      %44 = sbr.rel (0) target = $region25
    $region24: #{tpu_custom_call.1} parent=1 // pred_region
      %45 = dma.done [#allocation3], 256
    $region25: #{tpu_custom_call.1} parent=1 // pred_fallthru
      _
    // Predicated region
    $region26: #{tpu_custom_call.1} parent=1 // pred_check
      _
    $region27: #{tpu_custom_call.1} parent=1 // pred_check_branch
      %47 = sbr.rel (0) target = $region29
    $region28: #{tpu_custom_call.1} parent=1 // pred_region
      %48 = dma.done [#allocation6], 1024
    $region29: #{tpu_custom_call.1} parent=1 // pred_fallthru
      _
    %v50 = vld [vmem:[%s1] sm:$0xff]
    %v51 = vld [vmem:[%s1 + $0x8] sm:$0xff]
    %vm52 = vcmp.eq.s32.totalorder %v50, 0
    %vm53 = vcmp.eq.s32.totalorder %v51, 0
    %v54 = vsub.s32 16, %v50
    %v55 = vsub.s32 16, %v51
    %v56 = vsel %vm52, 0, %v54
    %v57 = vsel %vm53, 0, %v55
    %v58 = vld [vmem:[%s2] sm:$0x1]
    %vm59 = vcmp.eq.s32.totalorder %v58, 0
    %v60 = vsub.s32 16, %v58
    %v61 = vsel %vm59, 0, %v60
    %v62 = vld [vmem:[#allocation2] sm:$0xff]
    %v63 = vld [vmem:[#allocation2 + $0x8] sm:$0xff]
    %v64 = vlaneseq
    %v65 = vand.u32 %v64, 127
    %v66 = vand.u32 %v65, 15
    %vm67 = vcmp.lt.s32.totalorder %v66, 15
    %vm68 = vcmp.lt.s32.totalorder %v66, 14
    %vm69 = vcmp.lt.s32.totalorder %v66, 12
    %vm70 = vcmp.lt.s32.totalorder %v66, 8
    %v71 = vld [vmem:[%s0] sm:$0xff]
    %v72 = vld [vmem:[%s0 + $0x8] sm:$0xff]
    %v73 = vmul.f32 %v71, 255.0
    %v74 = vmul.f32 %v72, 255.0
    %v75 = vcvt.f32.s32.to.zero.pseudo %v73
    %v76 = vcvt.f32.s32.to.zero.pseudo %v74
    %v77 = vand.u32 %v75, 1
    %v78 = vand.u32 %v76, 1
    %v79 = vcvt.s32.f32 %v77
    %v80 = vcvt.s32.f32 %v78
    %v81 = vpack.c.bf16 %v80, %v79
    %v82 = vld [vmem:[#allocation5] sm:$0xf]
    %v83 = vld [vmem:[#allocation5 + $0x4] sm:$0xf]
    %v84 = vld [vmem:[#allocation5 + $0x8] sm:$0xf]
    %v85 = vld [vmem:[#allocation5 + $0xc] sm:$0xf]
    %v86 = vld [vmem:[#allocation5 + $0x10] sm:$0xf]
    %v87 = vld [vmem:[#allocation5 + $0x14] sm:$0xf]
    %v88 = vld [vmem:[#allocation5 + $0x18] sm:$0xf]
    %v89 = vld [vmem:[#allocation5 + $0x1c] sm:$0xf]
    %v90 = vld [vmem:[#allocation5 + $0x20] sm:$0xf]
    %v91 = vld [vmem:[#allocation5 + $0x24] sm:$0xf]
    %v92 = vld [vmem:[#allocation5 + $0x28] sm:$0xf]
    %v93 = vld [vmem:[#allocation5 + $0x2c] sm:$0xf]
    %v94 = vld [vmem:[#allocation5 + $0x30] sm:$0xf]
    %v95 = vld [vmem:[#allocation5 + $0x34] sm:$0xf]
    %v96 = vld [vmem:[#allocation5 + $0x38] sm:$0xf]
    %v97 = vld [vmem:[#allocation5 + $0x3c] sm:$0xf]
    %v114 = vunpack.c.l.b16 %v82
    %v115 = vunpack.c.l.b16 %v83
    %v116 = vunpack.c.l.b16 %v84
    %v117 = vunpack.c.l.b16 %v85
    %v118 = vunpack.c.l.b16 %v86
    %v119 = vunpack.c.l.b16 %v87
    %v120 = vunpack.c.l.b16 %v88
    %v121 = vunpack.c.l.b16 %v89
    %v122 = vunpack.c.l.b16 %v90
    %v123 = vunpack.c.l.b16 %v91
    %v124 = vunpack.c.l.b16 %v92
    %v125 = vunpack.c.l.b16 %v93
    %v126 = vunpack.c.l.b16 %v94
    %v127 = vunpack.c.l.b16 %v95
    %v128 = vunpack.c.l.b16 %v96
    %v129 = vunpack.c.l.b16 %v97
    %v130 = vpack.c.b16 %v115, %v114
    %v131 = vpack.c.b16 %v117, %v116
    %v132 = vpack.c.b16 %v119, %v118
    %v133 = vpack.c.b16 %v121, %v120
    %v134 = vpack.c.b16 %v123, %v122
    %v135 = vpack.c.b16 %v125, %v124
    %v136 = vpack.c.b16 %v127, %v126
    %v137 = vpack.c.b16 %v129, %v128
    %146 = vmatprep.subr.bf16.mxu0 0
    %147 = vmatpush1.bf16.msra.mxu0 %v137
    %148 = vmatprep.subr.bf16.mxu0 0
    %149 = vmatpush1.bf16.msra.mxu0 %v136
    %150 = vmatprep.subr.bf16.mxu0 0
    %151 = vmatpush1.bf16.msra.mxu0 %v135
    %152 = vmatprep.subr.bf16.mxu0 0
    %153 = vmatpush1.bf16.msra.mxu0 %v134
    %154 = vmatprep.subr.bf16.mxu0 0
    %155 = vmatpush1.bf16.msra.mxu0 %v133
    %156 = vmatprep.subr.bf16.mxu0 0
    %157 = vmatpush1.bf16.msra.mxu0 %v132
    %158 = vmatprep.subr.bf16.mxu0 0
    %159 = vmatpush1.bf16.msra.mxu0 %v131
    %160 = vmatprep.subr.bf16.mxu0 0
    %161 = vmatpush1.bf16.msra.mxu0 %v130
    %162 = vmatprep.subr.bf16.mxu0 0
    %163 = vmatpush2.bf16.msra.mxu0 0
    %164 = vmatprep.subr.bf16.mxu0 0
    %165 = vmatpush2.bf16.msra.mxu0 0
    %166 = vmatprep.subr.bf16.mxu0 0
    %167 = vmatpush2.bf16.msra.mxu0 0
    %168 = vmatprep.subr.bf16.mxu0 0
    %169 = vmatpush2.bf16.msra.mxu0 0
    %170 = vmatprep.subr.bf16.mxu0 0
    %171 = vmatpush2.bf16.msra.mxu0 0
    %172 = vmatprep.subr.bf16.mxu0 0
    %173 = vmatpush2.bf16.msra.mxu0 0
    %174 = vmatprep.subr.bf16.mxu0 0
    %175 = vmatpush2.bf16.msra.mxu0 0
    %176 = vmatprep.subr.bf16.mxu0 0
    %177 = vmatpush2.bf16.msra.mxu0 0
    %178 = vmatprep.mubr.bf16.mxu0 0
    %179 = vmatmul.mubr.bf16.gmra.mxu0 %v81
    %v180 = vpop.f32.mrf.mxu0
    %v181 = vadd.f32 0.0, %v180
    %v182 = vpop.f32.mrf.mxu0
    %v183 = vpop.f32.mrf.mxu0
    %v184 = vadd.f32 0.0, %v183
    %v185 = vpop.f32.mrf.mxu0
    %186 = vdwg.mxu0
    %v187 = vcvt.f32.s32.to.zero.pseudo %v181
    %v188 = vcvt.f32.s32.to.zero.pseudo %v184
    %v189 = vand.u32 %v187, 1
    %v190 = vand.u32 %v188, 1
    %vm191 = vcmp.eq.s32.totalorder %v189, 0
    %vm192 = vcmp.eq.s32.totalorder %v190, 0
    %193 = vset.pattern.permute.xlu0 0
    %194 = vperm.xlu0 %193, %v50
    %v195 = vpop.permute.xlu0 %194
    %196 = vset.pattern.permute.xlu0 0
    %197 = vperm.xlu0 %196, %v51
    %v198 = vpop.permute.xlu0 %197
    %199 = vset.pattern.permute.xlu0 0
    %200 = vperm.xlu0 %199, %v56
    %v201 = vpop.permute.xlu0 %200
    %202 = vset.pattern.permute.xlu0 0
    %203 = vperm.xlu0 %202, %v57
    %v204 = vpop.permute.xlu0 %203
    %v205 = vsel %vm191, %v195, %v201
    %v206 = vsel %vm192, %v198, %v204
    %v207 = vand.u32 %v205, 1
    %v208 = vand.u32 %v206, 1
    %vm209 = vcmp.ne.s32.totalorder %v207, 0
    %vm210 = vcmp.ne.s32.totalorder %v208, 0
    %211 = vrot.lane.b32.xlu0 %v75, 127
    %v212 = vpop.permute.xlu0 %211
    %213 = vrot.lane.b32.xlu0 %v76, 127
    %v214 = vpop.permute.xlu0 %213
    %215 = vrot.lane.b32.xlu0 %v75, 15
    %v216 = vpop.permute.xlu0 %215
    %217 = vrot.lane.b32.xlu0 %v76, 15
    %v218 = vpop.permute.xlu0 %217
    %v219 = vsel %vm67, 1, 0
    %vm220 = vcmp.eq.s32.totalorder %v219, 1
    %v221 = vsel %vm220, %v212, %v216
    %v222 = vsel %vm220, %v214, %v218
    %v223 = vsel %vm209, %v221, %v75
    %v224 = vsel %vm210, %v222, %v76
    %v225 = vand.u32 %v205, 2
    %v226 = vand.u32 %v206, 2
    %vm227 = vcmp.ne.s32.totalorder %v225, 0
    %vm228 = vcmp.ne.s32.totalorder %v226, 0
    %229 = vrot.lane.b32.xlu0 %v223, 126
    %v230 = vpop.permute.xlu0 %229
    %231 = vrot.lane.b32.xlu0 %v224, 126
    %v232 = vpop.permute.xlu0 %231
    %233 = vrot.lane.b32.xlu0 %v223, 14
    %v234 = vpop.permute.xlu0 %233
    %235 = vrot.lane.b32.xlu0 %v224, 14
    %v236 = vpop.permute.xlu0 %235
    %v237 = vsel %vm68, 1, 0
    %vm238 = vcmp.eq.s32.totalorder %v237, 1
    %v239 = vsel %vm238, %v230, %v234
    %v240 = vsel %vm238, %v232, %v236
    %v241 = vsel %vm227, %v239, %v223
    %v242 = vsel %vm228, %v240, %v224
    %v243 = vand.u32 %v205, 4
    %v244 = vand.u32 %v206, 4
    %vm245 = vcmp.ne.s32.totalorder %v243, 0
    %vm246 = vcmp.ne.s32.totalorder %v244, 0
    %247 = vrot.lane.b32.xlu0 %v241, 124
    %v248 = vpop.permute.xlu0 %247
    %249 = vrot.lane.b32.xlu0 %v242, 124
    %v250 = vpop.permute.xlu0 %249
    %251 = vrot.lane.b32.xlu0 %v241, 12
    %v252 = vpop.permute.xlu0 %251
    %253 = vrot.lane.b32.xlu0 %v242, 12
    %v254 = vpop.permute.xlu0 %253
    %v255 = vsel %vm69, 1, 0
    %vm256 = vcmp.eq.s32.totalorder %v255, 1
    %v257 = vsel %vm256, %v248, %v252
    %v258 = vsel %vm256, %v250, %v254
    %v259 = vsel %vm245, %v257, %v241
    %v260 = vsel %vm246, %v258, %v242
    %v261 = vand.u32 %v205, 8
    %v262 = vand.u32 %v206, 8
    %vm263 = vcmp.ne.s32.totalorder %v261, 0
    %vm264 = vcmp.ne.s32.totalorder %v262, 0
    %265 = vrot.lane.b32.xlu0 %v259, 120
    %v266 = vpop.permute.xlu0 %265
    %267 = vrot.lane.b32.xlu0 %v260, 120
    %v268 = vpop.permute.xlu0 %267
    %269 = vrot.lane.b32.xlu0 %v259, 8
    %v270 = vpop.permute.xlu0 %269
    %271 = vrot.lane.b32.xlu0 %v260, 8
    %v272 = vpop.permute.xlu0 %271
    %v273 = vsel %vm70, 1, 0
    %vm274 = vcmp.eq.s32.totalorder %v273, 1
    %v275 = vsel %vm274, %v266, %v270
    %v276 = vsel %vm274, %v268, %v272
    %v277 = vsel %vm263, %v275, %v259
    %v278 = vsel %vm264, %v276, %v260
    %v279 = vadd.s32 %v277, %v278
    %v280 = vrot.slane %v279, 4
    %v281 = vadd.s32 %v279, %v280
    %v282 = vrot.slane %v281, 2
    %v283 = vadd.s32 %v281, %v282
    %v284 = vrot.slane %v283, 1
    %v285 = vadd.s32 %v283, %v284
    %v286 = vand.u32 %v285, 1
    %vm287 = vcmp.eq.s32.totalorder %v286, 1
    %v288 = vsel %vm287, %v58, %v61
    %v289 = vand.u32 %v288, 1
    %vm290 = vcmp.ne.s32.totalorder %v289, 0
    %vm291 = vcmask 1046528
    %v292 = vrot.slane %v277, 1
    %v293 = vrot.slane %v278, 1
    %v294 = vsel %vm291, %v292, %v293
    %v295 = vsel %vm291, %v293, %v292
    %v296 = vsel %vm290, 1, 0
    %v297 = vlaneseq
    %v298 = vshrl.u32 %v297, 7
    %v299 = vsub.s32 0, %v298
    %v300 = vrot.slane %v296, %v299
    %vm301 = vcmp.eq.s32.totalorder %v300, 1
    %v302 = vsel %vm301, %v294, %v277
    %v303 = vsel %vm301, %v295, %v278
    %v304 = vand.u32 %v288, 2
    %vm305 = vcmp.ne.s32.totalorder %v304, 0
    %vm306 = vcmask 1045504
    %v307 = vrot.slane %v302, 2
    %v308 = vrot.slane %v303, 2
    %v309 = vsel %vm306, %v307, %v308
    %v310 = vsel %vm306, %v308, %v307
    %v311 = vsel %vm305, 1, 0
    %v312 = vlaneseq
    %v313 = vshrl.u32 %v312, 7
    %v314 = vsub.s32 0, %v313
    %v315 = vrot.slane %v311, %v314
    %vm316 = vcmp.eq.s32.totalorder %v315, 1
    %v317 = vsel %vm316, %v309, %v302
    %v318 = vsel %vm316, %v310, %v303
    %v319 = vand.u32 %v288, 4
    %vm320 = vcmp.ne.s32.totalorder %v319, 0
    %vm321 = vcmask 1043456
    %v322 = vrot.slane %v317, 4
    %v323 = vrot.slane %v318, 4
    %v324 = vsel %vm321, %v322, %v323
    %v325 = vsel %vm321, %v323, %v322
    %v326 = vsel %vm320, 1, 0
    %v327 = vlaneseq
    %v328 = vshrl.u32 %v327, 7
    %v329 = vsub.s32 0, %v328
    %v330 = vrot.slane %v326, %v329
    %vm331 = vcmp.eq.s32.totalorder %v330, 1
    %v332 = vsel %vm331, %v324, %v317
    %v333 = vsel %vm331, %v325, %v318
    %v334 = vand.u32 %v288, 8
    %vm335 = vcmp.ne.s32.totalorder %v334, 0
    %v336 = vsel %vm335, 1, 0
    %v337 = vlaneseq
    %v338 = vshrl.u32 %v337, 7
    %v339 = vsub.s32 0, %v338
    %v340 = vrot.slane %v336, %v339
    %vm341 = vcmp.eq.s32.totalorder %v340, 1
    %v342 = vsel %vm341, %v333, %v332
    %v343 = vsel %vm341, %v332, %v333
    %v344 = vxor.u32 %v342, %v62
    %v345 = vxor.u32 %v343, %v63
    %v346 = vand.u32 %v344, 1
    %v347 = vand.u32 %v345, 1
    %v348 = vcvt.s32.f32 %v346
    %v349 = vcvt.s32.f32 %v347
    %v350 = vpack.c.bf16 %v349, %v348
    %351 = vmatprep.subr.bf16.mxu0 0
    %352 = vmatpush1.bf16.msra.mxu0 %v137
    %353 = vmatprep.subr.bf16.mxu0 0
    %354 = vmatpush1.bf16.msra.mxu0 %v136
    %355 = vmatprep.subr.bf16.mxu0 0
    %356 = vmatpush1.bf16.msra.mxu0 %v135
    %357 = vmatprep.subr.bf16.mxu0 0
    %358 = vmatpush1.bf16.msra.mxu0 %v134
    %359 = vmatprep.subr.bf16.mxu0 0
    %360 = vmatpush1.bf16.msra.mxu0 %v133
    %361 = vmatprep.subr.bf16.mxu0 0
    %362 = vmatpush1.bf16.msra.mxu0 %v132
    %363 = vmatprep.subr.bf16.mxu0 0
    %364 = vmatpush1.bf16.msra.mxu0 %v131
    %365 = vmatprep.subr.bf16.mxu0 0
    %366 = vmatpush1.bf16.msra.mxu0 %v130
    %367 = vmatprep.subr.bf16.mxu0 0
    %368 = vmatpush2.bf16.msra.mxu0 0
    %369 = vmatprep.subr.bf16.mxu0 0
    %370 = vmatpush2.bf16.msra.mxu0 0
    %371 = vmatprep.subr.bf16.mxu0 0
    %372 = vmatpush2.bf16.msra.mxu0 0
    %373 = vmatprep.subr.bf16.mxu0 0
    %374 = vmatpush2.bf16.msra.mxu0 0
    %375 = vmatprep.subr.bf16.mxu0 0
    %376 = vmatpush2.bf16.msra.mxu0 0
    %377 = vmatprep.subr.bf16.mxu0 0
    %378 = vmatpush2.bf16.msra.mxu0 0
    %379 = vmatprep.subr.bf16.mxu0 0
    %380 = vmatpush2.bf16.msra.mxu0 0
    %381 = vmatprep.subr.bf16.mxu0 0
    %382 = vmatpush2.bf16.msra.mxu0 0
    %383 = vmatprep.mubr.bf16.mxu0 0
    %384 = vmatmul.mubr.bf16.gmra.mxu0 %v350
    %v385 = vpop.f32.mrf.mxu0
    %v386 = vadd.f32 0.0, %v385
    %v387 = vpop.f32.mrf.mxu0
    %v388 = vpop.f32.mrf.mxu0
    %v389 = vadd.f32 0.0, %v388
    %v390 = vpop.f32.mrf.mxu0
    %391 = vdwg.mxu0
    %v392 = vcvt.f32.s32.to.zero.pseudo %v386
    %v393 = vcvt.f32.s32.to.zero.pseudo %v389
    %v394 = vand.u32 %v392, 1
    %v395 = vand.u32 %v393, 1
    %vm396 = vcmp.eq.s32.totalorder %v394, 0
    %vm397 = vcmp.eq.s32.totalorder %v395, 0
    %v398 = vsel %vm396, %v195, %v201
    %v399 = vsel %vm397, %v198, %v204
    %v400 = vand.u32 %v398, 1
    %v401 = vand.u32 %v399, 1
    %vm402 = vcmp.ne.s32.totalorder %v400, 0
    %vm403 = vcmp.ne.s32.totalorder %v401, 0
    %404 = vrot.lane.b32.xlu0 %v344, 127
    %v405 = vpop.permute.xlu0 %404
    %406 = vrot.lane.b32.xlu0 %v345, 127
    %v407 = vpop.permute.xlu0 %406
    %408 = vrot.lane.b32.xlu0 %v344, 15
    %v409 = vpop.permute.xlu0 %408
    %410 = vrot.lane.b32.xlu0 %v345, 15
    %v411 = vpop.permute.xlu0 %410
    %v412 = vsel %vm220, %v405, %v409
    %v413 = vsel %vm220, %v407, %v411
    %v414 = vsel %vm402, %v412, %v344
    %v415 = vsel %vm403, %v413, %v345
    %v416 = vand.u32 %v398, 2
    %v417 = vand.u32 %v399, 2
    %vm418 = vcmp.ne.s32.totalorder %v416, 0
    %vm419 = vcmp.ne.s32.totalorder %v417, 0
    %420 = vrot.lane.b32.xlu0 %v414, 126
    %v421 = vpop.permute.xlu0 %420
    %422 = vrot.lane.b32.xlu0 %v415, 126
    %v423 = vpop.permute.xlu0 %422
    %424 = vrot.lane.b32.xlu0 %v414, 14
    %v425 = vpop.permute.xlu0 %424
    %426 = vrot.lane.b32.xlu0 %v415, 14
    %v427 = vpop.permute.xlu0 %426
    %v428 = vsel %vm238, %v421, %v425
    %v429 = vsel %vm238, %v423, %v427
    %v430 = vsel %vm418, %v428, %v414
    %v431 = vsel %vm419, %v429, %v415
    %v432 = vand.u32 %v398, 4
    %v433 = vand.u32 %v399, 4
    %vm434 = vcmp.ne.s32.totalorder %v432, 0
    %vm435 = vcmp.ne.s32.totalorder %v433, 0
    %436 = vrot.lane.b32.xlu0 %v430, 124
    %v437 = vpop.permute.xlu0 %436
    %438 = vrot.lane.b32.xlu0 %v431, 124
    %v439 = vpop.permute.xlu0 %438
    %440 = vrot.lane.b32.xlu0 %v430, 12
    %v441 = vpop.permute.xlu0 %440
    %442 = vrot.lane.b32.xlu0 %v431, 12
    %v443 = vpop.permute.xlu0 %442
    %v444 = vsel %vm256, %v437, %v441
    %v445 = vsel %vm256, %v439, %v443
    %v446 = vsel %vm434, %v444, %v430
    %v447 = vsel %vm435, %v445, %v431
    %v448 = vand.u32 %v398, 8
    %v449 = vand.u32 %v399, 8
    %vm450 = vcmp.ne.s32.totalorder %v448, 0
    %vm451 = vcmp.ne.s32.totalorder %v449, 0
    %452 = vrot.lane.b32.xlu0 %v446, 120
    %v453 = vpop.permute.xlu0 %452
    %454 = vrot.lane.b32.xlu0 %v447, 120
    %v455 = vpop.permute.xlu0 %454
    %456 = vrot.lane.b32.xlu0 %v446, 8
    %v457 = vpop.permute.xlu0 %456
    %458 = vrot.lane.b32.xlu0 %v447, 8
    %v459 = vpop.permute.xlu0 %458
    %v460 = vsel %vm274, %v453, %v457
    %v461 = vsel %vm274, %v455, %v459
    %v462 = vsel %vm450, %v460, %v446
    %v463 = vsel %vm451, %v461, %v447
    %v464 = vadd.s32 %v462, %v463
    %v465 = vrot.slane %v464, 4
    %v466 = vadd.s32 %v464, %v465
    %v467 = vrot.slane %v466, 2
    %v468 = vadd.s32 %v466, %v467
    %v469 = vrot.slane %v468, 1
    %v470 = vadd.s32 %v468, %v469
    %v471 = vand.u32 %v470, 1
    %vm472 = vcmp.eq.s32.totalorder %v471, 1
    %v473 = vsel %vm472, %v58, %v61
    %v474 = vand.u32 %v473, 1
    %vm475 = vcmp.ne.s32.totalorder %v474, 0
    %v476 = vrot.slane %v462, 1
    %v477 = vrot.slane %v463, 1
    %v478 = vsel %vm291, %v476, %v477
    %v479 = vsel %vm291, %v477, %v476
    %v480 = vsel %vm475, 1, 0
    %v481 = vlaneseq
    %v482 = vshrl.u32 %v481, 7
    %v483 = vsub.s32 0, %v482
    %v484 = vrot.slane %v480, %v483
    %vm485 = vcmp.eq.s32.totalorder %v484, 1
    %v486 = vsel %vm485, %v478, %v462
    %v487 = vsel %vm485, %v479, %v463
    %v488 = vand.u32 %v473, 2
    %vm489 = vcmp.ne.s32.totalorder %v488, 0
    %v490 = vrot.slane %v486, 2
    %v491 = vrot.slane %v487, 2
    %v492 = vsel %vm306, %v490, %v491
    %v493 = vsel %vm306, %v491, %v490
    %v494 = vsel %vm489, 1, 0
    %v495 = vlaneseq
    %v496 = vshrl.u32 %v495, 7
    %v497 = vsub.s32 0, %v496
    %v498 = vrot.slane %v494, %v497
    %vm499 = vcmp.eq.s32.totalorder %v498, 1
    %v500 = vsel %vm499, %v492, %v486
    %v501 = vsel %vm499, %v493, %v487
    %v502 = vand.u32 %v473, 4
    %vm503 = vcmp.ne.s32.totalorder %v502, 0
    %v504 = vrot.slane %v500, 4
    %v505 = vrot.slane %v501, 4
    %v506 = vsel %vm321, %v504, %v505
    %v507 = vsel %vm321, %v505, %v504
    %v508 = vsel %vm503, 1, 0
    %v509 = vlaneseq
    %v510 = vshrl.u32 %v509, 7
    %v511 = vsub.s32 0, %v510
    %v512 = vrot.slane %v508, %v511
    %vm513 = vcmp.eq.s32.totalorder %v512, 1
    %v514 = vsel %vm513, %v506, %v500
    %v515 = vsel %vm513, %v507, %v501
    %v516 = vand.u32 %v473, 8
    %vm517 = vcmp.ne.s32.totalorder %v516, 0
    %v518 = vsel %vm517, 1, 0
    %v519 = vlaneseq
    %v520 = vshrl.u32 %v519, 7
    %v521 = vsub.s32 0, %v520
    %v522 = vrot.slane %v518, %v521
    %vm523 = vcmp.eq.s32.totalorder %v522, 1
    %v524 = vsel %vm523, %v515, %v514
    %v525 = vsel %vm523, %v514, %v515
    %v526 = vxor.u32 %v524, %v62
    %v527 = vxor.u32 %v525, %v63
    %v528 = vand.u32 %v526, 1
    %v529 = vand.u32 %v527, 1
    %v530 = vcvt.s32.f32 %v528
    %v531 = vcvt.s32.f32 %v529
    %v532 = vpack.c.bf16 %v531, %v530
    %533 = vmatprep.subr.bf16.mxu0 0
    %534 = vmatpush1.bf16.msra.mxu0 %v137
    %535 = vmatprep.subr.bf16.mxu0 0
    %536 = vmatpush1.bf16.msra.mxu0 %v136
    %537 = vmatprep.subr.bf16.mxu0 0
    %538 = vmatpush1.bf16.msra.mxu0 %v135
    %539 = vmatprep.subr.bf16.mxu0 0
    %540 = vmatpush1.bf16.msra.mxu0 %v134
    %541 = vmatprep.subr.bf16.mxu0 0
    %542 = vmatpush1.bf16.msra.mxu0 %v133
    %543 = vmatprep.subr.bf16.mxu0 0
    %544 = vmatpush1.bf16.msra.mxu0 %v132
    %545 = vmatprep.subr.bf16.mxu0 0
    %546 = vmatpush1.bf16.msra.mxu0 %v131
    %547 = vmatprep.subr.bf16.mxu0 0
    %548 = vmatpush1.bf16.msra.mxu0 %v130
    %549 = vmatprep.subr.bf16.mxu0 0
    %550 = vmatpush2.bf16.msra.mxu0 0
    %551 = vmatprep.subr.bf16.mxu0 0
    %552 = vmatpush2.bf16.msra.mxu0 0
    %553 = vmatprep.subr.bf16.mxu0 0
    %554 = vmatpush2.bf16.msra.mxu0 0
    %555 = vmatprep.subr.bf16.mxu0 0
    %556 = vmatpush2.bf16.msra.mxu0 0
    %557 = vmatprep.subr.bf16.mxu0 0
    %558 = vmatpush2.bf16.msra.mxu0 0
    %559 = vmatprep.subr.bf16.mxu0 0
    %560 = vmatpush2.bf16.msra.mxu0 0
    %561 = vmatprep.subr.bf16.mxu0 0
    %562 = vmatpush2.bf16.msra.mxu0 0
    %563 = vmatprep.subr.bf16.mxu0 0
    %564 = vmatpush2.bf16.msra.mxu0 0
    %565 = vmatprep.mubr.bf16.mxu0 0
    %566 = vmatmul.mubr.bf16.gmra.mxu0 %v532
    %v567 = vpop.f32.mrf.mxu0
    %v568 = vadd.f32 0.0, %v567
    %v569 = vpop.f32.mrf.mxu0
    %v570 = vpop.f32.mrf.mxu0
    %v571 = vadd.f32 0.0, %v570
    %v572 = vpop.f32.mrf.mxu0
    %573 = vdwg.mxu0
    %v574 = vcvt.f32.s32.to.zero.pseudo %v568
    %v575 = vcvt.f32.s32.to.zero.pseudo %v571
    %v576 = vand.u32 %v574, 1
    %v577 = vand.u32 %v575, 1
    %vm578 = vcmp.eq.s32.totalorder %v576, 0
    %vm579 = vcmp.eq.s32.totalorder %v577, 0
    %v580 = vsel %vm578, %v195, %v201
    %v581 = vsel %vm579, %v198, %v204
    %v582 = vand.u32 %v580, 1
    %v583 = vand.u32 %v581, 1
    %vm584 = vcmp.ne.s32.totalorder %v582, 0
    %vm585 = vcmp.ne.s32.totalorder %v583, 0
    %586 = vrot.lane.b32.xlu0 %v526, 127
    %v587 = vpop.permute.xlu0 %586
    %588 = vrot.lane.b32.xlu0 %v527, 127
    %v589 = vpop.permute.xlu0 %588
    %590 = vrot.lane.b32.xlu0 %v526, 15
    %v591 = vpop.permute.xlu0 %590
    %592 = vrot.lane.b32.xlu0 %v527, 15
    %v593 = vpop.permute.xlu0 %592
    %v594 = vsel %vm220, %v587, %v591
    %v595 = vsel %vm220, %v589, %v593
    %v596 = vsel %vm584, %v594, %v526
    %v597 = vsel %vm585, %v595, %v527
    %v598 = vand.u32 %v580, 2
    %v599 = vand.u32 %v581, 2
    %vm600 = vcmp.ne.s32.totalorder %v598, 0
    %vm601 = vcmp.ne.s32.totalorder %v599, 0
    %602 = vrot.lane.b32.xlu0 %v596, 126
    %v603 = vpop.permute.xlu0 %602
    %604 = vrot.lane.b32.xlu0 %v597, 126
    %v605 = vpop.permute.xlu0 %604
    %606 = vrot.lane.b32.xlu0 %v596, 14
    %v607 = vpop.permute.xlu0 %606
    %608 = vrot.lane.b32.xlu0 %v597, 14
    %v609 = vpop.permute.xlu0 %608
    %v610 = vsel %vm238, %v603, %v607
    %v611 = vsel %vm238, %v605, %v609
    %v612 = vsel %vm600, %v610, %v596
    %v613 = vsel %vm601, %v611, %v597
    %v614 = vand.u32 %v580, 4
    %v615 = vand.u32 %v581, 4
    %vm616 = vcmp.ne.s32.totalorder %v614, 0
    %vm617 = vcmp.ne.s32.totalorder %v615, 0
    %618 = vrot.lane.b32.xlu0 %v612, 124
    %v619 = vpop.permute.xlu0 %618
    %620 = vrot.lane.b32.xlu0 %v613, 124
    %v621 = vpop.permute.xlu0 %620
    %622 = vrot.lane.b32.xlu0 %v612, 12
    %v623 = vpop.permute.xlu0 %622
    %624 = vrot.lane.b32.xlu0 %v613, 12
    %v625 = vpop.permute.xlu0 %624
    %v626 = vsel %vm256, %v619, %v623
    %v627 = vsel %vm256, %v621, %v625
    %v628 = vsel %vm616, %v626, %v612
    %v629 = vsel %vm617, %v627, %v613
    %v630 = vand.u32 %v580, 8
    %v631 = vand.u32 %v581, 8
    %vm632 = vcmp.ne.s32.totalorder %v630, 0
    %vm633 = vcmp.ne.s32.totalorder %v631, 0
    %634 = vrot.lane.b32.xlu0 %v628, 120
    %v635 = vpop.permute.xlu0 %634
    %636 = vrot.lane.b32.xlu0 %v629, 120
    %v637 = vpop.permute.xlu0 %636
    %638 = vrot.lane.b32.xlu0 %v628, 8
    %v639 = vpop.permute.xlu0 %638
    %640 = vrot.lane.b32.xlu0 %v629, 8
    %v641 = vpop.permute.xlu0 %640
    %v642 = vsel %vm274, %v635, %v639
    %v643 = vsel %vm274, %v637, %v641
    %v644 = vsel %vm632, %v642, %v628
    %v645 = vsel %vm633, %v643, %v629
    %v646 = vadd.s32 %v644, %v645
    %v647 = vrot.slane %v646, 4
    %v648 = vadd.s32 %v646, %v647
    %v649 = vrot.slane %v648, 2
    %v650 = vadd.s32 %v648, %v649
    %v651 = vrot.slane %v650, 1
    %v652 = vadd.s32 %v650, %v651
    %v653 = vand.u32 %v652, 1
    %vm654 = vcmp.eq.s32.totalorder %v653, 1
    %v655 = vsel %vm654, %v58, %v61
    %v656 = vand.u32 %v655, 1
    %vm657 = vcmp.ne.s32.totalorder %v656, 0
    %v658 = vrot.slane %v644, 1
    %v659 = vrot.slane %v645, 1
    %v660 = vsel %vm291, %v658, %v659
    %v661 = vsel %vm291, %v659, %v658
    %v662 = vsel %vm657, 1, 0
    %v663 = vlaneseq
    %v664 = vshrl.u32 %v663, 7
    %v665 = vsub.s32 0, %v664
    %v666 = vrot.slane %v662, %v665
    %vm667 = vcmp.eq.s32.totalorder %v666, 1
    %v668 = vsel %vm667, %v660, %v644
    %v669 = vsel %vm667, %v661, %v645
    %v670 = vand.u32 %v655, 2
    %vm671 = vcmp.ne.s32.totalorder %v670, 0
    %v672 = vrot.slane %v668, 2
    %v673 = vrot.slane %v669, 2
    %v674 = vsel %vm306, %v672, %v673
    %v675 = vsel %vm306, %v673, %v672
    %v676 = vsel %vm671, 1, 0
    %v677 = vlaneseq
    %v678 = vshrl.u32 %v677, 7
    %v679 = vsub.s32 0, %v678
    %v680 = vrot.slane %v676, %v679
    %vm681 = vcmp.eq.s32.totalorder %v680, 1
    %v682 = vsel %vm681, %v674, %v668
    %v683 = vsel %vm681, %v675, %v669
    %v684 = vand.u32 %v655, 4
    %vm685 = vcmp.ne.s32.totalorder %v684, 0
    %v686 = vrot.slane %v682, 4
    %v687 = vrot.slane %v683, 4
    %v688 = vsel %vm321, %v686, %v687
    %v689 = vsel %vm321, %v687, %v686
    %v690 = vsel %vm685, 1, 0
    %v691 = vlaneseq
    %v692 = vshrl.u32 %v691, 7
    %v693 = vsub.s32 0, %v692
    %v694 = vrot.slane %v690, %v693
    %vm695 = vcmp.eq.s32.totalorder %v694, 1
    %v696 = vsel %vm695, %v688, %v682
    %v697 = vsel %vm695, %v689, %v683
    %v698 = vand.u32 %v655, 8
    %vm699 = vcmp.ne.s32.totalorder %v698, 0
    %v700 = vsel %vm699, 1, 0
    %v701 = vlaneseq
    %v702 = vshrl.u32 %v701, 7
    %v703 = vsub.s32 0, %v702
    %v704 = vrot.slane %v700, %v703
    %vm705 = vcmp.eq.s32.totalorder %v704, 1
    %v706 = vsel %vm705, %v697, %v696
    %v707 = vsel %vm705, %v696, %v697
    %v708 = vxor.u32 %v706, %v62
    %v709 = vxor.u32 %v707, %v63
    %v710 = vand.u32 %v708, 1
    %v711 = vand.u32 %v709, 1
    %v712 = vcvt.s32.f32 %v710
    %v713 = vcvt.s32.f32 %v711
    %v714 = vpack.c.bf16 %v713, %v712
    %715 = vmatprep.subr.bf16.mxu0 0
    %716 = vmatpush1.bf16.msra.mxu0 %v137
    %717 = vmatprep.subr.bf16.mxu0 0
    %718 = vmatpush1.bf16.msra.mxu0 %v136
    %719 = vmatprep.subr.bf16.mxu0 0
    %720 = vmatpush1.bf16.msra.mxu0 %v135
    %721 = vmatprep.subr.bf16.mxu0 0
    %722 = vmatpush1.bf16.msra.mxu0 %v134
    %723 = vmatprep.subr.bf16.mxu0 0
    %724 = vmatpush1.bf16.msra.mxu0 %v133
    %725 = vmatprep.subr.bf16.mxu0 0
    %726 = vmatpush1.bf16.msra.mxu0 %v132
    %727 = vmatprep.subr.bf16.mxu0 0
    %728 = vmatpush1.bf16.msra.mxu0 %v131
    %729 = vmatprep.subr.bf16.mxu0 0
    %730 = vmatpush1.bf16.msra.mxu0 %v130
    %731 = vmatprep.subr.bf16.mxu0 0
    %732 = vmatpush2.bf16.msra.mxu0 0
    %733 = vmatprep.subr.bf16.mxu0 0
    %734 = vmatpush2.bf16.msra.mxu0 0
    %735 = vmatprep.subr.bf16.mxu0 0
    %736 = vmatpush2.bf16.msra.mxu0 0
    %737 = vmatprep.subr.bf16.mxu0 0
    %738 = vmatpush2.bf16.msra.mxu0 0
    %739 = vmatprep.subr.bf16.mxu0 0
    %740 = vmatpush2.bf16.msra.mxu0 0
    %741 = vmatprep.subr.bf16.mxu0 0
    %742 = vmatpush2.bf16.msra.mxu0 0
    %743 = vmatprep.subr.bf16.mxu0 0
    %744 = vmatpush2.bf16.msra.mxu0 0
    %745 = vmatprep.subr.bf16.mxu0 0
    %746 = vmatpush2.bf16.msra.mxu0 0
    %747 = vmatprep.mubr.bf16.mxu0 0
    %748 = vmatmul.mubr.bf16.gmra.mxu0 %v714
    %v749 = vpop.f32.mrf.mxu0
    %v750 = vadd.f32 0.0, %v749
    %v751 = vpop.f32.mrf.mxu0
    %v752 = vpop.f32.mrf.mxu0
    %v753 = vadd.f32 0.0, %v752
    %v754 = vpop.f32.mrf.mxu0
    %755 = vdwg.mxu0
    %v756 = vcvt.f32.s32.to.zero.pseudo %v750
    %v757 = vcvt.f32.s32.to.zero.pseudo %v753
    %v758 = vand.u32 %v756, 1
    %v759 = vand.u32 %v757, 1
    %vm760 = vcmp.eq.s32.totalorder %v758, 0
    %vm761 = vcmp.eq.s32.totalorder %v759, 0
    %v762 = vsel %vm760, %v195, %v201
    %v763 = vsel %vm761, %v198, %v204
    %v764 = vand.u32 %v762, 1
    %v765 = vand.u32 %v763, 1
    %vm766 = vcmp.ne.s32.totalorder %v764, 0
    %vm767 = vcmp.ne.s32.totalorder %v765, 0
    %768 = vrot.lane.b32.xlu0 %v708, 127
    %v769 = vpop.permute.xlu0 %768
    %770 = vrot.lane.b32.xlu0 %v709, 127
    %v771 = vpop.permute.xlu0 %770
    %772 = vrot.lane.b32.xlu0 %v708, 15
    %v773 = vpop.permute.xlu0 %772
    %774 = vrot.lane.b32.xlu0 %v709, 15
    %v775 = vpop.permute.xlu0 %774
    %v776 = vsel %vm220, %v769, %v773
    %v777 = vsel %vm220, %v771, %v775
    %v778 = vsel %vm766, %v776, %v708
    %v779 = vsel %vm767, %v777, %v709
    %v780 = vand.u32 %v762, 2
    %v781 = vand.u32 %v763, 2
    %vm782 = vcmp.ne.s32.totalorder %v780, 0
    %vm783 = vcmp.ne.s32.totalorder %v781, 0
    %784 = vrot.lane.b32.xlu0 %v778, 126
    %v785 = vpop.permute.xlu0 %784
    %786 = vrot.lane.b32.xlu0 %v779, 126
    %v787 = vpop.permute.xlu0 %786
    %788 = vrot.lane.b32.xlu0 %v778, 14
    %v789 = vpop.permute.xlu0 %788
    %790 = vrot.lane.b32.xlu0 %v779, 14
    %v791 = vpop.permute.xlu0 %790
    %v792 = vsel %vm238, %v785, %v789
    %v793 = vsel %vm238, %v787, %v791
    %v794 = vsel %vm782, %v792, %v778
    %v795 = vsel %vm783, %v793, %v779
    %v796 = vand.u32 %v762, 4
    %v797 = vand.u32 %v763, 4
    %vm798 = vcmp.ne.s32.totalorder %v796, 0
    %vm799 = vcmp.ne.s32.totalorder %v797, 0
    %800 = vrot.lane.b32.xlu0 %v794, 124
    %v801 = vpop.permute.xlu0 %800
    %802 = vrot.lane.b32.xlu0 %v795, 124
    %v803 = vpop.permute.xlu0 %802
    %804 = vrot.lane.b32.xlu0 %v794, 12
    %v805 = vpop.permute.xlu0 %804
    %806 = vrot.lane.b32.xlu0 %v795, 12
    %v807 = vpop.permute.xlu0 %806
    %v808 = vsel %vm256, %v801, %v805
    %v809 = vsel %vm256, %v803, %v807
    %v810 = vsel %vm798, %v808, %v794
    %v811 = vsel %vm799, %v809, %v795
    %v812 = vand.u32 %v762, 8
    %v813 = vand.u32 %v763, 8
    %vm814 = vcmp.ne.s32.totalorder %v812, 0
    %vm815 = vcmp.ne.s32.totalorder %v813, 0
    %816 = vrot.lane.b32.xlu0 %v810, 120
    %v817 = vpop.permute.xlu0 %816
    %818 = vrot.lane.b32.xlu0 %v811, 120
    %v819 = vpop.permute.xlu0 %818
    %820 = vrot.lane.b32.xlu0 %v810, 8
    %v821 = vpop.permute.xlu0 %820
    %822 = vrot.lane.b32.xlu0 %v811, 8
    %v823 = vpop.permute.xlu0 %822
    %v824 = vsel %vm274, %v817, %v821
    %v825 = vsel %vm274, %v819, %v823
    %v826 = vsel %vm814, %v824, %v810
    %v827 = vsel %vm815, %v825, %v811
    %v828 = vadd.s32 %v826, %v827
    %v829 = vrot.slane %v828, 4
    %v830 = vadd.s32 %v828, %v829
    %v831 = vrot.slane %v830, 2
    %v832 = vadd.s32 %v830, %v831
    %v833 = vrot.slane %v832, 1
    %v834 = vadd.s32 %v832, %v833
    %v835 = vand.u32 %v834, 1
    %vm836 = vcmp.eq.s32.totalorder %v835, 1
    %v837 = vsel %vm836, %v58, %v61
    %v838 = vand.u32 %v837, 1
    %vm839 = vcmp.ne.s32.totalorder %v838, 0
    %v840 = vrot.slane %v826, 1
    %v841 = vrot.slane %v827, 1
    %v842 = vsel %vm291, %v840, %v841
    %v843 = vsel %vm291, %v841, %v840
    %v844 = vsel %vm839, 1, 0
    %v845 = vlaneseq
    %v846 = vshrl.u32 %v845, 7
    %v847 = vsub.s32 0, %v846
    %v848 = vrot.slane %v844, %v847
    %vm849 = vcmp.eq.s32.totalorder %v848, 1
    %v850 = vsel %vm849, %v842, %v826
    %v851 = vsel %vm849, %v843, %v827
    %v852 = vand.u32 %v837, 2
    %vm853 = vcmp.ne.s32.totalorder %v852, 0
    %v854 = vrot.slane %v850, 2
    %v855 = vrot.slane %v851, 2
    %v856 = vsel %vm306, %v854, %v855
    %v857 = vsel %vm306, %v855, %v854
    %v858 = vsel %vm853, 1, 0
    %v859 = vlaneseq
    %v860 = vshrl.u32 %v859, 7
    %v861 = vsub.s32 0, %v860
    %v862 = vrot.slane %v858, %v861
    %vm863 = vcmp.eq.s32.totalorder %v862, 1
    %v864 = vsel %vm863, %v856, %v850
    %v865 = vsel %vm863, %v857, %v851
    %v866 = vand.u32 %v837, 4
    %vm867 = vcmp.ne.s32.totalorder %v866, 0
    %v868 = vrot.slane %v864, 4
    %v869 = vrot.slane %v865, 4
    %v870 = vsel %vm321, %v868, %v869
    %v871 = vsel %vm321, %v869, %v868
    %v872 = vsel %vm867, 1, 0
    %v873 = vlaneseq
    %v874 = vshrl.u32 %v873, 7
    %v875 = vsub.s32 0, %v874
    %v876 = vrot.slane %v872, %v875
    %vm877 = vcmp.eq.s32.totalorder %v876, 1
    %v878 = vsel %vm877, %v870, %v864
    %v879 = vsel %vm877, %v871, %v865
    %v880 = vand.u32 %v837, 8
    %vm881 = vcmp.ne.s32.totalorder %v880, 0
    %v882 = vsel %vm881, 1, 0
    %v883 = vlaneseq
    %v884 = vshrl.u32 %v883, 7
    %v885 = vsub.s32 0, %v884
    %v886 = vrot.slane %v882, %v885
    %vm887 = vcmp.eq.s32.totalorder %v886, 1
    %v888 = vsel %vm887, %v879, %v878
    %v889 = vsel %vm887, %v878, %v879
    %v890 = vxor.u32 %v888, %v62
    %v891 = vxor.u32 %v889, %v63
    %v892 = vand.u32 %v890, 1
    %v893 = vand.u32 %v891, 1
    %v894 = vcvt.s32.f32 %v892
    %v895 = vcvt.s32.f32 %v893
    %v896 = vpack.c.bf16 %v895, %v894
    %897 = vmatprep.subr.bf16.mxu0 0
    %898 = vmatpush1.bf16.msra.mxu0 %v137
    %899 = vmatprep.subr.bf16.mxu0 0
    %900 = vmatpush1.bf16.msra.mxu0 %v136
    %901 = vmatprep.subr.bf16.mxu0 0
    %902 = vmatpush1.bf16.msra.mxu0 %v135
    %903 = vmatprep.subr.bf16.mxu0 0
    %904 = vmatpush1.bf16.msra.mxu0 %v134
    %905 = vmatprep.subr.bf16.mxu0 0
    %906 = vmatpush1.bf16.msra.mxu0 %v133
    %907 = vmatprep.subr.bf16.mxu0 0
    %908 = vmatpush1.bf16.msra.mxu0 %v132
    %909 = vmatprep.subr.bf16.mxu0 0
    %910 = vmatpush1.bf16.msra.mxu0 %v131
    %911 = vmatprep.subr.bf16.mxu0 0
    %912 = vmatpush1.bf16.msra.mxu0 %v130
    %913 = vmatprep.subr.bf16.mxu0 0
    %914 = vmatpush2.bf16.msra.mxu0 0
    %915 = vmatprep.subr.bf16.mxu0 0
    %916 = vmatpush2.bf16.msra.mxu0 0
    %917 = vmatprep.subr.bf16.mxu0 0
    %918 = vmatpush2.bf16.msra.mxu0 0
    %919 = vmatprep.subr.bf16.mxu0 0
    %920 = vmatpush2.bf16.msra.mxu0 0
    %921 = vmatprep.subr.bf16.mxu0 0
    %922 = vmatpush2.bf16.msra.mxu0 0
    %923 = vmatprep.subr.bf16.mxu0 0
    %924 = vmatpush2.bf16.msra.mxu0 0
    %925 = vmatprep.subr.bf16.mxu0 0
    %926 = vmatpush2.bf16.msra.mxu0 0
    %927 = vmatprep.subr.bf16.mxu0 0
    %928 = vmatpush2.bf16.msra.mxu0 0
    %929 = vmatprep.mubr.bf16.mxu0 0
    %930 = vmatmul.mubr.bf16.gmra.mxu0 %v896
    %v931 = vpop.f32.mrf.mxu0
    %v932 = vadd.f32 0.0, %v931
    %v933 = vpop.f32.mrf.mxu0
    %v934 = vpop.f32.mrf.mxu0
    %v935 = vadd.f32 0.0, %v934
    %v936 = vpop.f32.mrf.mxu0
    %937 = vdwg.mxu0
    %v938 = vcvt.f32.s32.to.zero.pseudo %v932
    %v939 = vcvt.f32.s32.to.zero.pseudo %v935
    %v940 = vand.u32 %v938, 1
    %v941 = vand.u32 %v939, 1
    %vm942 = vcmp.eq.s32.totalorder %v940, 0
    %vm943 = vcmp.eq.s32.totalorder %v941, 0
    %v944 = vsel %vm942, %v195, %v201
    %v945 = vsel %vm943, %v198, %v204
    %v946 = vand.u32 %v944, 1
    %v947 = vand.u32 %v945, 1
    %vm948 = vcmp.ne.s32.totalorder %v946, 0
    %vm949 = vcmp.ne.s32.totalorder %v947, 0
    %950 = vrot.lane.b32.xlu0 %v890, 127
    %v951 = vpop.permute.xlu0 %950
    %952 = vrot.lane.b32.xlu0 %v891, 127
    %v953 = vpop.permute.xlu0 %952
    %954 = vrot.lane.b32.xlu0 %v890, 15
    %v955 = vpop.permute.xlu0 %954
    %956 = vrot.lane.b32.xlu0 %v891, 15
    %v957 = vpop.permute.xlu0 %956
    %v958 = vsel %vm220, %v951, %v955
    %v959 = vsel %vm220, %v953, %v957
    %v960 = vsel %vm948, %v958, %v890
    %v961 = vsel %vm949, %v959, %v891
    %v962 = vand.u32 %v944, 2
    %v963 = vand.u32 %v945, 2
    %vm964 = vcmp.ne.s32.totalorder %v962, 0
    %vm965 = vcmp.ne.s32.totalorder %v963, 0
    %966 = vrot.lane.b32.xlu0 %v960, 126
    %v967 = vpop.permute.xlu0 %966
    %968 = vrot.lane.b32.xlu0 %v961, 126
    %v969 = vpop.permute.xlu0 %968
    %970 = vrot.lane.b32.xlu0 %v960, 14
    %v971 = vpop.permute.xlu0 %970
    %972 = vrot.lane.b32.xlu0 %v961, 14
    %v973 = vpop.permute.xlu0 %972
    %v974 = vsel %vm238, %v967, %v971
    %v975 = vsel %vm238, %v969, %v973
    %v976 = vsel %vm964, %v974, %v960
    %v977 = vsel %vm965, %v975, %v961
    %v978 = vand.u32 %v944, 4
    %v979 = vand.u32 %v945, 4
    %vm980 = vcmp.ne.s32.totalorder %v978, 0
    %vm981 = vcmp.ne.s32.totalorder %v979, 0
    %982 = vrot.lane.b32.xlu0 %v976, 124
    %v983 = vpop.permute.xlu0 %982
    %984 = vrot.lane.b32.xlu0 %v977, 124
    %v985 = vpop.permute.xlu0 %984
    %986 = vrot.lane.b32.xlu0 %v976, 12
    %v987 = vpop.permute.xlu0 %986
    %988 = vrot.lane.b32.xlu0 %v977, 12
    %v989 = vpop.permute.xlu0 %988
    %v990 = vsel %vm256, %v983, %v987
    %v991 = vsel %vm256, %v985, %v989
    %v992 = vsel %vm980, %v990, %v976
    %v993 = vsel %vm981, %v991, %v977
    %v994 = vand.u32 %v944, 8
    %v995 = vand.u32 %v945, 8
    %vm996 = vcmp.ne.s32.totalorder %v994, 0
    %vm997 = vcmp.ne.s32.totalorder %v995, 0
    %998 = vrot.lane.b32.xlu0 %v992, 120
    %v999 = vpop.permute.xlu0 %998
    %1000 = vrot.lane.b32.xlu0 %v993, 120
    %v1001 = vpop.permute.xlu0 %1000
    %1002 = vrot.lane.b32.xlu0 %v992, 8
    %v1003 = vpop.permute.xlu0 %1002
    %1004 = vrot.lane.b32.xlu0 %v993, 8
    %v1005 = vpop.permute.xlu0 %1004
    %v1006 = vsel %vm274, %v999, %v1003
    %v1007 = vsel %vm274, %v1001, %v1005
    %v1008 = vsel %vm996, %v1006, %v992
    %v1009 = vsel %vm997, %v1007, %v993
    %v1010 = vadd.s32 %v1008, %v1009
    %v1011 = vrot.slane %v1010, 4
    %v1012 = vadd.s32 %v1010, %v1011
    %v1013 = vrot.slane %v1012, 2
    %v1014 = vadd.s32 %v1012, %v1013
    %v1015 = vrot.slane %v1014, 1
    %v1016 = vadd.s32 %v1014, %v1015
    %v1017 = vand.u32 %v1016, 1
    %vm1018 = vcmp.eq.s32.totalorder %v1017, 1
    %v1019 = vsel %vm1018, %v58, %v61
    %v1020 = vand.u32 %v1019, 1
    %vm1021 = vcmp.ne.s32.totalorder %v1020, 0
    %v1022 = vrot.slane %v1008, 1
    %v1023 = vrot.slane %v1009, 1
    %v1024 = vsel %vm291, %v1022, %v1023
    %v1025 = vsel %vm291, %v1023, %v1022
    %v1026 = vsel %vm1021, 1, 0
    %v1027 = vlaneseq
    %v1028 = vshrl.u32 %v1027, 7
    %v1029 = vsub.s32 0, %v1028
    %v1030 = vrot.slane %v1026, %v1029
    %vm1031 = vcmp.eq.s32.totalorder %v1030, 1
    %v1032 = vsel %vm1031, %v1024, %v1008
    %v1033 = vsel %vm1031, %v1025, %v1009
    %v1034 = vand.u32 %v1019, 2
    %vm1035 = vcmp.ne.s32.totalorder %v1034, 0
    %v1036 = vrot.slane %v1032, 2
    %v1037 = vrot.slane %v1033, 2
    %v1038 = vsel %vm306, %v1036, %v1037
    %v1039 = vsel %vm306, %v1037, %v1036
    %v1040 = vsel %vm1035, 1, 0
    %v1041 = vlaneseq
    %v1042 = vshrl.u32 %v1041, 7
    %v1043 = vsub.s32 0, %v1042
    %v1044 = vrot.slane %v1040, %v1043
    %vm1045 = vcmp.eq.s32.totalorder %v1044, 1
    %v1046 = vsel %vm1045, %v1038, %v1032
    %v1047 = vsel %vm1045, %v1039, %v1033
    %v1048 = vand.u32 %v1019, 4
    %vm1049 = vcmp.ne.s32.totalorder %v1048, 0
    %v1050 = vrot.slane %v1046, 4
    %v1051 = vrot.slane %v1047, 4
    %v1052 = vsel %vm321, %v1050, %v1051
    %v1053 = vsel %vm321, %v1051, %v1050
    %v1054 = vsel %vm1049, 1, 0
    %v1055 = vlaneseq
    %v1056 = vshrl.u32 %v1055, 7
    %v1057 = vsub.s32 0, %v1056
    %v1058 = vrot.slane %v1054, %v1057
    %vm1059 = vcmp.eq.s32.totalorder %v1058, 1
    %v1060 = vsel %vm1059, %v1052, %v1046
    %v1061 = vsel %vm1059, %v1053, %v1047
    %v1062 = vand.u32 %v1019, 8
    %vm1063 = vcmp.ne.s32.totalorder %v1062, 0
    %v1064 = vsel %vm1063, 1, 0
    %v1065 = vlaneseq
    %v1066 = vshrl.u32 %v1065, 7
    %v1067 = vsub.s32 0, %v1066
    %v1068 = vrot.slane %v1064, %v1067
    %vm1069 = vcmp.eq.s32.totalorder %v1068, 1
    %v1070 = vsel %vm1069, %v1061, %v1060
    %v1071 = vsel %vm1069, %v1060, %v1061
    %v1072 = vxor.u32 %v1070, %v62
    %v1073 = vxor.u32 %v1071, %v63
    %v1074 = vand.u32 %v1072, 1
    %v1075 = vand.u32 %v1073, 1
    %v1076 = vcvt.s32.f32 %v1074
    %v1077 = vcvt.s32.f32 %v1075
    %v1078 = vpack.c.bf16 %v1077, %v1076
    %1079 = vmatprep.subr.bf16.mxu0 0
    %1080 = vmatpush1.bf16.msra.mxu0 %v137
    %1081 = vmatprep.subr.bf16.mxu0 0
    %1082 = vmatpush1.bf16.msra.mxu0 %v136
    %1083 = vmatprep.subr.bf16.mxu0 0
    %1084 = vmatpush1.bf16.msra.mxu0 %v135
    %1085 = vmatprep.subr.bf16.mxu0 0
    %1086 = vmatpush1.bf16.msra.mxu0 %v134
    %1087 = vmatprep.subr.bf16.mxu0 0
    %1088 = vmatpush1.bf16.msra.mxu0 %v133
    %1089 = vmatprep.subr.bf16.mxu0 0
    %1090 = vmatpush1.bf16.msra.mxu0 %v132
    %1091 = vmatprep.subr.bf16.mxu0 0
    %1092 = vmatpush1.bf16.msra.mxu0 %v131
    %1093 = vmatprep.subr.bf16.mxu0 0
    %1094 = vmatpush1.bf16.msra.mxu0 %v130
    %1095 = vmatprep.subr.bf16.mxu0 0
    %1096 = vmatpush2.bf16.msra.mxu0 0
    %1097 = vmatprep.subr.bf16.mxu0 0
    %1098 = vmatpush2.bf16.msra.mxu0 0
    %1099 = vmatprep.subr.bf16.mxu0 0
    %1100 = vmatpush2.bf16.msra.mxu0 0
    %1101 = vmatprep.subr.bf16.mxu0 0
    %1102 = vmatpush2.bf16.msra.mxu0 0
    %1103 = vmatprep.subr.bf16.mxu0 0
    %1104 = vmatpush2.bf16.msra.mxu0 0
    %1105 = vmatprep.subr.bf16.mxu0 0
    %1106 = vmatpush2.bf16.msra.mxu0 0
    %1107 = vmatprep.subr.bf16.mxu0 0
    %1108 = vmatpush2.bf16.msra.mxu0 0
    %1109 = vmatprep.subr.bf16.mxu0 0
    %1110 = vmatpush2.bf16.msra.mxu0 0
    %1111 = vmatprep.mubr.bf16.mxu0 0
    %1112 = vmatmul.mubr.bf16.gmra.mxu0 %v1078
    %v1113 = vpop.f32.mrf.mxu0
    %v1114 = vadd.f32 0.0, %v1113
    %v1115 = vpop.f32.mrf.mxu0
    %v1116 = vpop.f32.mrf.mxu0
    %v1117 = vadd.f32 0.0, %v1116
    %v1118 = vpop.f32.mrf.mxu0
    %1119 = vdwg.mxu0
    %v1120 = vcvt.f32.s32.to.zero.pseudo %v1114
    %v1121 = vcvt.f32.s32.to.zero.pseudo %v1117
    %v1122 = vand.u32 %v1120, 1
    %v1123 = vand.u32 %v1121, 1
    %vm1124 = vcmp.eq.s32.totalorder %v1122, 0
    %vm1125 = vcmp.eq.s32.totalorder %v1123, 0
    %v1126 = vsel %vm1124, %v195, %v201
    %v1127 = vsel %vm1125, %v198, %v204
    %v1128 = vand.u32 %v1126, 1
    %v1129 = vand.u32 %v1127, 1
    %vm1130 = vcmp.ne.s32.totalorder %v1128, 0
    %vm1131 = vcmp.ne.s32.totalorder %v1129, 0
    %1132 = vrot.lane.b32.xlu0 %v1072, 127
    %v1133 = vpop.permute.xlu0 %1132
    %1134 = vrot.lane.b32.xlu0 %v1073, 127
    %v1135 = vpop.permute.xlu0 %1134
    %1136 = vrot.lane.b32.xlu0 %v1072, 15
    %v1137 = vpop.permute.xlu0 %1136
    %1138 = vrot.lane.b32.xlu0 %v1073, 15
    %v1139 = vpop.permute.xlu0 %1138
    %v1140 = vsel %vm220, %v1133, %v1137
    %v1141 = vsel %vm220, %v1135, %v1139
    %v1142 = vsel %vm1130, %v1140, %v1072
    %v1143 = vsel %vm1131, %v1141, %v1073
    %v1144 = vand.u32 %v1126, 2
    %v1145 = vand.u32 %v1127, 2
    %vm1146 = vcmp.ne.s32.totalorder %v1144, 0
    %vm1147 = vcmp.ne.s32.totalorder %v1145, 0
    %1148 = vrot.lane.b32.xlu0 %v1142, 126
    %v1149 = vpop.permute.xlu0 %1148
    %1150 = vrot.lane.b32.xlu0 %v1143, 126
    %v1151 = vpop.permute.xlu0 %1150
    %1152 = vrot.lane.b32.xlu0 %v1142, 14
    %v1153 = vpop.permute.xlu0 %1152
    %1154 = vrot.lane.b32.xlu0 %v1143, 14
    %v1155 = vpop.permute.xlu0 %1154
    %v1156 = vsel %vm238, %v1149, %v1153
    %v1157 = vsel %vm238, %v1151, %v1155
    %v1158 = vsel %vm1146, %v1156, %v1142
    %v1159 = vsel %vm1147, %v1157, %v1143
    %v1160 = vand.u32 %v1126, 4
    %v1161 = vand.u32 %v1127, 4
    %vm1162 = vcmp.ne.s32.totalorder %v1160, 0
    %vm1163 = vcmp.ne.s32.totalorder %v1161, 0
    %1164 = vrot.lane.b32.xlu0 %v1158, 124
    %v1165 = vpop.permute.xlu0 %1164
    %1166 = vrot.lane.b32.xlu0 %v1159, 124
    %v1167 = vpop.permute.xlu0 %1166
    %1168 = vrot.lane.b32.xlu0 %v1158, 12
    %v1169 = vpop.permute.xlu0 %1168
    %1170 = vrot.lane.b32.xlu0 %v1159, 12
    %v1171 = vpop.permute.xlu0 %1170
    %v1172 = vsel %vm256, %v1165, %v1169
    %v1173 = vsel %vm256, %v1167, %v1171
    %v1174 = vsel %vm1162, %v1172, %v1158
    %v1175 = vsel %vm1163, %v1173, %v1159
    %v1176 = vand.u32 %v1126, 8
    %v1177 = vand.u32 %v1127, 8
    %vm1178 = vcmp.ne.s32.totalorder %v1176, 0
    %vm1179 = vcmp.ne.s32.totalorder %v1177, 0
    %1180 = vrot.lane.b32.xlu0 %v1174, 120
    %v1181 = vpop.permute.xlu0 %1180
    %1182 = vrot.lane.b32.xlu0 %v1175, 120
    %v1183 = vpop.permute.xlu0 %1182
    %1184 = vrot.lane.b32.xlu0 %v1174, 8
    %v1185 = vpop.permute.xlu0 %1184
    %1186 = vrot.lane.b32.xlu0 %v1175, 8
    %v1187 = vpop.permute.xlu0 %1186
    %v1188 = vsel %vm274, %v1181, %v1185
    %v1189 = vsel %vm274, %v1183, %v1187
    %v1190 = vsel %vm1178, %v1188, %v1174
    %v1191 = vsel %vm1179, %v1189, %v1175
    %v1192 = vadd.s32 %v1190, %v1191
    %v1193 = vrot.slane %v1192, 4
    %v1194 = vadd.s32 %v1192, %v1193
    %v1195 = vrot.slane %v1194, 2
    %v1196 = vadd.s32 %v1194, %v1195
    %v1197 = vrot.slane %v1196, 1
    %v1198 = vadd.s32 %v1196, %v1197
    %v1199 = vand.u32 %v1198, 1
    %vm1200 = vcmp.eq.s32.totalorder %v1199, 1
    %v1201 = vsel %vm1200, %v58, %v61
    %v1202 = vand.u32 %v1201, 1
    %vm1203 = vcmp.ne.s32.totalorder %v1202, 0
    %v1204 = vrot.slane %v1190, 1
    %v1205 = vrot.slane %v1191, 1
    %v1206 = vsel %vm291, %v1204, %v1205
    %v1207 = vsel %vm291, %v1205, %v1204
    %v1208 = vsel %vm1203, 1, 0
    %v1209 = vlaneseq
    %v1210 = vshrl.u32 %v1209, 7
    %v1211 = vsub.s32 0, %v1210
    %v1212 = vrot.slane %v1208, %v1211
    %vm1213 = vcmp.eq.s32.totalorder %v1212, 1
    %v1214 = vsel %vm1213, %v1206, %v1190
    %v1215 = vsel %vm1213, %v1207, %v1191
    %v1216 = vand.u32 %v1201, 2
    %vm1217 = vcmp.ne.s32.totalorder %v1216, 0
    %v1218 = vrot.slane %v1214, 2
    %v1219 = vrot.slane %v1215, 2
    %v1220 = vsel %vm306, %v1218, %v1219
    %v1221 = vsel %vm306, %v1219, %v1218
    %v1222 = vsel %vm1217, 1, 0
    %v1223 = vlaneseq
    %v1224 = vshrl.u32 %v1223, 7
    %v1225 = vsub.s32 0, %v1224
    %v1226 = vrot.slane %v1222, %v1225
    %vm1227 = vcmp.eq.s32.totalorder %v1226, 1
    %v1228 = vsel %vm1227, %v1220, %v1214
    %v1229 = vsel %vm1227, %v1221, %v1215
    %v1230 = vand.u32 %v1201, 4
    %vm1231 = vcmp.ne.s32.totalorder %v1230, 0
    %v1232 = vrot.slane %v1228, 4
    %v1233 = vrot.slane %v1229, 4
    %v1234 = vsel %vm321, %v1232, %v1233
    %v1235 = vsel %vm321, %v1233, %v1232
    %v1236 = vsel %vm1231, 1, 0
    %v1237 = vlaneseq
    %v1238 = vshrl.u32 %v1237, 7
    %v1239 = vsub.s32 0, %v1238
    %v1240 = vrot.slane %v1236, %v1239
    %vm1241 = vcmp.eq.s32.totalorder %v1240, 1
    %v1242 = vsel %vm1241, %v1234, %v1228
    %v1243 = vsel %vm1241, %v1235, %v1229
    %v1244 = vand.u32 %v1201, 8
    %vm1245 = vcmp.ne.s32.totalorder %v1244, 0
    %v1246 = vsel %vm1245, 1, 0
    %v1247 = vlaneseq
    %v1248 = vshrl.u32 %v1247, 7
    %v1249 = vsub.s32 0, %v1248
    %v1250 = vrot.slane %v1246, %v1249
    %vm1251 = vcmp.eq.s32.totalorder %v1250, 1
    %v1252 = vsel %vm1251, %v1243, %v1242
    %v1253 = vsel %vm1251, %v1242, %v1243
    %v1254 = vxor.u32 %v1252, %v62
    %v1255 = vxor.u32 %v1253, %v63
    %v1256 = vand.u32 %v1254, 1
    %v1257 = vand.u32 %v1255, 1
    %v1258 = vcvt.s32.f32 %v1256
    %v1259 = vcvt.s32.f32 %v1257
    %v1260 = vpack.c.bf16 %v1259, %v1258
    %1261 = vmatprep.subr.bf16.mxu0 0
    %1262 = vmatpush1.bf16.msra.mxu0 %v137
    %1263 = vmatprep.subr.bf16.mxu0 0
    %1264 = vmatpush1.bf16.msra.mxu0 %v136
    %1265 = vmatprep.subr.bf16.mxu0 0
    %1266 = vmatpush1.bf16.msra.mxu0 %v135
    %1267 = vmatprep.subr.bf16.mxu0 0
    %1268 = vmatpush1.bf16.msra.mxu0 %v134
    %1269 = vmatprep.subr.bf16.mxu0 0
    %1270 = vmatpush1.bf16.msra.mxu0 %v133
    %1271 = vmatprep.subr.bf16.mxu0 0
    %1272 = vmatpush1.bf16.msra.mxu0 %v132
    %1273 = vmatprep.subr.bf16.mxu0 0
    %1274 = vmatpush1.bf16.msra.mxu0 %v131
    %1275 = vmatprep.subr.bf16.mxu0 0
    %1276 = vmatpush1.bf16.msra.mxu0 %v130
    %1277 = vmatprep.subr.bf16.mxu0 0
    %1278 = vmatpush2.bf16.msra.mxu0 0
    %1279 = vmatprep.subr.bf16.mxu0 0
    %1280 = vmatpush2.bf16.msra.mxu0 0
    %1281 = vmatprep.subr.bf16.mxu0 0
    %1282 = vmatpush2.bf16.msra.mxu0 0
    %1283 = vmatprep.subr.bf16.mxu0 0
    %1284 = vmatpush2.bf16.msra.mxu0 0
    %1285 = vmatprep.subr.bf16.mxu0 0
    %1286 = vmatpush2.bf16.msra.mxu0 0
    %1287 = vmatprep.subr.bf16.mxu0 0
    %1288 = vmatpush2.bf16.msra.mxu0 0
    %1289 = vmatprep.subr.bf16.mxu0 0
    %1290 = vmatpush2.bf16.msra.mxu0 0
    %1291 = vmatprep.subr.bf16.mxu0 0
    %1292 = vmatpush2.bf16.msra.mxu0 0
    %1293 = vmatprep.mubr.bf16.mxu0 0
    %1294 = vmatmul.mubr.bf16.gmra.mxu0 %v1260
    %v1295 = vpop.f32.mrf.mxu0
    %v1296 = vadd.f32 0.0, %v1295
    %v1297 = vpop.f32.mrf.mxu0
    %v1298 = vpop.f32.mrf.mxu0
    %v1299 = vadd.f32 0.0, %v1298
    %v1300 = vpop.f32.mrf.mxu0
    %1301 = vdwg.mxu0
    %v1302 = vcvt.f32.s32.to.zero.pseudo %v1296
    %v1303 = vcvt.f32.s32.to.zero.pseudo %v1299
    %v1304 = vand.u32 %v1302, 1
    %v1305 = vand.u32 %v1303, 1
    %vm1306 = vcmp.eq.s32.totalorder %v1304, 0
    %vm1307 = vcmp.eq.s32.totalorder %v1305, 0
    %v1308 = vsel %vm1306, %v195, %v201
    %v1309 = vsel %vm1307, %v198, %v204
    %v1310 = vand.u32 %v1308, 1
    %v1311 = vand.u32 %v1309, 1
    %vm1312 = vcmp.ne.s32.totalorder %v1310, 0
    %vm1313 = vcmp.ne.s32.totalorder %v1311, 0
    %1314 = vrot.lane.b32.xlu0 %v1254, 127
    %v1315 = vpop.permute.xlu0 %1314
    %1316 = vrot.lane.b32.xlu0 %v1255, 127
    %v1317 = vpop.permute.xlu0 %1316
    %1318 = vrot.lane.b32.xlu0 %v1254, 15
    %v1319 = vpop.permute.xlu0 %1318
    %1320 = vrot.lane.b32.xlu0 %v1255, 15
    %v1321 = vpop.permute.xlu0 %1320
    %v1322 = vsel %vm220, %v1315, %v1319
    %v1323 = vsel %vm220, %v1317, %v1321
    %v1324 = vsel %vm1312, %v1322, %v1254
    %v1325 = vsel %vm1313, %v1323, %v1255
    %v1326 = vand.u32 %v1308, 2
    %v1327 = vand.u32 %v1309, 2
    %vm1328 = vcmp.ne.s32.totalorder %v1326, 0
    %vm1329 = vcmp.ne.s32.totalorder %v1327, 0
    %1330 = vrot.lane.b32.xlu0 %v1324, 126
    %v1331 = vpop.permute.xlu0 %1330
    %1332 = vrot.lane.b32.xlu0 %v1325, 126
    %v1333 = vpop.permute.xlu0 %1332
    %1334 = vrot.lane.b32.xlu0 %v1324, 14
    %v1335 = vpop.permute.xlu0 %1334
    %1336 = vrot.lane.b32.xlu0 %v1325, 14
    %v1337 = vpop.permute.xlu0 %1336
    %v1338 = vsel %vm238, %v1331, %v1335
    %v1339 = vsel %vm238, %v1333, %v1337
    %v1340 = vsel %vm1328, %v1338, %v1324
    %v1341 = vsel %vm1329, %v1339, %v1325
    %v1342 = vand.u32 %v1308, 4
    %v1343 = vand.u32 %v1309, 4
    %vm1344 = vcmp.ne.s32.totalorder %v1342, 0
    %vm1345 = vcmp.ne.s32.totalorder %v1343, 0
    %1346 = vrot.lane.b32.xlu0 %v1340, 124
    %v1347 = vpop.permute.xlu0 %1346
    %1348 = vrot.lane.b32.xlu0 %v1341, 124
    %v1349 = vpop.permute.xlu0 %1348
    %1350 = vrot.lane.b32.xlu0 %v1340, 12
    %v1351 = vpop.permute.xlu0 %1350
    %1352 = vrot.lane.b32.xlu0 %v1341, 12
    %v1353 = vpop.permute.xlu0 %1352
    %v1354 = vsel %vm256, %v1347, %v1351
    %v1355 = vsel %vm256, %v1349, %v1353
    %v1356 = vsel %vm1344, %v1354, %v1340
    %v1357 = vsel %vm1345, %v1355, %v1341
    %v1358 = vand.u32 %v1308, 8
    %v1359 = vand.u32 %v1309, 8
    %vm1360 = vcmp.ne.s32.totalorder %v1358, 0
    %vm1361 = vcmp.ne.s32.totalorder %v1359, 0
    %1362 = vrot.lane.b32.xlu0 %v1356, 120
    %v1363 = vpop.permute.xlu0 %1362
    %1364 = vrot.lane.b32.xlu0 %v1357, 120
    %v1365 = vpop.permute.xlu0 %1364
    %1366 = vrot.lane.b32.xlu0 %v1356, 8
    %v1367 = vpop.permute.xlu0 %1366
    %1368 = vrot.lane.b32.xlu0 %v1357, 8
    %v1369 = vpop.permute.xlu0 %1368
    %v1370 = vsel %vm274, %v1363, %v1367
    %v1371 = vsel %vm274, %v1365, %v1369
    %v1372 = vsel %vm1360, %v1370, %v1356
    %v1373 = vsel %vm1361, %v1371, %v1357
    %v1374 = vadd.s32 %v1372, %v1373
    %v1375 = vrot.slane %v1374, 4
    %v1376 = vadd.s32 %v1374, %v1375
    %v1377 = vrot.slane %v1376, 2
    %v1378 = vadd.s32 %v1376, %v1377
    %v1379 = vrot.slane %v1378, 1
    %v1380 = vadd.s32 %v1378, %v1379
    %v1381 = vand.u32 %v1380, 1
    %vm1382 = vcmp.eq.s32.totalorder %v1381, 1
    %v1383 = vsel %vm1382, %v58, %v61
    %v1384 = vand.u32 %v1383, 1
    %vm1385 = vcmp.ne.s32.totalorder %v1384, 0
    %v1386 = vrot.slane %v1372, 1
    %v1387 = vrot.slane %v1373, 1
    %v1388 = vsel %vm291, %v1386, %v1387
    %v1389 = vsel %vm291, %v1387, %v1386
    %v1390 = vsel %vm1385, 1, 0
    %v1391 = vlaneseq
    %v1392 = vshrl.u32 %v1391, 7
    %v1393 = vsub.s32 0, %v1392
    %v1394 = vrot.slane %v1390, %v1393
    %vm1395 = vcmp.eq.s32.totalorder %v1394, 1
    %v1396 = vsel %vm1395, %v1388, %v1372
    %v1397 = vsel %vm1395, %v1389, %v1373
    %v1398 = vand.u32 %v1383, 2
    %vm1399 = vcmp.ne.s32.totalorder %v1398, 0
    %v1400 = vrot.slane %v1396, 2
    %v1401 = vrot.slane %v1397, 2
    %v1402 = vsel %vm306, %v1400, %v1401
    %v1403 = vsel %vm306, %v1401, %v1400
    %v1404 = vsel %vm1399, 1, 0
    %v1405 = vlaneseq
    %v1406 = vshrl.u32 %v1405, 7
    %v1407 = vsub.s32 0, %v1406
    %v1408 = vrot.slane %v1404, %v1407
    %vm1409 = vcmp.eq.s32.totalorder %v1408, 1
    %v1410 = vsel %vm1409, %v1402, %v1396
    %v1411 = vsel %vm1409, %v1403, %v1397
    %v1412 = vand.u32 %v1383, 4
    %vm1413 = vcmp.ne.s32.totalorder %v1412, 0
    %v1414 = vrot.slane %v1410, 4
    %v1415 = vrot.slane %v1411, 4
    %v1416 = vsel %vm321, %v1414, %v1415
    %v1417 = vsel %vm321, %v1415, %v1414
    %v1418 = vsel %vm1413, 1, 0
    %v1419 = vlaneseq
    %v1420 = vshrl.u32 %v1419, 7
    %v1421 = vsub.s32 0, %v1420
    %v1422 = vrot.slane %v1418, %v1421
    %vm1423 = vcmp.eq.s32.totalorder %v1422, 1
    %v1424 = vsel %vm1423, %v1416, %v1410
    %v1425 = vsel %vm1423, %v1417, %v1411
    %v1426 = vand.u32 %v1383, 8
    %vm1427 = vcmp.ne.s32.totalorder %v1426, 0
    %v1428 = vsel %vm1427, 1, 0
    %v1429 = vlaneseq
    %v1430 = vshrl.u32 %v1429, 7
    %v1431 = vsub.s32 0, %v1430
    %v1432 = vrot.slane %v1428, %v1431
    %vm1433 = vcmp.eq.s32.totalorder %v1432, 1
    %v1434 = vsel %vm1433, %v1425, %v1424
    %v1435 = vsel %vm1433, %v1424, %v1425
    %v1436 = vxor.u32 %v1434, %v62
    %v1437 = vxor.u32 %v1435, %v63
    %v1438 = vand.u32 %v1436, 1
    %v1439 = vand.u32 %v1437, 1
    %v1440 = vcvt.s32.f32 %v1438
    %v1441 = vcvt.s32.f32 %v1439
    %v1442 = vpack.c.bf16 %v1441, %v1440
    %1443 = vmatprep.subr.bf16.mxu0 0
    %1444 = vmatpush1.bf16.msra.mxu0 %v137
    %1445 = vmatprep.subr.bf16.mxu0 0
    %1446 = vmatpush1.bf16.msra.mxu0 %v136
    %1447 = vmatprep.subr.bf16.mxu0 0
    %1448 = vmatpush1.bf16.msra.mxu0 %v135
    %1449 = vmatprep.subr.bf16.mxu0 0
    %1450 = vmatpush1.bf16.msra.mxu0 %v134
    %1451 = vmatprep.subr.bf16.mxu0 0
    %1452 = vmatpush1.bf16.msra.mxu0 %v133
    %1453 = vmatprep.subr.bf16.mxu0 0
    %1454 = vmatpush1.bf16.msra.mxu0 %v132
    %1455 = vmatprep.subr.bf16.mxu0 0
    %1456 = vmatpush1.bf16.msra.mxu0 %v131
    %1457 = vmatprep.subr.bf16.mxu0 0
    %1458 = vmatpush1.bf16.msra.mxu0 %v130
    %1459 = vmatprep.subr.bf16.mxu0 0
    %1460 = vmatpush2.bf16.msra.mxu0 0
    %1461 = vmatprep.subr.bf16.mxu0 0
    %1462 = vmatpush2.bf16.msra.mxu0 0
    %1463 = vmatprep.subr.bf16.mxu0 0
    %1464 = vmatpush2.bf16.msra.mxu0 0
    %1465 = vmatprep.subr.bf16.mxu0 0
    %1466 = vmatpush2.bf16.msra.mxu0 0
    %1467 = vmatprep.subr.bf16.mxu0 0
    %1468 = vmatpush2.bf16.msra.mxu0 0
    %1469 = vmatprep.subr.bf16.mxu0 0
    %1470 = vmatpush2.bf16.msra.mxu0 0
    %1471 = vmatprep.subr.bf16.mxu0 0
    %1472 = vmatpush2.bf16.msra.mxu0 0
    %1473 = vmatprep.subr.bf16.mxu0 0
    %1474 = vmatpush2.bf16.msra.mxu0 0
    %1475 = vmatprep.mubr.bf16.mxu0 0
    %1476 = vmatmul.mubr.bf16.gmra.mxu0 %v1442
    %v1477 = vpop.f32.mrf.mxu0
    %v1478 = vadd.f32 0.0, %v1477
    %v1479 = vpop.f32.mrf.mxu0
    %v1480 = vpop.f32.mrf.mxu0
    %v1481 = vadd.f32 0.0, %v1480
    %v1482 = vpop.f32.mrf.mxu0
    %1483 = vdwg.mxu0
    %v1484 = vcvt.f32.s32.to.zero.pseudo %v1478
    %v1485 = vcvt.f32.s32.to.zero.pseudo %v1481
    %v1486 = vand.u32 %v1484, 1
    %v1487 = vand.u32 %v1485, 1
    %vm1488 = vcmp.eq.s32.totalorder %v1486, 0
    %vm1489 = vcmp.eq.s32.totalorder %v1487, 0
    %v1490 = vsel %vm1488, %v195, %v201
    %v1491 = vsel %vm1489, %v198, %v204
    %v1492 = vand.u32 %v1490, 1
    %v1493 = vand.u32 %v1491, 1
    %vm1494 = vcmp.ne.s32.totalorder %v1492, 0
    %vm1495 = vcmp.ne.s32.totalorder %v1493, 0
    %1496 = vrot.lane.b32.xlu0 %v1436, 127
    %v1497 = vpop.permute.xlu0 %1496
    %1498 = vrot.lane.b32.xlu0 %v1437, 127
    %v1499 = vpop.permute.xlu0 %1498
    %1500 = vrot.lane.b32.xlu0 %v1436, 15
    %v1501 = vpop.permute.xlu0 %1500
    %1502 = vrot.lane.b32.xlu0 %v1437, 15
    %v1503 = vpop.permute.xlu0 %1502
    %v1504 = vsel %vm220, %v1497, %v1501
    %v1505 = vsel %vm220, %v1499, %v1503
    %v1506 = vsel %vm1494, %v1504, %v1436
    %v1507 = vsel %vm1495, %v1505, %v1437
    %v1508 = vand.u32 %v1490, 2
    %v1509 = vand.u32 %v1491, 2
    %vm1510 = vcmp.ne.s32.totalorder %v1508, 0
    %vm1511 = vcmp.ne.s32.totalorder %v1509, 0
    %1512 = vrot.lane.b32.xlu0 %v1506, 126
    %v1513 = vpop.permute.xlu0 %1512
    %1514 = vrot.lane.b32.xlu0 %v1507, 126
    %v1515 = vpop.permute.xlu0 %1514
    %1516 = vrot.lane.b32.xlu0 %v1506, 14
    %v1517 = vpop.permute.xlu0 %1516
    %1518 = vrot.lane.b32.xlu0 %v1507, 14
    %v1519 = vpop.permute.xlu0 %1518
    %v1520 = vsel %vm238, %v1513, %v1517
    %v1521 = vsel %vm238, %v1515, %v1519
    %v1522 = vsel %vm1510, %v1520, %v1506
    %v1523 = vsel %vm1511, %v1521, %v1507
    %v1524 = vand.u32 %v1490, 4
    %v1525 = vand.u32 %v1491, 4
    %vm1526 = vcmp.ne.s32.totalorder %v1524, 0
    %vm1527 = vcmp.ne.s32.totalorder %v1525, 0
    %1528 = vrot.lane.b32.xlu0 %v1522, 124
    %v1529 = vpop.permute.xlu0 %1528
    %1530 = vrot.lane.b32.xlu0 %v1523, 124
    %v1531 = vpop.permute.xlu0 %1530
    %1532 = vrot.lane.b32.xlu0 %v1522, 12
    %v1533 = vpop.permute.xlu0 %1532
    %1534 = vrot.lane.b32.xlu0 %v1523, 12
    %v1535 = vpop.permute.xlu0 %1534
    %v1536 = vsel %vm256, %v1529, %v1533
    %v1537 = vsel %vm256, %v1531, %v1535
    %v1538 = vsel %vm1526, %v1536, %v1522
    %v1539 = vsel %vm1527, %v1537, %v1523
    %v1540 = vand.u32 %v1490, 8
    %v1541 = vand.u32 %v1491, 8
    %vm1542 = vcmp.ne.s32.totalorder %v1540, 0
    %vm1543 = vcmp.ne.s32.totalorder %v1541, 0
    %1544 = vrot.lane.b32.xlu0 %v1538, 120
    %v1545 = vpop.permute.xlu0 %1544
    %1546 = vrot.lane.b32.xlu0 %v1539, 120
    %v1547 = vpop.permute.xlu0 %1546
    %1548 = vrot.lane.b32.xlu0 %v1538, 8
    %v1549 = vpop.permute.xlu0 %1548
    %1550 = vrot.lane.b32.xlu0 %v1539, 8
    %v1551 = vpop.permute.xlu0 %1550
    %v1552 = vsel %vm274, %v1545, %v1549
    %v1553 = vsel %vm274, %v1547, %v1551
    %v1554 = vsel %vm1542, %v1552, %v1538
    %v1555 = vsel %vm1543, %v1553, %v1539
    %v1556 = vadd.s32 %v1554, %v1555
    %v1557 = vrot.slane %v1556, 4
    %v1558 = vadd.s32 %v1556, %v1557
    %v1559 = vrot.slane %v1558, 2
    %v1560 = vadd.s32 %v1558, %v1559
    %v1561 = vrot.slane %v1560, 1
    %v1562 = vadd.s32 %v1560, %v1561
    %v1563 = vand.u32 %v1562, 1
    %vm1564 = vcmp.eq.s32.totalorder %v1563, 1
    %v1565 = vsel %vm1564, %v58, %v61
    %v1566 = vand.u32 %v1565, 1
    %vm1567 = vcmp.ne.s32.totalorder %v1566, 0
    %v1568 = vrot.slane %v1554, 1
    %v1569 = vrot.slane %v1555, 1
    %v1570 = vsel %vm291, %v1568, %v1569
    %v1571 = vsel %vm291, %v1569, %v1568
    %v1572 = vsel %vm1567, 1, 0
    %v1573 = vlaneseq
    %v1574 = vshrl.u32 %v1573, 7
    %v1575 = vsub.s32 0, %v1574
    %v1576 = vrot.slane %v1572, %v1575
    %vm1577 = vcmp.eq.s32.totalorder %v1576, 1
    %v1578 = vsel %vm1577, %v1570, %v1554
    %v1579 = vsel %vm1577, %v1571, %v1555
    %v1580 = vand.u32 %v1565, 2
    %vm1581 = vcmp.ne.s32.totalorder %v1580, 0
    %v1582 = vrot.slane %v1578, 2
    %v1583 = vrot.slane %v1579, 2
    %v1584 = vsel %vm306, %v1582, %v1583
    %v1585 = vsel %vm306, %v1583, %v1582
    %v1586 = vsel %vm1581, 1, 0
    %v1587 = vlaneseq
    %v1588 = vshrl.u32 %v1587, 7
    %v1589 = vsub.s32 0, %v1588
    %v1590 = vrot.slane %v1586, %v1589
    %vm1591 = vcmp.eq.s32.totalorder %v1590, 1
    %v1592 = vsel %vm1591, %v1584, %v1578
    %v1593 = vsel %vm1591, %v1585, %v1579
    %v1594 = vand.u32 %v1565, 4
    %vm1595 = vcmp.ne.s32.totalorder %v1594, 0
    %v1596 = vrot.slane %v1592, 4
    %v1597 = vrot.slane %v1593, 4
    %v1598 = vsel %vm321, %v1596, %v1597
    %v1599 = vsel %vm321, %v1597, %v1596
    %v1600 = vsel %vm1595, 1, 0
    %v1601 = vlaneseq
    %v1602 = vshrl.u32 %v1601, 7
    %v1603 = vsub.s32 0, %v1602
    %v1604 = vrot.slane %v1600, %v1603
    %vm1605 = vcmp.eq.s32.totalorder %v1604, 1
    %v1606 = vsel %vm1605, %v1598, %v1592
    %v1607 = vsel %vm1605, %v1599, %v1593
    %v1608 = vand.u32 %v1565, 8
    %vm1609 = vcmp.ne.s32.totalorder %v1608, 0
    %v1610 = vsel %vm1609, 1, 0
    %v1611 = vlaneseq
    %v1612 = vshrl.u32 %v1611, 7
    %v1613 = vsub.s32 0, %v1612
    %v1614 = vrot.slane %v1610, %v1613
    %vm1615 = vcmp.eq.s32.totalorder %v1614, 1
    %v1616 = vsel %vm1615, %v1607, %v1606
    %v1617 = vsel %vm1615, %v1606, %v1607
    %v1618 = vxor.u32 %v1616, %v62
    %v1619 = vxor.u32 %v1617, %v63
    %v1620 = vand.u32 %v1618, 1
    %v1621 = vand.u32 %v1619, 1
    %v1622 = vcvt.s32.f32 %v1620
    %v1623 = vcvt.s32.f32 %v1621
    %v1624 = vpack.c.bf16 %v1623, %v1622
    %1625 = vmatprep.subr.bf16.mxu0 0
    %1626 = vmatpush1.bf16.msra.mxu0 %v137
    %1627 = vmatprep.subr.bf16.mxu0 0
    %1628 = vmatpush1.bf16.msra.mxu0 %v136
    %1629 = vmatprep.subr.bf16.mxu0 0
    %1630 = vmatpush1.bf16.msra.mxu0 %v135
    %1631 = vmatprep.subr.bf16.mxu0 0
    %1632 = vmatpush1.bf16.msra.mxu0 %v134
    %1633 = vmatprep.subr.bf16.mxu0 0
    %1634 = vmatpush1.bf16.msra.mxu0 %v133
    %1635 = vmatprep.subr.bf16.mxu0 0
    %1636 = vmatpush1.bf16.msra.mxu0 %v132
    %1637 = vmatprep.subr.bf16.mxu0 0
    %1638 = vmatpush1.bf16.msra.mxu0 %v131
    %1639 = vmatprep.subr.bf16.mxu0 0
    %1640 = vmatpush1.bf16.msra.mxu0 %v130
    %1641 = vmatprep.subr.bf16.mxu0 0
    %1642 = vmatpush2.bf16.msra.mxu0 0
    %1643 = vmatprep.subr.bf16.mxu0 0
    %1644 = vmatpush2.bf16.msra.mxu0 0
    %1645 = vmatprep.subr.bf16.mxu0 0
    %1646 = vmatpush2.bf16.msra.mxu0 0
    %1647 = vmatprep.subr.bf16.mxu0 0
    %1648 = vmatpush2.bf16.msra.mxu0 0
    %1649 = vmatprep.subr.bf16.mxu0 0
    %1650 = vmatpush2.bf16.msra.mxu0 0
    %1651 = vmatprep.subr.bf16.mxu0 0
    %1652 = vmatpush2.bf16.msra.mxu0 0
    %1653 = vmatprep.subr.bf16.mxu0 0
    %1654 = vmatpush2.bf16.msra.mxu0 0
    %1655 = vmatprep.subr.bf16.mxu0 0
    %1656 = vmatpush2.bf16.msra.mxu0 0
    %1657 = vmatprep.mubr.bf16.mxu0 0
    %1658 = vmatmul.mubr.bf16.gmra.mxu0 %v1624
    %v1659 = vpop.f32.mrf.mxu0
    %v1660 = vadd.f32 0.0, %v1659
    %v1661 = vpop.f32.mrf.mxu0
    %v1662 = vpop.f32.mrf.mxu0
    %v1663 = vadd.f32 0.0, %v1662
    %v1664 = vpop.f32.mrf.mxu0
    %1665 = vdwg.mxu0
    %v1666 = vcvt.f32.s32.to.zero.pseudo %v1660
    %v1667 = vcvt.f32.s32.to.zero.pseudo %v1663
    %v1668 = vand.u32 %v1666, 1
    %v1669 = vand.u32 %v1667, 1
    %vm1670 = vcmp.eq.s32.totalorder %v1668, 0
    %vm1671 = vcmp.eq.s32.totalorder %v1669, 0
    %v1672 = vsel %vm1670, %v195, %v201
    %v1673 = vsel %vm1671, %v198, %v204
    %v1674 = vand.u32 %v1672, 1
    %v1675 = vand.u32 %v1673, 1
    %vm1676 = vcmp.ne.s32.totalorder %v1674, 0
    %vm1677 = vcmp.ne.s32.totalorder %v1675, 0
    %1678 = vrot.lane.b32.xlu0 %v1618, 127
    %v1679 = vpop.permute.xlu0 %1678
    %1680 = vrot.lane.b32.xlu0 %v1619, 127
    %v1681 = vpop.permute.xlu0 %1680
    %1682 = vrot.lane.b32.xlu0 %v1618, 15
    %v1683 = vpop.permute.xlu0 %1682
    %1684 = vrot.lane.b32.xlu0 %v1619, 15
    %v1685 = vpop.permute.xlu0 %1684
    %v1686 = vsel %vm220, %v1679, %v1683
    %v1687 = vsel %vm220, %v1681, %v1685
    %v1688 = vsel %vm1676, %v1686, %v1618
    %v1689 = vsel %vm1677, %v1687, %v1619
    %v1690 = vand.u32 %v1672, 2
    %v1691 = vand.u32 %v1673, 2
    %vm1692 = vcmp.ne.s32.totalorder %v1690, 0
    %vm1693 = vcmp.ne.s32.totalorder %v1691, 0
    %1694 = vrot.lane.b32.xlu0 %v1688, 126
    %v1695 = vpop.permute.xlu0 %1694
    %1696 = vrot.lane.b32.xlu0 %v1689, 126
    %v1697 = vpop.permute.xlu0 %1696
    %1698 = vrot.lane.b32.xlu0 %v1688, 14
    %v1699 = vpop.permute.xlu0 %1698
    %1700 = vrot.lane.b32.xlu0 %v1689, 14
    %v1701 = vpop.permute.xlu0 %1700
    %v1702 = vsel %vm238, %v1695, %v1699
    %v1703 = vsel %vm238, %v1697, %v1701
    %v1704 = vsel %vm1692, %v1702, %v1688
    %v1705 = vsel %vm1693, %v1703, %v1689
    %v1706 = vand.u32 %v1672, 4
    %v1707 = vand.u32 %v1673, 4
    %vm1708 = vcmp.ne.s32.totalorder %v1706, 0
    %vm1709 = vcmp.ne.s32.totalorder %v1707, 0
    %1710 = vrot.lane.b32.xlu0 %v1704, 124
    %v1711 = vpop.permute.xlu0 %1710
    %1712 = vrot.lane.b32.xlu0 %v1705, 124
    %v1713 = vpop.permute.xlu0 %1712
    %1714 = vrot.lane.b32.xlu0 %v1704, 12
    %v1715 = vpop.permute.xlu0 %1714
    %1716 = vrot.lane.b32.xlu0 %v1705, 12
    %v1717 = vpop.permute.xlu0 %1716
    %v1718 = vsel %vm256, %v1711, %v1715
    %v1719 = vsel %vm256, %v1713, %v1717
    %v1720 = vsel %vm1708, %v1718, %v1704
    %v1721 = vsel %vm1709, %v1719, %v1705
    %v1722 = vand.u32 %v1672, 8
    %v1723 = vand.u32 %v1673, 8
    %vm1724 = vcmp.ne.s32.totalorder %v1722, 0
    %vm1725 = vcmp.ne.s32.totalorder %v1723, 0
    %1726 = vrot.lane.b32.xlu0 %v1720, 120
    %v1727 = vpop.permute.xlu0 %1726
    %1728 = vrot.lane.b32.xlu0 %v1721, 120
    %v1729 = vpop.permute.xlu0 %1728
    %1730 = vrot.lane.b32.xlu0 %v1720, 8
    %v1731 = vpop.permute.xlu0 %1730
    %1732 = vrot.lane.b32.xlu0 %v1721, 8
    %v1733 = vpop.permute.xlu0 %1732
    %v1734 = vsel %vm274, %v1727, %v1731
    %v1735 = vsel %vm274, %v1729, %v1733
    %v1736 = vsel %vm1724, %v1734, %v1720
    %v1737 = vsel %vm1725, %v1735, %v1721
    %v1738 = vadd.s32 %v1736, %v1737
    %v1739 = vrot.slane %v1738, 4
    %v1740 = vadd.s32 %v1738, %v1739
    %v1741 = vrot.slane %v1740, 2
    %v1742 = vadd.s32 %v1740, %v1741
    %v1743 = vrot.slane %v1742, 1
    %v1744 = vadd.s32 %v1742, %v1743
    %v1745 = vand.u32 %v1744, 1
    %vm1746 = vcmp.eq.s32.totalorder %v1745, 1
    %v1747 = vsel %vm1746, %v58, %v61
    %v1748 = vand.u32 %v1747, 1
    %vm1749 = vcmp.ne.s32.totalorder %v1748, 0
    %v1750 = vrot.slane %v1736, 1
    %v1751 = vrot.slane %v1737, 1
    %v1752 = vsel %vm291, %v1750, %v1751
    %v1753 = vsel %vm291, %v1751, %v1750
    %v1754 = vsel %vm1749, 1, 0
    %v1755 = vlaneseq
    %v1756 = vshrl.u32 %v1755, 7
    %v1757 = vsub.s32 0, %v1756
    %v1758 = vrot.slane %v1754, %v1757
    %vm1759 = vcmp.eq.s32.totalorder %v1758, 1
    %v1760 = vsel %vm1759, %v1752, %v1736
    %v1761 = vsel %vm1759, %v1753, %v1737
    %v1762 = vand.u32 %v1747, 2
    %vm1763 = vcmp.ne.s32.totalorder %v1762, 0
    %v1764 = vrot.slane %v1760, 2
    %v1765 = vrot.slane %v1761, 2
    %v1766 = vsel %vm306, %v1764, %v1765
    %v1767 = vsel %vm306, %v1765, %v1764
    %v1768 = vsel %vm1763, 1, 0
    %v1769 = vlaneseq
    %v1770 = vshrl.u32 %v1769, 7
    %v1771 = vsub.s32 0, %v1770
    %v1772 = vrot.slane %v1768, %v1771
    %vm1773 = vcmp.eq.s32.totalorder %v1772, 1
    %v1774 = vsel %vm1773, %v1766, %v1760
    %v1775 = vsel %vm1773, %v1767, %v1761
    %v1776 = vand.u32 %v1747, 4
    %vm1777 = vcmp.ne.s32.totalorder %v1776, 0
    %v1778 = vrot.slane %v1774, 4
    %v1779 = vrot.slane %v1775, 4
    %v1780 = vsel %vm321, %v1778, %v1779
    %v1781 = vsel %vm321, %v1779, %v1778
    %v1782 = vsel %vm1777, 1, 0
    %v1783 = vlaneseq
    %v1784 = vshrl.u32 %v1783, 7
    %v1785 = vsub.s32 0, %v1784
    %v1786 = vrot.slane %v1782, %v1785
    %vm1787 = vcmp.eq.s32.totalorder %v1786, 1
    %v1788 = vsel %vm1787, %v1780, %v1774
    %v1789 = vsel %vm1787, %v1781, %v1775
    %v1790 = vand.u32 %v1747, 8
    %vm1791 = vcmp.ne.s32.totalorder %v1790, 0
    %v1792 = vsel %vm1791, 1, 0
    %v1793 = vlaneseq
    %v1794 = vshrl.u32 %v1793, 7
    %v1795 = vsub.s32 0, %v1794
    %v1796 = vrot.slane %v1792, %v1795
    %vm1797 = vcmp.eq.s32.totalorder %v1796, 1
    %v1798 = vsel %vm1797, %v1789, %v1788
    %v1799 = vsel %vm1797, %v1788, %v1789
    %v1800 = vxor.u32 %v1798, %v62
    %v1801 = vxor.u32 %v1799, %v63
    %v1802 = vand.u32 %v1800, 1
    %v1803 = vand.u32 %v1801, 1
    %v1804 = vcvt.s32.f32 %v1802
    %v1805 = vcvt.s32.f32 %v1803
    %v1806 = vpack.c.bf16 %v1805, %v1804
    %1807 = vmatprep.subr.bf16.mxu0 0
    %1808 = vmatpush1.bf16.msra.mxu0 %v137
    %1809 = vmatprep.subr.bf16.mxu0 0
    %1810 = vmatpush1.bf16.msra.mxu0 %v136
    %1811 = vmatprep.subr.bf16.mxu0 0
    %1812 = vmatpush1.bf16.msra.mxu0 %v135
    %1813 = vmatprep.subr.bf16.mxu0 0
    %1814 = vmatpush1.bf16.msra.mxu0 %v134
    %1815 = vmatprep.subr.bf16.mxu0 0
    %1816 = vmatpush1.bf16.msra.mxu0 %v133
    %1817 = vmatprep.subr.bf16.mxu0 0
    %1818 = vmatpush1.bf16.msra.mxu0 %v132
    %1819 = vmatprep.subr.bf16.mxu0 0
    %1820 = vmatpush1.bf16.msra.mxu0 %v131
    %1821 = vmatprep.subr.bf16.mxu0 0
    %1822 = vmatpush1.bf16.msra.mxu0 %v130
    %1823 = vmatprep.subr.bf16.mxu0 0
    %1824 = vmatpush2.bf16.msra.mxu0 0
    %1825 = vmatprep.subr.bf16.mxu0 0
    %1826 = vmatpush2.bf16.msra.mxu0 0
    %1827 = vmatprep.subr.bf16.mxu0 0
    %1828 = vmatpush2.bf16.msra.mxu0 0
    %1829 = vmatprep.subr.bf16.mxu0 0
    %1830 = vmatpush2.bf16.msra.mxu0 0
    %1831 = vmatprep.subr.bf16.mxu0 0
    %1832 = vmatpush2.bf16.msra.mxu0 0
    %1833 = vmatprep.subr.bf16.mxu0 0
    %1834 = vmatpush2.bf16.msra.mxu0 0
    %1835 = vmatprep.subr.bf16.mxu0 0
    %1836 = vmatpush2.bf16.msra.mxu0 0
    %1837 = vmatprep.subr.bf16.mxu0 0
    %1838 = vmatpush2.bf16.msra.mxu0 0
    %1839 = vmatprep.mubr.bf16.mxu0 0
    %1840 = vmatmul.mubr.bf16.gmra.mxu0 %v1806
    %v1841 = vpop.f32.mrf.mxu0
    %v1842 = vadd.f32 0.0, %v1841
    %v1843 = vpop.f32.mrf.mxu0
    %v1844 = vpop.f32.mrf.mxu0
    %v1845 = vadd.f32 0.0, %v1844
    %v1846 = vpop.f32.mrf.mxu0
    %1847 = vdwg.mxu0
    %v1848 = vcvt.f32.s32.to.zero.pseudo %v1842
    %v1849 = vcvt.f32.s32.to.zero.pseudo %v1845
    %v1850 = vand.u32 %v1848, 1
    %v1851 = vand.u32 %v1849, 1
    %vm1852 = vcmp.eq.s32.totalorder %v1850, 0
    %vm1853 = vcmp.eq.s32.totalorder %v1851, 0
    %v1854 = vsel %vm1852, %v195, %v201
    %v1855 = vsel %vm1853, %v198, %v204
    %v1856 = vand.u32 %v1854, 1
    %v1857 = vand.u32 %v1855, 1
    %vm1858 = vcmp.ne.s32.totalorder %v1856, 0
    %vm1859 = vcmp.ne.s32.totalorder %v1857, 0
    %1860 = vrot.lane.b32.xlu0 %v1800, 127
    %v1861 = vpop.permute.xlu0 %1860
    %1862 = vrot.lane.b32.xlu0 %v1801, 127
    %v1863 = vpop.permute.xlu0 %1862
    %1864 = vrot.lane.b32.xlu0 %v1800, 15
    %v1865 = vpop.permute.xlu0 %1864
    %1866 = vrot.lane.b32.xlu0 %v1801, 15
    %v1867 = vpop.permute.xlu0 %1866
    %v1868 = vsel %vm220, %v1861, %v1865
    %v1869 = vsel %vm220, %v1863, %v1867
    %v1870 = vsel %vm1858, %v1868, %v1800
    %v1871 = vsel %vm1859, %v1869, %v1801
    %v1872 = vand.u32 %v1854, 2
    %v1873 = vand.u32 %v1855, 2
    %vm1874 = vcmp.ne.s32.totalorder %v1872, 0
    %vm1875 = vcmp.ne.s32.totalorder %v1873, 0
    %1876 = vrot.lane.b32.xlu0 %v1870, 126
    %v1877 = vpop.permute.xlu0 %1876
    %1878 = vrot.lane.b32.xlu0 %v1871, 126
    %v1879 = vpop.permute.xlu0 %1878
    %1880 = vrot.lane.b32.xlu0 %v1870, 14
    %v1881 = vpop.permute.xlu0 %1880
    %1882 = vrot.lane.b32.xlu0 %v1871, 14
    %v1883 = vpop.permute.xlu0 %1882
    %v1884 = vsel %vm238, %v1877, %v1881
    %v1885 = vsel %vm238, %v1879, %v1883
    %v1886 = vsel %vm1874, %v1884, %v1870
    %v1887 = vsel %vm1875, %v1885, %v1871
    %v1888 = vand.u32 %v1854, 4
    %v1889 = vand.u32 %v1855, 4
    %vm1890 = vcmp.ne.s32.totalorder %v1888, 0
    %vm1891 = vcmp.ne.s32.totalorder %v1889, 0
    %1892 = vrot.lane.b32.xlu0 %v1886, 124
    %v1893 = vpop.permute.xlu0 %1892
    %1894 = vrot.lane.b32.xlu0 %v1887, 124
    %v1895 = vpop.permute.xlu0 %1894
    %1896 = vrot.lane.b32.xlu0 %v1886, 12
    %v1897 = vpop.permute.xlu0 %1896
    %1898 = vrot.lane.b32.xlu0 %v1887, 12
    %v1899 = vpop.permute.xlu0 %1898
    %v1900 = vsel %vm256, %v1893, %v1897
    %v1901 = vsel %vm256, %v1895, %v1899
    %v1902 = vsel %vm1890, %v1900, %v1886
    %v1903 = vsel %vm1891, %v1901, %v1887
    %v1904 = vand.u32 %v1854, 8
    %v1905 = vand.u32 %v1855, 8
    %vm1906 = vcmp.ne.s32.totalorder %v1904, 0
    %vm1907 = vcmp.ne.s32.totalorder %v1905, 0
    %1908 = vrot.lane.b32.xlu0 %v1902, 120
    %v1909 = vpop.permute.xlu0 %1908
    %1910 = vrot.lane.b32.xlu0 %v1903, 120
    %v1911 = vpop.permute.xlu0 %1910
    %1912 = vrot.lane.b32.xlu0 %v1902, 8
    %v1913 = vpop.permute.xlu0 %1912
    %1914 = vrot.lane.b32.xlu0 %v1903, 8
    %v1915 = vpop.permute.xlu0 %1914
    %v1916 = vsel %vm274, %v1909, %v1913
    %v1917 = vsel %vm274, %v1911, %v1915
    %v1918 = vsel %vm1906, %v1916, %v1902
    %v1919 = vsel %vm1907, %v1917, %v1903
    %v1920 = vadd.s32 %v1918, %v1919
    %v1921 = vrot.slane %v1920, 4
    %v1922 = vadd.s32 %v1920, %v1921
    %v1923 = vrot.slane %v1922, 2
    %v1924 = vadd.s32 %v1922, %v1923
    %v1925 = vrot.slane %v1924, 1
    %v1926 = vadd.s32 %v1924, %v1925
    %v1927 = vand.u32 %v1926, 1
    %vm1928 = vcmp.eq.s32.totalorder %v1927, 1
    %v1929 = vsel %vm1928, %v58, %v61
    %v1930 = vand.u32 %v1929, 1
    %vm1931 = vcmp.ne.s32.totalorder %v1930, 0
    %v1932 = vrot.slane %v1918, 1
    %v1933 = vrot.slane %v1919, 1
    %v1934 = vsel %vm291, %v1932, %v1933
    %v1935 = vsel %vm291, %v1933, %v1932
    %v1936 = vsel %vm1931, 1, 0
    %v1937 = vlaneseq
    %v1938 = vshrl.u32 %v1937, 7
    %v1939 = vsub.s32 0, %v1938
    %v1940 = vrot.slane %v1936, %v1939
    %vm1941 = vcmp.eq.s32.totalorder %v1940, 1
    %v1942 = vsel %vm1941, %v1934, %v1918
    %v1943 = vsel %vm1941, %v1935, %v1919
    %v1944 = vand.u32 %v1929, 2
    %vm1945 = vcmp.ne.s32.totalorder %v1944, 0
    %v1946 = vrot.slane %v1942, 2
    %v1947 = vrot.slane %v1943, 2
    %v1948 = vsel %vm306, %v1946, %v1947
    %v1949 = vsel %vm306, %v1947, %v1946
    %v1950 = vsel %vm1945, 1, 0
    %v1951 = vlaneseq
    %v1952 = vshrl.u32 %v1951, 7
    %v1953 = vsub.s32 0, %v1952
    %v1954 = vrot.slane %v1950, %v1953
    %vm1955 = vcmp.eq.s32.totalorder %v1954, 1
    %v1956 = vsel %vm1955, %v1948, %v1942
    %v1957 = vsel %vm1955, %v1949, %v1943
    %v1958 = vand.u32 %v1929, 4
    %vm1959 = vcmp.ne.s32.totalorder %v1958, 0
    %v1960 = vrot.slane %v1956, 4
    %v1961 = vrot.slane %v1957, 4
    %v1962 = vsel %vm321, %v1960, %v1961
    %v1963 = vsel %vm321, %v1961, %v1960
    %v1964 = vsel %vm1959, 1, 0
    %v1965 = vlaneseq
    %v1966 = vshrl.u32 %v1965, 7
    %v1967 = vsub.s32 0, %v1966
    %v1968 = vrot.slane %v1964, %v1967
    %vm1969 = vcmp.eq.s32.totalorder %v1968, 1
    %v1970 = vsel %vm1969, %v1962, %v1956
    %v1971 = vsel %vm1969, %v1963, %v1957
    %v1972 = vand.u32 %v1929, 8
    %vm1973 = vcmp.ne.s32.totalorder %v1972, 0
    %v1974 = vsel %vm1973, 1, 0
    %v1975 = vlaneseq
    %v1976 = vshrl.u32 %v1975, 7
    %v1977 = vsub.s32 0, %v1976
    %v1978 = vrot.slane %v1974, %v1977
    %vm1979 = vcmp.eq.s32.totalorder %v1978, 1
    %v1980 = vsel %vm1979, %v1971, %v1970
    %v1981 = vsel %vm1979, %v1970, %v1971
    %v1982 = vxor.u32 %v1980, %v62
    %v1983 = vxor.u32 %v1981, %v63
    %v1984 = vcvt.s32.f32 %v1982
    %v1985 = vcvt.s32.f32 %v1983
    %v1986 = vmul.f32 %v1984, 0.003921569
    %v1987 = vmul.f32 %v1985, 0.003921569
    %1988 = vst [vmem:[#allocation7] sm:$0xff] %v1986
    %1989 = vst [vmem:[#allocation7 + $0x8] sm:$0xff] %v1987
    // Predicated region
    $region30: #{tpu_custom_call.1} parent=1 // pred_check
      _
    $region31: #{tpu_custom_call.1} parent=1 // pred_check_branch
      %1991 = sbr.rel (0) target = $region33
    $region32: #{tpu_custom_call.1} parent=1 // pred_region
      %s1993 = ssub.s32 256, 256
      %1994 = vsyncadd [#allocation4], %s1993
      %s1995 = sshll.u32 [#allocation7], 4
      %s1996 = int_to_ptr.vmem [resolvable:$true] %s1995
      %2001 = dma.vmem_to_hbm [thread:$0]  %s1996, 256, %s5, [#allocation4], 128, 128, 8
    $region33: #{tpu_custom_call.1} parent=1 // pred_fallthru
      _
    // Predicated region
    $region34: #{tpu_custom_call.1} parent=1 // pred_check
      _
    $region35: #{tpu_custom_call.1} parent=1 // pred_check_branch
      %2003 = sbr.rel (0) target = $region37
    $region36: #{tpu_custom_call.1} parent=1 // pred_region
      %2004 = dma.done [#allocation4], 256
    $region37: #{tpu_custom_call.1} parent=1 // pred_fallthru
      _
    %2005 = vsyncpa [#allocation3], 1
    %2006 = vsyncpa [#allocation6], 1
    %2007 = vsyncpa [#allocation4], 1

</llo_original>
